<compile_context>
chip_gen: v7x
topology: tpu7x:2x2x1
jax: 0.10.0
libtpu: 0.0.40
codegen_flags: <defaults>
</compile_context>

<pallas_src>
import functools

import numpy as np
import jax
import jax.numpy as jnp
from jax.experimental import pallas as pl
from jax.experimental.pallas import tpu as pltpu

SIGMA = 10.0
BN_EPS = 1e-5  # nn.BatchNorm1d default


def _make_kernel(N, D, k, use_bf16):
    """Fused Scalable_gcn forward for one graph (static N, D, top-k k)."""
    idx_bits = max(1, int(np.ceil(np.log2(max(N, 2)))))   # bits for a column id
    keep_mask = ~((1 << idx_bits) - 1)                    # drop low mantissa bits

    def mm(a, b):
        # Weight / propagate GEMMs: bf16 MXU inputs with f32 accumulate on the
        # fast path, full f32 (HIGHEST) on the exact path.
        if use_bf16:
            return jnp.dot(a.astype(jnp.bfloat16), b.astype(jnp.bfloat16),
                           preferred_element_type=jnp.float32)
        return jnp.dot(a, b, preferred_element_type=jnp.float32,
                       precision=jax.lax.Precision.HIGHEST)

    def kernel(x_ref, w1_ref, w2_ref, g1_ref, b1_ref, g2_ref, b2_ref, out_ref,
               lbuf, rbuf):
        x = x_ref[0]                                           # (N, D) f32

        # ---- pairwise squared distances in ONE matmul ---------------------
        # d2[i,j] = ||xi||^2 + ||xj||^2 - 2<xi,xj>  via augmented operands
        #   L = [-2x | sq | 1]   R = [x | 1 | sq]   d2 = L @ R^T
        # (no gram temporary, no diag extraction, no lane transpose of sq)
        sq = jnp.sum(x * x, axis=1, keepdims=True)             # (N, 1)
        ones_col = jnp.ones((N, 1), jnp.float32)
        lbuf[:, 0:D] = -2.0 * x
        lbuf[:, D:D + 1] = sq
        lbuf[:, D + 1:D + 2] = ones_col
        rbuf[:, 0:D] = x
        rbuf[:, D:D + 1] = ones_col
        rbuf[:, D + 1:D + 2] = sq
        d2 = jax.lax.dot_general(
            lbuf[...], rbuf[...], (((1,), (1,)), ((), ())),
            preferred_element_type=jnp.float32,
            precision=jax.lax.Precision.HIGHEST)               # (N, N), f32 exact
        a_e = jnp.exp(jnp.maximum(d2, 0.0) * (-1.0 / SIGMA))   # (N, N)

        # ---- row-wise top-k: one lane max-reduce per pass ------------------
        # Pack (value, reversed column) into a single int32 key: positive f32
        # bit patterns are order-preserving; the low idx_bits mantissa bits are
        # replaced by (N-1-col) so ties break toward the lowest column (same as
        # lax.top_k / torch.topk). Keys are unique per row -> exactly one pick
        # per pass; picked entries are marked negative, so no separate
        # `selected` buffer is kept live during the unrolled loop.
        col_rev = (N - 1) - jax.lax.broadcasted_iota(jnp.int32, (N, N), 1)
        key = (pltpu.bitcast(a_e, jnp.int32) & keep_mask) | col_rev
        for _ in range(k):                                     # k small & static
            row_max = jnp.max(key, axis=1, keepdims=True)      # 1 XLU reduce
            key = jnp.where(key == row_max, -1, key)
        selected = key < 0

        # ---- fused adjacency + symmetric normalization ---------------------
        # diag: 1 (from I) + 0.5 * a_e[i,i] (=1) = 1.5 ; off-diag: 0.9*a_e if top-k
        eye = (jax.lax.broadcasted_iota(jnp.int32, (N, N), 0) ==
               jax.lax.broadcasted_iota(jnp.int32, (N, N), 1))
        adj = jnp.where(eye, 1.5, jnp.where(selected, 0.9 * a_e, 0.0))
        inv_sd = jax.lax.rsqrt(jnp.sum(adj, axis=1, keepdims=True) + 1.0)  # (N,1)

        def propagate(s):
            # (D^-1/2 A D^-1/2) @ s == inv_sd * (A @ (inv_sd * s)).
            # Scaling s keeps everything sublane-oriented (no lane-transpose of
            # inv_sd) and is the cheaper form once N > H + C.
            return inv_sd * mm(adj, inv_sd * s)

        def bn_tanh(h, g, b):
            # BatchNorm1d, training mode: biased batch statistics over rows.
            mu = jnp.mean(h, axis=0, keepdims=True)
            var = jnp.mean((h - mu) ** 2, axis=0, keepdims=True)
            return jnp.tanh((h - mu) * jax.lax.rsqrt(var + BN_EPS) * g + b)

        # gcn1 -> bn1 -> tanh ; gcn2 -> bn2 -> tanh (class dim lane-padded)
        h = bn_tanh(propagate(mm(x, w1_ref[...])), g1_ref[...], b1_ref[...])
        z = bn_tanh(propagate(mm(h, w2_ref[...])), g2_ref[...], b2_ref[...])
        out_ref[0] = z

    return kernel


def _pad_lanes(a, target, axis):
    pad = target - a.shape[axis]
    if pad <= 0:
        return a
    widths = [(0, 0)] * a.ndim
    widths[axis] = (0, pad)
    return jnp.pad(a, widths)


@functools.partial(jax.jit, static_argnames=("n_class", "use_bf16_matmul"))
def scalable_gcn_forward(features, w1, w2, g1, b1, g2, b2, *, n_class,
                         use_bf16_matmul=True):
    """features: (N, D) or (B, N, D) — one graph per grid step."""
    squeeze = features.ndim == 2
    if squeeze:
        features = features[None]
    B, N, D = features.shape
    H = w1.shape[1]
    C = w2.shape[1]

    # Lane-dense output path: pad class dim to a multiple of 128 with zeros
    # (zero columns stay exactly zero through GCN/BN/tanh), slice after.
    Cp = ((C + 127) // 128) * 128
    w2p = _pad_lanes(w2, Cp, 1)
    g2p = _pad_lanes(g2, Cp, 1)
    b2p = _pad_lanes(b2, Cp, 1)

    # Same rounding as the PyTorch module: Python round() (banker's rounding).
    k = int(round(N / n_class))

    # VMEM budget: (N,N) temporaries + activations + weights, with headroom.
    est = 4 * (8 * N * N + 6 * N * (D + H + Cp) + 2 * (D * H + H * Cp))
    vmem_limit = int(min(max(2 * est, 32 * 2**20), 64 * 2**20))
    # TODO(synk): row-block the adjacency phase (grid over row tiles) once a
    # single graph no longer fits the v7x 64 MiB VMEM budget (N >~ 1k).

    kernel = _make_kernel(N, D, k, use_bf16_matmul)
    out = pl.pallas_call(
        kernel,
        out_shape=jax.ShapeDtypeStruct((B, N, Cp), jnp.float32),
        grid=(B,),
        in_specs=[
            pl.BlockSpec((1, N, D), lambda b: (b, 0, 0)),   # features (per graph)
            pl.BlockSpec((D, H), lambda b: (0, 0)),         # W1 (shared)
            pl.BlockSpec((H, Cp), lambda b: (0, 0)),        # W2 (padded, shared)
            pl.BlockSpec((1, H), lambda b: (0, 0)),         # bn1 gamma
            pl.BlockSpec((1, H), lambda b: (0, 0)),         # bn1 beta
            pl.BlockSpec((1, Cp), lambda b: (0, 0)),        # bn2 gamma (padded)
            pl.BlockSpec((1, Cp), lambda b: (0, 0)),        # bn2 beta  (padded)
        ],
        out_specs=pl.BlockSpec((1, N, Cp), lambda b: (b, 0, 0)),
        scratch_shapes=[
            pltpu.VMEM((N, D + 2), jnp.float32),            # augmented LHS
            pltpu.VMEM((N, D + 2), jnp.float32),            # augmented RHS
        ],
        compiler_params=pltpu.CompilerParams(
            dimension_semantics=("parallel",),
            vmem_limit_bytes=vmem_limit,
        ),
    )(features, w1, w2p, g1, b1, g2p, b2p)

    out = out[:, :, :C]
    return out[0] if squeeze else out


def reference_forward(features, w1, w2, g1, b1, g2, b2, n_class):
    """Pure-JAX reference mirroring the PyTorch forward (training-mode BN)."""
    hi = jax.lax.Precision.HIGHEST
    N = features.shape[0]
    diff = features[:, None, :] - features[None, :, :]
    d2 = jnp.sum(diff * diff, axis=-1)
    a_e = jnp.exp(-d2 / SIGMA)
    k = int(round(N / n_class))
    _, idx = jax.lax.top_k(a_e, k)
    adj0 = jnp.zeros((N, N), jnp.float32).at[jnp.arange(N)[:, None], idx].set(0.9)
    adj0 = adj0.at[jnp.arange(N), jnp.arange(N)].set(0.5)
    adj = jnp.eye(N, dtype=jnp.float32) + adj0 * a_e
    d = jnp.sqrt(jnp.sum(adj, axis=1) + 1.0)
    inv_d = jnp.diag(1.0 / d)
    A = jnp.dot(jnp.dot(inv_d, adj, precision=hi), inv_d, precision=hi)

    def bn_tanh(h, g, b):
        mu = jnp.mean(h, axis=0)
        var = jnp.mean((h - mu) ** 2, axis=0)
        return jnp.tanh((h - mu) / jnp.sqrt(var + BN_EPS) * g + b)

    h = jnp.dot(A, jnp.dot(features, w1, precision=hi), precision=hi)
    h = bn_tanh(h, g1[0], b1[0])
    z = jnp.dot(A, jnp.dot(h, w2, precision=hi), precision=hi)
    return bn_tanh(z, g2[0], b2[0])


if __name__ == "__main__":
    B, N, input_dim, hidden, n_class = 2, 16, 32, 128, 4

    key = jax.random.PRNGKey(0)
    k_feat, k_w1, k_w2 = jax.random.split(key, 3)

    features = 0.5 * jax.random.normal(k_feat, (B, N, input_dim), dtype=jnp.float32)

    # Deterministic xavier_normal_ equivalents (gain=1): std = sqrt(2/(fan_in+fan_out))
    std1 = float(np.sqrt(2.0 / (input_dim + hidden)))
    std2 = float(np.sqrt(2.0 / (hidden + n_class)))
    w1 = std1 * jax.random.normal(k_w1, (input_dim, hidden), dtype=jnp.float32)
    w2 = std2 * jax.random.normal(k_w2, (hidden, n_class), dtype=jnp.float32)

    # BatchNorm1d default affine params
    g1 = jnp.ones((1, hidden), jnp.float32)
    b1 = jnp.zeros((1, hidden), jnp.float32)
    g2 = jnp.ones((1, n_class), jnp.float32)
    b2 = jnp.zeros((1, n_class), jnp.float32)

    ref = np.stack([
        np.asarray(reference_forward(features[i], w1, w2, g1, b1, g2, b2, n_class))
        for i in range(B)
    ])

    # Exact path (f32 MXU, precision=HIGHEST): tight check vs reference.
    out_f32 = jax.block_until_ready(scalable_gcn_forward(
        features, w1, w2, g1, b1, g2, b2, n_class=n_class, use_bf16_matmul=False))
    assert out_f32.shape == (B, N, n_class)
    np.testing.assert_allclose(np.asarray(out_f32), ref, atol=2e-3, rtol=2e-3)

    # Fast path (bf16 MXU inputs, f32 accumulate): sanity check.
    out_bf16 = jax.block_until_ready(scalable_gcn_forward(
        features, w1, w2, g1, b1, g2, b2, n_class=n_class, use_bf16_matmul=True))
    np.testing.assert_allclose(np.asarray(out_bf16), ref, atol=5e-2, rtol=5e-2)

    print("KERNEL_OK")
</pallas_src>

<mosaic_0001>
module attributes {stable_mosaic.version = 11 : i64} {
  func.func @kernel(%arg0: i32, %arg1: memref<1x16x32xf32, #tpu.memory_space<vmem>>, %arg2: memref<32x128xf32, #tpu.memory_space<vmem>>, %arg3: memref<128x128xf32, #tpu.memory_space<vmem>>, %arg4: memref<1x128xf32, #tpu.memory_space<vmem>>, %arg5: memref<1x128xf32, #tpu.memory_space<vmem>>, %arg6: memref<1x128xf32, #tpu.memory_space<vmem>>, %arg7: memref<1x128xf32, #tpu.memory_space<vmem>>, %arg8: memref<1x16x128xf32, #tpu.memory_space<vmem>>, %arg9: memref<16x34xf32, #tpu.memory_space<vmem>>, %arg10: memref<16x34xf32, #tpu.memory_space<vmem>>) attributes {dimension_semantics = [#tpu.dimension_semantics<parallel>], iteration_bounds = array<i64: 2>, scalar_prefetch = 0 : i64, scratch_operands = 2 : i64, tpu.core_type = #tpu.core_type<tc>, window_params = [{transform_indices = @transform_0, window_bounds = array<i64: 1, 16, 32>}, {pipeline_mode = #tpu.pipeline_mode<synchronous>, transform_indices = @transform_1, window_bounds = array<i64: 32, 128>}, {pipeline_mode = #tpu.pipeline_mode<synchronous>, transform_indices = @transform_2, window_bounds = array<i64: 128, 128>}, {pipeline_mode = #tpu.pipeline_mode<synchronous>, transform_indices = @transform_3, window_bounds = array<i64: 1, 128>}, {pipeline_mode = #tpu.pipeline_mode<synchronous>, transform_indices = @transform_4, window_bounds = array<i64: 1, 128>}, {pipeline_mode = #tpu.pipeline_mode<synchronous>, transform_indices = @transform_5, window_bounds = array<i64: 1, 128>}, {pipeline_mode = #tpu.pipeline_mode<synchronous>, transform_indices = @transform_6, window_bounds = array<i64: 1, 128>}, {transform_indices = @transform_7, window_bounds = array<i64: 1, 16, 128>}]} {
    %c0 = arith.constant 0 : index
    %c0_0 = arith.constant 0 : index
    %c0_1 = arith.constant 0 : index
    %0 = vector.load %arg1[%c0, %c0_0, %c0_1] : memref<1x16x32xf32, #tpu.memory_space<vmem>>, vector<1x16x32xf32>
    %1 = vector.shape_cast %0 : vector<1x16x32xf32> to vector<16x32xf32>
    %2 = arith.mulf %1, %1 : vector<16x32xf32>
    %cst = arith.constant dense<0.000000e+00> : vector<16xf32>
    %3 = vector.multi_reduction <add>, %2, %cst [1] : vector<16x32xf32> to vector<16xf32>
    %4 = vector.shape_cast %3 : vector<16xf32> to vector<16x1xf32>
    %cst_2 = arith.constant 1.000000e+00 : f32
    %5 = vector.broadcast %cst_2 : f32 to vector<16x1xf32>
    %cst_3 = arith.constant -2.000000e+00 : f32
    %6 = vector.broadcast %cst_3 : f32 to vector<16x32xf32>
    %7 = arith.mulf %6, %1 : vector<16x32xf32>
    %c0_4 = arith.constant 0 : index
    %c0_5 = arith.constant 0 : index
    %8 = vector.load %arg9[%c0_4, %c0_5] : memref<16x34xf32, #tpu.memory_space<vmem>>, vector<16x32xf32>
    tpu.vector_store %arg9[%c0_4, %c0_5], %7 {strides = array<i32>} : memref<16x34xf32, #tpu.memory_space<vmem>>, vector<16x32xf32>,
    %c0_6 = arith.constant 0 : index
    %c32 = arith.constant 32 : index
    %9 = vector.load %arg9[%c0_6, %c32] : memref<16x34xf32, #tpu.memory_space<vmem>>, vector<16x1xf32>
    tpu.vector_store %arg9[%c0_6, %c32], %4 {strides = array<i32>} : memref<16x34xf32, #tpu.memory_space<vmem>>, vector<16x1xf32>,
    %c0_7 = arith.constant 0 : index
    %c33 = arith.constant 33 : index
    %10 = vector.load %arg9[%c0_7, %c33] : memref<16x34xf32, #tpu.memory_space<vmem>>, vector<16x1xf32>
    tpu.vector_store %arg9[%c0_7, %c33], %5 {strides = array<i32>} : memref<16x34xf32, #tpu.memory_space<vmem>>, vector<16x1xf32>,
    %c0_8 = arith.constant 0 : index
    %c0_9 = arith.constant 0 : index
    %11 = vector.load %arg10[%c0_8, %c0_9] : memref<16x34xf32, #tpu.memory_space<vmem>>, vector<16x32xf32>
    tpu.vector_store %arg10[%c0_8, %c0_9], %1 {strides = array<i32>} : memref<16x34xf32, #tpu.memory_space<vmem>>, vector<16x32xf32>,
    %c0_10 = arith.constant 0 : index
    %c32_11 = arith.constant 32 : index
    %12 = vector.load %arg10[%c0_10, %c32_11] : memref<16x34xf32, #tpu.memory_space<vmem>>, vector<16x1xf32>
    tpu.vector_store %arg10[%c0_10, %c32_11], %5 {strides = array<i32>} : memref<16x34xf32, #tpu.memory_space<vmem>>, vector<16x1xf32>,
    %c0_12 = arith.constant 0 : index
    %c33_13 = arith.constant 33 : index
    %13 = vector.load %arg10[%c0_12, %c33_13] : memref<16x34xf32, #tpu.memory_space<vmem>>, vector<16x1xf32>
    tpu.vector_store %arg10[%c0_12, %c33_13], %4 {strides = array<i32>} : memref<16x34xf32, #tpu.memory_space<vmem>>, vector<16x1xf32>,
    %c0_14 = arith.constant 0 : index
    %c0_15 = arith.constant 0 : index
    %14 = vector.load %arg9[%c0_14, %c0_15] : memref<16x34xf32, #tpu.memory_space<vmem>>, vector<16x34xf32>
    %c0_16 = arith.constant 0 : index
    %c0_17 = arith.constant 0 : index
    %15 = vector.load %arg10[%c0_16, %c0_17] : memref<16x34xf32, #tpu.memory_space<vmem>>, vector<16x34xf32>
    %cst_18 = arith.constant dense<0.000000e+00> : vector<16x16xf32>
    %16 = tpu.matmul %14, %15, %cst_18 {dimension_numbers = #tpu.dot_dimension_numbers<[1], [1], [0], [0], [0, 0, 1, 0], [], []>, precision = #tpu.contract_precision<fp32>} : vector<16x34xf32>, vector<16x34xf32>, vector<16x16xf32> -> vector<16x16xf32>
    %cst_19 = arith.constant 0.000000e+00 : f32
    %17 = vector.broadcast %cst_19 : f32 to vector<16x16xf32>
    %18 = arith.maximumf %16, %17 : vector<16x16xf32>
    %cst_20 = arith.constant -1.000000e-01 : f32
    %19 = vector.broadcast %cst_20 : f32 to vector<16x16xf32>
    %20 = arith.mulf %18, %19 : vector<16x16xf32>
    %21 = math.exp %20 : vector<16x16xf32>
    %22 = tpu.iota {dimensions = array<i32: 1>} : vector<16x16xi32>
    %c15_i32 = arith.constant 15 : i32
    %23 = vector.broadcast %c15_i32 : i32 to vector<16x16xi32>
    %24 = arith.subi %23, %22 : vector<16x16xi32>
    %25 = tpu.bitcast %21 : vector<16x16xf32> -> vector<16x16xi32>
    %c-16_i32 = arith.constant -16 : i32
    %26 = vector.broadcast %c-16_i32 : i32 to vector<16x16xi32>
    %27 = arith.andi %25, %26 : vector<16x16xi32>
    %28 = arith.ori %27, %24 : vector<16x16xi32>
    %cst_21 = arith.constant dense<-2147483648> : vector<16xi32>
    %29 = vector.multi_reduction <maxsi>, %28, %cst_21 [1] : vector<16x16xi32> to vector<16xi32>
    %30 = vector.shape_cast %29 : vector<16xi32> to vector<16x1xi32>
    %31 = vector.broadcast %30 : vector<16x1xi32> to vector<16x16xi32>
    %32 = arith.cmpi eq, %28, %31 : vector<16x16xi32>
    %c-1_i32 = arith.constant -1 : i32
    %33 = vector.broadcast %c-1_i32 : i32 to vector<16x16xi32>
    %34 = arith.select %32, %33, %28 : vector<16x16xi1>, vector<16x16xi32>
    %cst_22 = arith.constant dense<-2147483648> : vector<16xi32>
    %35 = vector.multi_reduction <maxsi>, %34, %cst_22 [1] : vector<16x16xi32> to vector<16xi32>
    %36 = vector.shape_cast %35 : vector<16xi32> to vector<16x1xi32>
    %37 = vector.broadcast %36 : vector<16x1xi32> to vector<16x16xi32>
    %38 = arith.cmpi eq, %34, %37 : vector<16x16xi32>
    %c-1_i32_23 = arith.constant -1 : i32
    %39 = vector.broadcast %c-1_i32_23 : i32 to vector<16x16xi32>
    %40 = arith.select %38, %39, %34 : vector<16x16xi1>, vector<16x16xi32>
    %cst_24 = arith.constant dense<-2147483648> : vector<16xi32>
    %41 = vector.multi_reduction <maxsi>, %40, %cst_24 [1] : vector<16x16xi32> to vector<16xi32>
    %42 = vector.shape_cast %41 : vector<16xi32> to vector<16x1xi32>
    %43 = vector.broadcast %42 : vector<16x1xi32> to vector<16x16xi32>
    %44 = arith.cmpi eq, %40, %43 : vector<16x16xi32>
    %c-1_i32_25 = arith.constant -1 : i32
    %45 = vector.broadcast %c-1_i32_25 : i32 to vector<16x16xi32>
    %46 = arith.select %44, %45, %40 : vector<16x16xi1>, vector<16x16xi32>
    %cst_26 = arith.constant dense<-2147483648> : vector<16xi32>
    %47 = vector.multi_reduction <maxsi>, %46, %cst_26 [1] : vector<16x16xi32> to vector<16xi32>
    %48 = vector.shape_cast %47 : vector<16xi32> to vector<16x1xi32>
    %49 = vector.broadcast %48 : vector<16x1xi32> to vector<16x16xi32>
    %50 = arith.cmpi eq, %46, %49 : vector<16x16xi32>
    %c-1_i32_27 = arith.constant -1 : i32
    %51 = vector.broadcast %c-1_i32_27 : i32 to vector<16x16xi32>
    %52 = arith.select %50, %51, %46 : vector<16x16xi1>, vector<16x16xi32>
    %c0_i32 = arith.constant 0 : i32
    %53 = vector.broadcast %c0_i32 : i32 to vector<16x16xi32>
    %54 = arith.cmpi slt, %52, %53 : vector<16x16xi32>
    %55 = tpu.iota {dimensions = array<i32: 0>} : vector<16x16xi32>
    %56 = tpu.iota {dimensions = array<i32: 1>} : vector<16x16xi32>
    %57 = arith.cmpi eq, %55, %56 : vector<16x16xi32>
    %cst_28 = arith.constant 0.899999976 : f32
    %58 = vector.broadcast %cst_28 : f32 to vector<16x16xf32>
    %59 = arith.mulf %58, %21 : vector<16x16xf32>
    %cst_29 = arith.constant 0.000000e+00 : f32
    %60 = vector.broadcast %cst_29 : f32 to vector<16x16xf32>
    %61 = arith.select %54, %59, %60 : vector<16x16xi1>, vector<16x16xf32>
    %cst_30 = arith.constant 1.500000e+00 : f32
    %62 = vector.broadcast %cst_30 : f32 to vector<16x16xf32>
    %63 = arith.select %57, %62, %61 : vector<16x16xi1>, vector<16x16xf32>
    %cst_31 = arith.constant dense<0.000000e+00> : vector<16xf32>
    %64 = vector.multi_reduction <add>, %63, %cst_31 [1] : vector<16x16xf32> to vector<16xf32>
    %65 = vector.shape_cast %64 : vector<16xf32> to vector<16x1xf32>
    %cst_32 = arith.constant 1.000000e+00 : f32
    %66 = vector.broadcast %cst_32 : f32 to vector<16x1xf32>
    %67 = arith.addf %65, %66 : vector<16x1xf32>
    %68 = math.rsqrt %67 : vector<16x1xf32>
    %c0_33 = arith.constant 0 : index
    %c0_34 = arith.constant 0 : index
    %69 = vector.load %arg2[%c0_33, %c0_34] : memref<32x128xf32, #tpu.memory_space<vmem>>, vector<32x128xf32>
    %cst_35 = arith.constant dense<0.000000e+00> : vector<16x128xf32>
    %70 = tpu.matmul %1, %69, %cst_35 {dimension_numbers = #tpu.dot_dimension_numbers<[1], [0], [0], [1], [0, 0, 1, 1], [], []>, precision = #tpu.contract_precision<fp32>} : vector<16x32xf32>, vector<32x128xf32>, vector<16x128xf32> -> vector<16x128xf32>
    %71 = vector.broadcast %68 : vector<16x1xf32> to vector<16x128xf32>
    %72 = arith.mulf %71, %70 : vector<16x128xf32>
    %cst_36 = arith.constant dense<0.000000e+00> : vector<16x128xf32>
    %73 = tpu.matmul %63, %72, %cst_36 {dimension_numbers = #tpu.dot_dimension_numbers<[1], [0], [0], [1], [0, 0, 1, 1], [], []>, precision = #tpu.contract_precision<fp32>} : vector<16x16xf32>, vector<16x128xf32>, vector<16x128xf32> -> vector<16x128xf32>
    %74 = vector.broadcast %68 : vector<16x1xf32> to vector<16x128xf32>
    %75 = arith.mulf %74, %73 : vector<16x128xf32>
    %c0_37 = arith.constant 0 : index
    %c0_38 = arith.constant 0 : index
    %76 = vector.load %arg4[%c0_37, %c0_38] : memref<1x128xf32, #tpu.memory_space<vmem>>, vector<1x128xf32>
    %c0_39 = arith.constant 0 : index
    %c0_40 = arith.constant 0 : index
    %77 = vector.load %arg5[%c0_39, %c0_40] : memref<1x128xf32, #tpu.memory_space<vmem>>, vector<1x128xf32>
    %cst_41 = arith.constant dense<0.000000e+00> : vector<128xf32>
    %78 = vector.multi_reduction <add>, %75, %cst_41 [0] : vector<16x128xf32> to vector<128xf32>
    %79 = vector.shape_cast %78 : vector<128xf32> to vector<1x128xf32>
    %cst_42 = arith.constant 1.600000e+01 : f32
    %80 = vector.broadcast %cst_42 : f32 to vector<1x128xf32>
    %81 = arith.divf %79, %80 : vector<1x128xf32>
    %82 = vector.broadcast %81 : vector<1x128xf32> to vector<16x128xf32>
    %83 = arith.subf %75, %82 : vector<16x128xf32>
    %84 = arith.mulf %83, %83 : vector<16x128xf32>
    %cst_43 = arith.constant dense<0.000000e+00> : vector<128xf32>
    %85 = vector.multi_reduction <add>, %84, %cst_43 [0] : vector<16x128xf32> to vector<128xf32>
    %86 = vector.shape_cast %85 : vector<128xf32> to vector<1x128xf32>
    %cst_44 = arith.constant 1.600000e+01 : f32
    %87 = vector.broadcast %cst_44 : f32 to vector<1x128xf32>
    %88 = arith.divf %86, %87 : vector<1x128xf32>
    %89 = vector.broadcast %81 : vector<1x128xf32> to vector<16x128xf32>
    %90 = arith.subf %75, %89 : vector<16x128xf32>
    %cst_45 = arith.constant 9.99999974E-6 : f32
    %91 = vector.broadcast %cst_45 : f32 to vector<1x128xf32>
    %92 = arith.addf %88, %91 : vector<1x128xf32>
    %93 = math.rsqrt %92 : vector<1x128xf32>
    %94 = vector.broadcast %93 : vector<1x128xf32> to vector<16x128xf32>
    %95 = arith.mulf %90, %94 : vector<16x128xf32>
    %96 = vector.broadcast %76 : vector<1x128xf32> to vector<16x128xf32>
    %97 = arith.mulf %95, %96 : vector<16x128xf32>
    %98 = vector.broadcast %77 : vector<1x128xf32> to vector<16x128xf32>
    %99 = arith.addf %97, %98 : vector<16x128xf32>
    %100 = math.tanh %99 : vector<16x128xf32>
    %c0_46 = arith.constant 0 : index
    %c0_47 = arith.constant 0 : index
    %101 = vector.load %arg3[%c0_46, %c0_47] : memref<128x128xf32, #tpu.memory_space<vmem>>, vector<128x128xf32>
    %cst_48 = arith.constant dense<0.000000e+00> : vector<16x128xf32>
    %102 = tpu.matmul %100, %101, %cst_48 {dimension_numbers = #tpu.dot_dimension_numbers<[1], [0], [0], [1], [0, 0, 1, 1], [], []>, precision = #tpu.contract_precision<fp32>} : vector<16x128xf32>, vector<128x128xf32>, vector<16x128xf32> -> vector<16x128xf32>
    %103 = vector.broadcast %68 : vector<16x1xf32> to vector<16x128xf32>
    %104 = arith.mulf %103, %102 : vector<16x128xf32>
    %cst_49 = arith.constant dense<0.000000e+00> : vector<16x128xf32>
    %105 = tpu.matmul %63, %104, %cst_49 {dimension_numbers = #tpu.dot_dimension_numbers<[1], [0], [0], [1], [0, 0, 1, 1], [], []>, precision = #tpu.contract_precision<fp32>} : vector<16x16xf32>, vector<16x128xf32>, vector<16x128xf32> -> vector<16x128xf32>
    %106 = vector.broadcast %68 : vector<16x1xf32> to vector<16x128xf32>
    %107 = arith.mulf %106, %105 : vector<16x128xf32>
    %c0_50 = arith.constant 0 : index
    %c0_51 = arith.constant 0 : index
    %108 = vector.load %arg6[%c0_50, %c0_51] : memref<1x128xf32, #tpu.memory_space<vmem>>, vector<1x128xf32>
    %c0_52 = arith.constant 0 : index
    %c0_53 = arith.constant 0 : index
    %109 = vector.load %arg7[%c0_52, %c0_53] : memref<1x128xf32, #tpu.memory_space<vmem>>, vector<1x128xf32>
    %cst_54 = arith.constant dense<0.000000e+00> : vector<128xf32>
    %110 = vector.multi_reduction <add>, %107, %cst_54 [0] : vector<16x128xf32> to vector<128xf32>
    %111 = vector.shape_cast %110 : vector<128xf32> to vector<1x128xf32>
    %cst_55 = arith.constant 1.600000e+01 : f32
    %112 = vector.broadcast %cst_55 : f32 to vector<1x128xf32>
    %113 = arith.divf %111, %112 : vector<1x128xf32>
    %114 = vector.broadcast %113 : vector<1x128xf32> to vector<16x128xf32>
    %115 = arith.subf %107, %114 : vector<16x128xf32>
    %116 = arith.mulf %115, %115 : vector<16x128xf32>
    %cst_56 = arith.constant dense<0.000000e+00> : vector<128xf32>
    %117 = vector.multi_reduction <add>, %116, %cst_56 [0] : vector<16x128xf32> to vector<128xf32>
    %118 = vector.shape_cast %117 : vector<128xf32> to vector<1x128xf32>
    %cst_57 = arith.constant 1.600000e+01 : f32
    %119 = vector.broadcast %cst_57 : f32 to vector<1x128xf32>
    %120 = arith.divf %118, %119 : vector<1x128xf32>
    %121 = vector.broadcast %113 : vector<1x128xf32> to vector<16x128xf32>
    %122 = arith.subf %107, %121 : vector<16x128xf32>
    %cst_58 = arith.constant 9.99999974E-6 : f32
    %123 = vector.broadcast %cst_58 : f32 to vector<1x128xf32>
    %124 = arith.addf %120, %123 : vector<1x128xf32>
    %125 = math.rsqrt %124 : vector<1x128xf32>
    %126 = vector.broadcast %125 : vector<1x128xf32> to vector<16x128xf32>
    %127 = arith.mulf %122, %126 : vector<16x128xf32>
    %128 = vector.broadcast %108 : vector<1x128xf32> to vector<16x128xf32>
    %129 = arith.mulf %127, %128 : vector<16x128xf32>
    %130 = vector.broadcast %109 : vector<1x128xf32> to vector<16x128xf32>
    %131 = arith.addf %129, %130 : vector<16x128xf32>
    %132 = math.tanh %131 : vector<16x128xf32>
    %c0_59 = arith.constant 0 : index
    %c0_60 = arith.constant 0 : index
    %c0_61 = arith.constant 0 : index
    %133 = vector.load %arg8[%c0_59, %c0_60, %c0_61] : memref<1x16x128xf32, #tpu.memory_space<vmem>>, vector<1x16x128xf32>
    %134 = vector.shape_cast %133 : vector<1x16x128xf32> to vector<16x128xf32>
    %135 = vector.shape_cast %132 : vector<16x128xf32> to vector<1x16x128xf32>
    tpu.vector_store %arg8[%c0_59, %c0_60, %c0_61], %135 {strides = array<i32>} : memref<1x16x128xf32, #tpu.memory_space<vmem>>, vector<1x16x128xf32>,
    return
  }
  func.func @transform_0(%arg0: i32) -> (i32, i32, i32) {
    %c0_i32 = arith.constant 0 : i32
    %c0_i32_0 = arith.constant 0 : i32
    %c0_i32_1 = arith.constant 0 : i32
    return %arg0, %c0_i32, %c0_i32_0 : i32, i32, i32
  }
  func.func @transform_1(%arg0: i32) -> (i32, i32) {
    %c0_i32 = arith.constant 0 : i32
    %c0_i32_0 = arith.constant 0 : i32
    %c0_i32_1 = arith.constant 0 : i32
    return %c0_i32, %c0_i32_0 : i32, i32
  }
  func.func @transform_2(%arg0: i32) -> (i32, i32) {
    %c0_i32 = arith.constant 0 : i32
    %c0_i32_0 = arith.constant 0 : i32
    %c0_i32_1 = arith.constant 0 : i32
    return %c0_i32, %c0_i32_0 : i32, i32
  }
  func.func @transform_3(%arg0: i32) -> (i32, i32) {
    %c0_i32 = arith.constant 0 : i32
    %c0_i32_0 = arith.constant 0 : i32
    %c0_i32_1 = arith.constant 0 : i32
    return %c0_i32, %c0_i32_0 : i32, i32
  }
  func.func @transform_4(%arg0: i32) -> (i32, i32) {
    %c0_i32 = arith.constant 0 : i32
    %c0_i32_0 = arith.constant 0 : i32
    %c0_i32_1 = arith.constant 0 : i32
    return %c0_i32, %c0_i32_0 : i32, i32
  }
  func.func @transform_5(%arg0: i32) -> (i32, i32) {
    %c0_i32 = arith.constant 0 : i32
    %c0_i32_0 = arith.constant 0 : i32
    %c0_i32_1 = arith.constant 0 : i32
    return %c0_i32, %c0_i32_0 : i32, i32
  }
  func.func @transform_6(%arg0: i32) -> (i32, i32) {
    %c0_i32 = arith.constant 0 : i32
    %c0_i32_0 = arith.constant 0 : i32
    %c0_i32_1 = arith.constant 0 : i32
    return %c0_i32, %c0_i32_0 : i32, i32
  }
  func.func @transform_7(%arg0: i32) -> (i32, i32, i32) {
    %c0_i32 = arith.constant 0 : i32
    %c0_i32_0 = arith.constant 0 : i32
    %c0_i32_1 = arith.constant 0 : i32
    return %arg0, %c0_i32, %c0_i32_0 : i32, i32, i32
  }
}

</mosaic_0001>

<llo_original>
// kernel: scalable_gcn_forward.1
$region0: #{scalable_gcn_forward.1}
  #allocation0 [shape = 'u32[]', space=smem, size = 0x4, offset = 0x4, fixed_abs, tag = 'smem constant byte address 0x4 - core index']
  #allocation1 [shape = 'u32[144,128]{1,0:T(1,128)}', space=vmem, size = 0x12000, scoped, tag = 'internal scratch']
  #allocation2 [shape = 'f32[16,34]{1,0:T(8,128)}', space=vmem, size = 0x2000, scoped, tag = 'scratch operand']
  #allocation3 [shape = 'f32[16,34]{1,0:T(8,128)}', space=vmem, size = 0x2000, scoped, tag = 'scratch operand']
  %s0 = inlined_call_operand.vmem [shape: f32[2,16,32], index: 0, kind: input, shape index: {}]
  %s1 = inlined_call_operand.vmem [shape: f32[32,128], index: 1, kind: input, shape index: {}]
  %s2 = inlined_call_operand.vmem [shape: f32[128,128], index: 2, kind: input, shape index: {}]
  %s3 = inlined_call_operand.vmem [shape: f32[1,128], index: 3, kind: input, shape index: {}]
  %s4 = inlined_call_operand.vmem [shape: f32[1,128], index: 4, kind: input, shape index: {}]
  %s5 = inlined_call_operand.vmem [shape: f32[1,128], index: 5, kind: input, shape index: {}]
  %s6 = inlined_call_operand.vmem [shape: f32[1,128], index: 6, kind: input, shape index: {}]
  %s7 = inlined_call_operand.vmem [shape: f32[2,16,128], index: 7, kind: output, shape index: {}]
  %s8 = sld [smem:[#allocation0]]
  $region61: #{scalable_gcn_forward.1} parent=0
    _
  %s10 = ssub.s32 1, %s8
  %s11 = scalar_select 0, %s10, %s8
  loop: start=0, step=1, limit=4
  $region2: #{scalable_gcn_forward.1} parent=0 // loop_pre_header
    _
  $region3: #{scalable_gcn_forward.1} parent=0 // loop_header
    %s13 = sphi 0, %s17
    %p14 = scmp.ge.s32.totalorder %s13, 4
    %s23 = sphi 0, %s25
    %s26 = sphi 0, %s23
    %s27 = sphi 0, %s26
    %s43 = sphi 0, %s27
    %s47 = sphi 0, %s47
    %s49 = sphi 0, %s47
    %s50 = sphi 0, %s49
    %s64 = sphi 0, %s50
    %s68 = sphi 0, %s68
    %s70 = sphi 0, %s68
    %s71 = sphi 0, %s70
    %s85 = sphi 0, %s71
    %s89 = sphi 0, %s89
    %s91 = sphi 0, %s89
    %s92 = sphi 0, %s91
    %s106 = sphi 0, %s92
    %s110 = sphi 0, %s110
    %s112 = sphi 0, %s110
    %s113 = sphi 0, %s112
    %s127 = sphi 0, %s113
    %s131 = sphi 0, %s131
    %s133 = sphi 0, %s131
    %s134 = sphi 0, %s133
    %s148 = sphi 0, %s134
    %s152 = sphi 0, %s152
    %s154 = sphi 0, %s152
    %s155 = sphi 0, %s154
    %s169 = sphi 0, %s155
    %s175 = sphi 0, %s177
    %s178 = sphi 0, %s175
    %s179 = sphi 0, %s178
    %s195 = sphi 0, %s179
  $region4: #{scalable_gcn_forward.1} parent=0 // loop_header_branch
    %16 = sbr.rel (%p14) target = $region8
  $region5: #{scalable_gcn_forward.1} parent=0 // loop_body
    %s18 = ssub.s32 %s13, 1
    %s19 = ssub.s32 %s13, 2
    %s20 = sadd.s32 %s13, 1
    %s21 = ssub.s32 %s13, %s20
    %p22 = scmp.eq.s32.totalorder %s21, 0
    %s24 = sadd.s32 %s23, 1
    %s25 = scalar_select %p22, %s23, %s24
    %p28 = pneg %p22
    %p29 = scmp.eq.s32.totalorder %s13, 1
    %p30 = por %p28, %p29
    %p31 = scmp.ne.s32.totalorder %s23, %s26
    %p32 = scmp.eq.s32.totalorder %s13, 0
    %p33 = por %p31, %p32
    %p34 = scmp.ne.s32.totalorder %s23, %s26
    %p35 = scmp.eq.s32.totalorder %s18, 1
    %p36 = por %p34, %p35
    %p37 = scmp.ne.s32.totalorder %s26, %s27
    %p38 = scmp.eq.s32.totalorder %s18, 0
    %p39 = por %p37, %p38
    %p40 = scmp.ne.s32.totalorder %s26, %s27
    %p41 = scmp.eq.s32.totalorder %s19, 1
    %p42 = por %p40, %p41
    %p44 = scmp.ne.s32.totalorder %s27, %s43
    %p45 = scmp.eq.s32.totalorder %s19, 0
    %p46 = por %p44, %p45
    %s48 = sadd.s32 %s47, 1
    %p51 = scmp.eq.s32.totalorder %s13, 1
    %p52 = scmp.ne.s32.totalorder %s47, %s49
    %p53 = scmp.eq.s32.totalorder %s13, 0
    %p54 = por %p52, %p53
    %p55 = scmp.ne.s32.totalorder %s47, %s49
    %p56 = scmp.eq.s32.totalorder %s18, 1
    %p57 = por %p55, %p56
    %p58 = scmp.ne.s32.totalorder %s49, %s50
    %p59 = scmp.eq.s32.totalorder %s18, 0
    %p60 = por %p58, %p59
    %p61 = scmp.ne.s32.totalorder %s49, %s50
    %p62 = scmp.eq.s32.totalorder %s19, 1
    %p63 = por %p61, %p62
    %p65 = scmp.ne.s32.totalorder %s50, %s64
    %p66 = scmp.eq.s32.totalorder %s19, 0
    %p67 = por %p65, %p66
    %s69 = sadd.s32 %s68, 1
    %p72 = scmp.eq.s32.totalorder %s13, 1
    %p73 = scmp.ne.s32.totalorder %s68, %s70
    %p74 = scmp.eq.s32.totalorder %s13, 0
    %p75 = por %p73, %p74
    %p76 = scmp.ne.s32.totalorder %s68, %s70
    %p77 = scmp.eq.s32.totalorder %s18, 1
    %p78 = por %p76, %p77
    %p79 = scmp.ne.s32.totalorder %s70, %s71
    %p80 = scmp.eq.s32.totalorder %s18, 0
    %p81 = por %p79, %p80
    %p82 = scmp.ne.s32.totalorder %s70, %s71
    %p83 = scmp.eq.s32.totalorder %s19, 1
    %p84 = por %p82, %p83
    %p86 = scmp.ne.s32.totalorder %s71, %s85
    %p87 = scmp.eq.s32.totalorder %s19, 0
    %p88 = por %p86, %p87
    %s90 = sadd.s32 %s89, 1
    %p93 = scmp.eq.s32.totalorder %s13, 1
    %p94 = scmp.ne.s32.totalorder %s89, %s91
    %p95 = scmp.eq.s32.totalorder %s13, 0
    %p96 = por %p94, %p95
    %p97 = scmp.ne.s32.totalorder %s89, %s91
    %p98 = scmp.eq.s32.totalorder %s18, 1
    %p99 = por %p97, %p98
    %p100 = scmp.ne.s32.totalorder %s91, %s92
    %p101 = scmp.eq.s32.totalorder %s18, 0
    %p102 = por %p100, %p101
    %p103 = scmp.ne.s32.totalorder %s91, %s92
    %p104 = scmp.eq.s32.totalorder %s19, 1
    %p105 = por %p103, %p104
    %p107 = scmp.ne.s32.totalorder %s92, %s106
    %p108 = scmp.eq.s32.totalorder %s19, 0
    %p109 = por %p107, %p108
    %s111 = sadd.s32 %s110, 1
    %p114 = scmp.eq.s32.totalorder %s13, 1
    %p115 = scmp.ne.s32.totalorder %s110, %s112
    %p116 = scmp.eq.s32.totalorder %s13, 0
    %p117 = por %p115, %p116
    %p118 = scmp.ne.s32.totalorder %s110, %s112
    %p119 = scmp.eq.s32.totalorder %s18, 1
    %p120 = por %p118, %p119
    %p121 = scmp.ne.s32.totalorder %s112, %s113
    %p122 = scmp.eq.s32.totalorder %s18, 0
    %p123 = por %p121, %p122
    %p124 = scmp.ne.s32.totalorder %s112, %s113
    %p125 = scmp.eq.s32.totalorder %s19, 1
    %p126 = por %p124, %p125
    %p128 = scmp.ne.s32.totalorder %s113, %s127
    %p129 = scmp.eq.s32.totalorder %s19, 0
    %p130 = por %p128, %p129
    %s132 = sadd.s32 %s131, 1
    %p135 = scmp.eq.s32.totalorder %s13, 1
    %p136 = scmp.ne.s32.totalorder %s131, %s133
    %p137 = scmp.eq.s32.totalorder %s13, 0
    %p138 = por %p136, %p137
    %p139 = scmp.ne.s32.totalorder %s131, %s133
    %p140 = scmp.eq.s32.totalorder %s18, 1
    %p141 = por %p139, %p140
    %p142 = scmp.ne.s32.totalorder %s133, %s134
    %p143 = scmp.eq.s32.totalorder %s18, 0
    %p144 = por %p142, %p143
    %p145 = scmp.ne.s32.totalorder %s133, %s134
    %p146 = scmp.eq.s32.totalorder %s19, 1
    %p147 = por %p145, %p146
    %p149 = scmp.ne.s32.totalorder %s134, %s148
    %p150 = scmp.eq.s32.totalorder %s19, 0
    %p151 = por %p149, %p150
    %s153 = sadd.s32 %s152, 1
    %p156 = scmp.eq.s32.totalorder %s13, 1
    %p157 = scmp.ne.s32.totalorder %s152, %s154
    %p158 = scmp.eq.s32.totalorder %s13, 0
    %p159 = por %p157, %p158
    %p160 = scmp.ne.s32.totalorder %s152, %s154
    %p161 = scmp.eq.s32.totalorder %s18, 1
    %p162 = por %p160, %p161
    %p163 = scmp.ne.s32.totalorder %s154, %s155
    %p164 = scmp.eq.s32.totalorder %s18, 0
    %p165 = por %p163, %p164
    %p166 = scmp.ne.s32.totalorder %s154, %s155
    %p167 = scmp.eq.s32.totalorder %s19, 1
    %p168 = por %p166, %p167
    %p170 = scmp.ne.s32.totalorder %s155, %s169
    %p171 = scmp.eq.s32.totalorder %s19, 0
    %p172 = por %p170, %p171
    %s173 = ssub.s32 %s13, %s20
    %p174 = scmp.eq.s32.totalorder %s173, 0
    %s176 = sadd.s32 %s175, 1
    %s177 = scalar_select %p174, %s175, %s176
    %p180 = pneg %p174
    %p181 = scmp.eq.s32.totalorder %s13, 1
    %p182 = por %p180, %p181
    %p183 = scmp.ne.s32.totalorder %s175, %s178
    %p184 = scmp.eq.s32.totalorder %s13, 0
    %p185 = por %p183, %p184
    %p186 = scmp.ne.s32.totalorder %s175, %s178
    %p187 = scmp.eq.s32.totalorder %s18, 1
    %p188 = por %p186, %p187
    %p189 = scmp.ne.s32.totalorder %s178, %s179
    %p190 = scmp.eq.s32.totalorder %s18, 0
    %p191 = por %p189, %p190
    %p192 = scmp.ne.s32.totalorder %s178, %s179
    %p193 = scmp.eq.s32.totalorder %s19, 1
    %p194 = por %p192, %p193
    %p196 = scmp.ne.s32.totalorder %s179, %s195
    %p197 = scmp.eq.s32.totalorder %s19, 0
    %p198 = por %p196, %p197
    %p199 = scmp.le.s32.totalorder 1, %s13
    %p200 = scmp.lt.s32.totalorder %s13, 3
    %p201 = pnand %p199, %p200
    %p202 = pneg %p201
    // Predicated region
    $region9: #{scalable_gcn_forward.1} parent=5 // pred_check
      _
    $region10: #{scalable_gcn_forward.1} parent=5 // pred_check_branch
      %204 = sbr.rel (%p201) target = $region12
    $region11: #{scalable_gcn_forward.1} parent=5 // pred_region
      %s205 = ssub.s32 %s13, 1
      // Predicated region
      $region13: #{scalable_gcn_forward.1} parent=11 // pred_check
        %p206 = pneg %p60
      $region14: #{scalable_gcn_forward.1} parent=11 // pred_check_branch
        %208 = sbr.rel (%p206) target = $region16
      $region15: #{scalable_gcn_forward.1} parent=11 // pred_region
        _
      $region16: #{scalable_gcn_forward.1} parent=11 // pred_fallthru
        _
      // Predicated region
      $region17: #{scalable_gcn_forward.1} parent=11 // pred_check
        %p209 = pneg %p81
      $region18: #{scalable_gcn_forward.1} parent=11 // pred_check_branch
        %211 = sbr.rel (%p209) target = $region20
      $region19: #{scalable_gcn_forward.1} parent=11 // pred_region
        _
      $region20: #{scalable_gcn_forward.1} parent=11 // pred_fallthru
        _
      // Predicated region
      $region21: #{scalable_gcn_forward.1} parent=11 // pred_check
        %p212 = pneg %p102
      $region22: #{scalable_gcn_forward.1} parent=11 // pred_check_branch
        %214 = sbr.rel (%p212) target = $region24
      $region23: #{scalable_gcn_forward.1} parent=11 // pred_region
        _
      $region24: #{scalable_gcn_forward.1} parent=11 // pred_fallthru
        _
      // Predicated region
      $region25: #{scalable_gcn_forward.1} parent=11 // pred_check
        %p215 = pneg %p123
      $region26: #{scalable_gcn_forward.1} parent=11 // pred_check_branch
        %217 = sbr.rel (%p215) target = $region28
      $region27: #{scalable_gcn_forward.1} parent=11 // pred_region
        _
      $region28: #{scalable_gcn_forward.1} parent=11 // pred_fallthru
        _
      // Predicated region
      $region29: #{scalable_gcn_forward.1} parent=11 // pred_check
        %p218 = pneg %p144
      $region30: #{scalable_gcn_forward.1} parent=11 // pred_check_branch
        %220 = sbr.rel (%p218) target = $region32
      $region31: #{scalable_gcn_forward.1} parent=11 // pred_region
        _
      $region32: #{scalable_gcn_forward.1} parent=11 // pred_fallthru
        _
      // Predicated region
      $region33: #{scalable_gcn_forward.1} parent=11 // pred_check
        %p221 = pneg %p165
      $region34: #{scalable_gcn_forward.1} parent=11 // pred_check_branch
        %223 = sbr.rel (%p221) target = $region36
      $region35: #{scalable_gcn_forward.1} parent=11 // pred_region
        _
      $region36: #{scalable_gcn_forward.1} parent=11 // pred_fallthru
        _
    $region12: #{scalable_gcn_forward.1} parent=5 // pred_fallthru
      _
    %p224 = scmp.lt.s32.totalorder %s13, 2
    // Predicated region
    $region37: #{scalable_gcn_forward.1} parent=5 // pred_check
      %p225 = pneg %p224
    $region38: #{scalable_gcn_forward.1} parent=5 // pred_check_branch
      %227 = sbr.rel (%p225) target = $region40
    $region39: #{scalable_gcn_forward.1} parent=5 // pred_region
      // Predicated region
      $region41: #{scalable_gcn_forward.1} parent=39 // pred_check
        %p228 = pneg %p33
      $region42: #{scalable_gcn_forward.1} parent=39 // pred_check_branch
        %230 = sbr.rel (%p228) target = $region44
      $region43: #{scalable_gcn_forward.1} parent=39 // pred_region
        %p231 = scmp.lt.s32.totalorder %s13, 1
        %s232 = scalar_select %p231, %s13, 1
        %s233 = smul.addr %s232, 2
        %s234 = smul.addr %s233, 8
        %s235 = scalar_lea.vmem %s0, %s234
      $region44: #{scalable_gcn_forward.1} parent=39 // pred_fallthru
        _
    $region40: #{scalable_gcn_forward.1} parent=5 // pred_fallthru
      _
    %p236 = scmp.le.s32.totalorder 1, %s13
    %p237 = scmp.lt.s32.totalorder %s13, 3
    %p238 = pnand %p236, %p237
    %p239 = pneg %p238
    // Predicated region
    $region45: #{scalable_gcn_forward.1} parent=5 // pred_check
      _
    $region46: #{scalable_gcn_forward.1} parent=5 // pred_check_branch
      %241 = sbr.rel (%p238) target = $region48
    $region47: #{scalable_gcn_forward.1} parent=5 // pred_region
      %s242 = ssub.s32 %s13, 1
      %p243 = scmp.lt.s32.totalorder %s18, 1
      %s244 = scalar_select %p243, %s18, 1
      %s245 = smul.addr %s244, 2
      %s246 = smul.addr %s245, 8
      %s247 = scalar_lea.vmem %s0, %s246
      %p248 = pneg %p39
      %p249 = pneg %p36
      %p250 = pneg %p60
      %p251 = pneg %p57
      %p252 = pneg %p81
      %p253 = pneg %p78
      %p254 = pneg %p102
      %p255 = pneg %p99
      %p256 = pneg %p123
      %p257 = pneg %p120
      %p258 = pneg %p144
      %p259 = pneg %p141
      %p260 = pneg %p165
      %p261 = pneg %p162
      %p262 = pneg %p191
      %p263 = pneg %p188
      %p264 = scmp.lt.s32.totalorder %s18, 1
      %s265 = scalar_select %p264, %s18, 1
      %s266 = smul.addr %s265, 2
      %s267 = smul.addr %s266, 8
      %s268 = scalar_lea.vmem %s7, %s267
      %p269 = scmp.lt.s32.totalorder %s18, 1
      %s270 = scalar_select %p269, %s18, 1
      %s271 = smul.addr %s270, 2
      %s272 = smul.addr %s271, 8
      %s273 = scalar_lea.vmem %s0, %s272
      %p274 = scmp.lt.s32.totalorder %s18, 1
      %s275 = scalar_select %p274, %s18, 1
      %s276 = smul.addr %s275, 2
      %s277 = smul.addr %s276, 8
      %s278 = scalar_lea.vmem %s7, %s277
      %v279 = vld [vmem:[%s273] sm:$0xff]
      %v280 = vld [vmem:[%s273 + $0x8] sm:$0xff]
      %v281 = vmul.f32 %v279, %v279
      %v282 = vmul.f32 %v280, %v280
      %vm283 = vcmask 261120
      %v284 = vsel %vm283, %v281, 0.0
      %285 = vadd.xlane.f32.xlu0 %v284
      %v286 = vpop.xlane.xlu0 %285
      %v287 = vsel %vm283, %v282, 0.0
      %288 = vadd.xlane.f32.xlu0 %v287
      %v289 = vpop.xlane.xlu0 %288
      %v290 = vmul.f32 %v279, -2.0
      %v291 = vmul.f32 %v280, -2.0
      %292 = vst.msk [vmem:[#allocation2] sm:$0xff] %vm283, %v290
      %293 = vst.msk [vmem:[#allocation2 + $0x8] sm:$0xff] %vm283, %v291
      %vm294 = vcmask 269568
      %295 = vst.msk [vmem:[#allocation2] sm:$0xff] %vm294, %v286
      %296 = vst.msk [vmem:[#allocation2 + $0x8] sm:$0xff] %vm294, %v289
      %vm297 = vcmask 277768
      %298 = vst.msk [vmem:[#allocation2] sm:$0xff] %vm297, 1.0
      %299 = vst.msk [vmem:[#allocation2 + $0x8] sm:$0xff] %vm297, 1.0
      %300 = vst.msk [vmem:[#allocation3] sm:$0xff] %vm283, %v279
      %301 = vst.msk [vmem:[#allocation3 + $0x8] sm:$0xff] %vm283, %v280
      %302 = vst.msk [vmem:[#allocation3] sm:$0xff] %vm294, 1.0
      %303 = vst.msk [vmem:[#allocation3 + $0x8] sm:$0xff] %vm294, 1.0
      %304 = vst.msk [vmem:[#allocation3] sm:$0xff] %vm297, %v286
      %305 = vst.msk [vmem:[#allocation3 + $0x8] sm:$0xff] %vm297, %v289
      %v306 = vld [vmem:[#allocation2] sm:$0xff]
      %v307 = vld [vmem:[#allocation2 + $0x8] sm:$0xff]
      %v308 = vld [vmem:[#allocation3] sm:$0xff]
      %v309 = vld [vmem:[#allocation3 + $0x8] sm:$0xff]
      %vm310 = vcmask 277504
      %v312 = vsel %vm310, %v306, 0
      %v315 = vsel %vm310, %v307, 0
      %v318 = vsel %vm310, %v308, 0
      %v321 = vsel %vm310, %v309, 0
      %323 = vmatprep.subr.mxu0 0.0
      %v324 = vand.u32 %v318, 4294901760
      %325 = vmatpush1.xpose.msra.mxu0 %v324
      %326 = vmatprep.subr.mxu0 0.0
      %v327 = vand.u32 %v321, 4294901760
      %328 = vmatpush1.xpose.msra.mxu0 %v327
      %329 = vmatprep.subr.mxu0 0.0
      %330 = vmatpush1.xpose.msra.mxu0 0.0
      %331 = vmatprep.subr.mxu0 0.0
      %332 = vmatpush1.xpose.msra.mxu0 0.0
      %333 = vmatprep.subr.mxu0 0.0
      %334 = vmatpush1.xpose.msra.mxu0 0.0
      %335 = vmatprep.subr.mxu0 0.0
      %336 = vmatpush1.xpose.msra.mxu0 0.0
      %337 = vmatprep.subr.mxu0 0.0
      %338 = vmatpush1.xpose.msra.mxu0 0.0
      %339 = vmatprep.subr.mxu0 0.0
      %340 = vmatpush1.xpose.msra.mxu0 0.0
      %341 = vmatprep.subr.mxu0 0.0
      %342 = vmatpush1.xpose.msra.mxu0 0.0
      %343 = vmatprep.subr.mxu0 0.0
      %344 = vmatpush1.xpose.msra.mxu0 0.0
      %345 = vmatprep.subr.mxu0 0.0
      %346 = vmatpush1.xpose.msra.mxu0 0.0
      %347 = vmatprep.subr.mxu0 0.0
      %348 = vmatpush1.xpose.msra.mxu0 0.0
      %349 = vmatprep.subr.mxu0 0.0
      %350 = vmatpush1.xpose.msra.mxu0 0.0
      %351 = vmatprep.subr.mxu0 0.0
      %352 = vmatpush1.xpose.msra.mxu0 0.0
      %353 = vmatprep.subr.mxu0 0.0
      %354 = vmatpush1.xpose.msra.mxu0 0.0
      %355 = vmatprep.subr.mxu0 0.0
      %356 = vmatpush1.xpose.msra.mxu0 0.0
      %357 = vmatprep.subr.mxu0 0.0
      %358 = vmatpush1.xpose.msra.mxu0 0.0
      %359 = vmatprep.subr.mxu0 0.0
      %360 = vmatpush1.xpose.msra.mxu0 0.0
      %361 = vmatprep.subr.mxu0 0.0
      %362 = vmatpush1.xpose.msra.mxu0 0.0
      %363 = vmatprep.subr.mxu0 0.0
      %364 = vmatpush1.xpose.msra.mxu0 0.0
      %365 = vmatprep.subr.mxu0 0.0
      %366 = vmatpush1.xpose.msra.mxu0 0.0
      %367 = vmatprep.subr.mxu0 0.0
      %368 = vmatpush1.xpose.msra.mxu0 0.0
      %369 = vmatprep.subr.mxu0 0.0
      %370 = vmatpush1.xpose.msra.mxu0 0.0
      %371 = vmatprep.subr.mxu0 0.0
      %372 = vmatpush1.xpose.msra.mxu0 0.0
      %373 = vmatprep.subr.mxu0 0.0
      %374 = vmatpush1.xpose.msra.mxu0 0.0
      %375 = vmatprep.subr.mxu0 0.0
      %376 = vmatpush1.xpose.msra.mxu0 0.0
      %377 = vmatprep.subr.mxu0 0.0
      %378 = vmatpush1.xpose.msra.mxu0 0.0
      %379 = vmatprep.subr.mxu0 0.0
      %380 = vmatpush1.xpose.msra.mxu0 0.0
      %381 = vmatprep.subr.mxu0 0.0
      %382 = vmatpush1.xpose.msra.mxu0 0.0
      %383 = vmatprep.subr.mxu0 0.0
      %384 = vmatpush1.xpose.msra.mxu0 0.0
      %385 = vmatprep.subr.mxu0 0.0
      %386 = vmatpush1.xpose.msra.mxu0 0.0
      %387 = vmatprep.subr.mxu0 0.0
      %388 = vmatpush1.xpose.msra.mxu0 0.0
      %389 = vmatprep.mubr.f32.mxu0 0.0
      %v390 = vand.u32 %v312, 4294901760
      %v391 = vsub.f32 %v312, %v390
      %v392 = vand.u32 %v391, 4294901760
      %v393 = vsub.f32 %v391, %v392
      %v394 = vand.u32 %v393, 4294901760
      %395 = vmatmul.mubr.f32.gmra.mrb[0].mxu0 %v394
      %v396 = vpop.f32.mrb[0].mxu0
      %v397 = vadd.f32 0.0, %v396
      %v398 = vpop.f32.mrb[0].mxu0
      %399 = vmatprep.mubr.f32.mxu0 0.0
      %v400 = vand.u32 %v315, 4294901760
      %v401 = vsub.f32 %v315, %v400
      %v402 = vand.u32 %v401, 4294901760
      %v403 = vsub.f32 %v401, %v402
      %v404 = vand.u32 %v403, 4294901760
      %405 = vmatmul.mubr.f32.gmra.mrb[0].mxu0 %v404
      %v406 = vpop.f32.mrb[0].mxu0
      %v407 = vadd.f32 0.0, %v406
      %v408 = vpop.f32.mrb[0].mxu0
      %409 = vdwg.mxu0
      %410 = vmatprep.subr.mxu0 0.0
      %v411 = vand.u32 %v318, 4294901760
      %v412 = vsub.f32 %v318, %v411
      %v413 = vand.u32 %v412, 4294901760
      %v414 = vsub.f32 %v412, %v413
      %v415 = vand.u32 %v414, 4294901760
      %416 = vmatpush1.xpose.msra.mxu0 %v415
      %417 = vmatprep.subr.mxu0 0.0
      %v418 = vand.u32 %v321, 4294901760
      %v419 = vsub.f32 %v321, %v418
      %v420 = vand.u32 %v419, 4294901760
      %v421 = vsub.f32 %v419, %v420
      %v422 = vand.u32 %v421, 4294901760
      %423 = vmatpush1.xpose.msra.mxu0 %v422
      %424 = vmatprep.subr.mxu0 0.0
      %425 = vmatpush1.xpose.msra.mxu0 0.0
      %426 = vmatprep.subr.mxu0 0.0
      %427 = vmatpush1.xpose.msra.mxu0 0.0
      %428 = vmatprep.subr.mxu0 0.0
      %429 = vmatpush1.xpose.msra.mxu0 0.0
      %430 = vmatprep.subr.mxu0 0.0
      %431 = vmatpush1.xpose.msra.mxu0 0.0
      %432 = vmatprep.subr.mxu0 0.0
      %433 = vmatpush1.xpose.msra.mxu0 0.0
      %434 = vmatprep.subr.mxu0 0.0
      %435 = vmatpush1.xpose.msra.mxu0 0.0
      %436 = vmatprep.subr.mxu0 0.0
      %437 = vmatpush1.xpose.msra.mxu0 0.0
      %438 = vmatprep.subr.mxu0 0.0
      %439 = vmatpush1.xpose.msra.mxu0 0.0
      %440 = vmatprep.subr.mxu0 0.0
      %441 = vmatpush1.xpose.msra.mxu0 0.0
      %442 = vmatprep.subr.mxu0 0.0
      %443 = vmatpush1.xpose.msra.mxu0 0.0
      %444 = vmatprep.subr.mxu0 0.0
      %445 = vmatpush1.xpose.msra.mxu0 0.0
      %446 = vmatprep.subr.mxu0 0.0
      %447 = vmatpush1.xpose.msra.mxu0 0.0
      %448 = vmatprep.subr.mxu0 0.0
      %449 = vmatpush1.xpose.msra.mxu0 0.0
      %450 = vmatprep.subr.mxu0 0.0
      %451 = vmatpush1.xpose.msra.mxu0 0.0
      %452 = vmatprep.subr.mxu0 0.0
      %453 = vmatpush1.xpose.msra.mxu0 0.0
      %454 = vmatprep.subr.mxu0 0.0
      %455 = vmatpush1.xpose.msra.mxu0 0.0
      %456 = vmatprep.subr.mxu0 0.0
      %457 = vmatpush1.xpose.msra.mxu0 0.0
      %458 = vmatprep.subr.mxu0 0.0
      %459 = vmatpush1.xpose.msra.mxu0 0.0
      %460 = vmatprep.subr.mxu0 0.0
      %461 = vmatpush1.xpose.msra.mxu0 0.0
      %462 = vmatprep.subr.mxu0 0.0
      %463 = vmatpush1.xpose.msra.mxu0 0.0
      %464 = vmatprep.subr.mxu0 0.0
      %465 = vmatpush1.xpose.msra.mxu0 0.0
      %466 = vmatprep.subr.mxu0 0.0
      %467 = vmatpush1.xpose.msra.mxu0 0.0
      %468 = vmatprep.subr.mxu0 0.0
      %469 = vmatpush1.xpose.msra.mxu0 0.0
      %470 = vmatprep.subr.mxu0 0.0
      %471 = vmatpush1.xpose.msra.mxu0 0.0
      %472 = vmatprep.subr.mxu0 0.0
      %473 = vmatpush1.xpose.msra.mxu0 0.0
      %474 = vmatprep.subr.mxu0 0.0
      %475 = vmatpush1.xpose.msra.mxu0 0.0
      %476 = vmatprep.subr.mxu0 0.0
      %477 = vmatpush1.xpose.msra.mxu0 0.0
      %478 = vmatprep.subr.mxu0 0.0
      %479 = vmatpush1.xpose.msra.mxu0 0.0
      %480 = vmatprep.subr.mxu0 0.0
      %481 = vmatpush1.xpose.msra.mxu0 0.0
      %482 = vmatprep.subr.mxu0 0.0
      %483 = vmatpush1.xpose.msra.mxu0 0.0
      %484 = vmatprep.mubr.f32.mxu0 0.0
      %v485 = vand.u32 %v312, 4294901760
      %486 = vmatmul.mubr.f32.gmra.mrb[0].mxu0 %v485
      %v487 = vpop.f32.mrb[0].mxu0
      %v488 = vadd.f32 %v397, %v487
      %v489 = vpop.f32.mrb[0].mxu0
      %490 = vmatprep.mubr.f32.mxu0 0.0
      %v491 = vand.u32 %v315, 4294901760
      %492 = vmatmul.mubr.f32.gmra.mrb[0].mxu0 %v491
      %v493 = vpop.f32.mrb[0].mxu0
      %v494 = vadd.f32 %v407, %v493
      %v495 = vpop.f32.mrb[0].mxu0
      %496 = vdwg.mxu0
      %497 = vmatprep.subr.mxu0 0.0
      %v498 = vand.u32 %v318, 4294901760
      %v499 = vsub.f32 %v318, %v498
      %500 = vmatpush1.xpose.msra.mxu0 %v499
      %501 = vmatprep.subr.mxu0 0.0
      %v502 = vand.u32 %v321, 4294901760
      %v503 = vsub.f32 %v321, %v502
      %504 = vmatpush1.xpose.msra.mxu0 %v503
      %505 = vmatprep.subr.mxu0 0.0
      %506 = vmatpush1.xpose.msra.mxu0 0.0
      %507 = vmatprep.subr.mxu0 0.0
      %508 = vmatpush1.xpose.msra.mxu0 0.0
      %509 = vmatprep.subr.mxu0 0.0
      %510 = vmatpush1.xpose.msra.mxu0 0.0
      %511 = vmatprep.subr.mxu0 0.0
      %512 = vmatpush1.xpose.msra.mxu0 0.0
      %513 = vmatprep.subr.mxu0 0.0
      %514 = vmatpush1.xpose.msra.mxu0 0.0
      %515 = vmatprep.subr.mxu0 0.0
      %516 = vmatpush1.xpose.msra.mxu0 0.0
      %517 = vmatprep.subr.mxu0 0.0
      %518 = vmatpush1.xpose.msra.mxu0 0.0
      %519 = vmatprep.subr.mxu0 0.0
      %520 = vmatpush1.xpose.msra.mxu0 0.0
      %521 = vmatprep.subr.mxu0 0.0
      %522 = vmatpush1.xpose.msra.mxu0 0.0
      %523 = vmatprep.subr.mxu0 0.0
      %524 = vmatpush1.xpose.msra.mxu0 0.0
      %525 = vmatprep.subr.mxu0 0.0
      %526 = vmatpush1.xpose.msra.mxu0 0.0
      %527 = vmatprep.subr.mxu0 0.0
      %528 = vmatpush1.xpose.msra.mxu0 0.0
      %529 = vmatprep.subr.mxu0 0.0
      %530 = vmatpush1.xpose.msra.mxu0 0.0
      %531 = vmatprep.subr.mxu0 0.0
      %532 = vmatpush1.xpose.msra.mxu0 0.0
      %533 = vmatprep.subr.mxu0 0.0
      %534 = vmatpush1.xpose.msra.mxu0 0.0
      %535 = vmatprep.subr.mxu0 0.0
      %536 = vmatpush1.xpose.msra.mxu0 0.0
      %537 = vmatprep.subr.mxu0 0.0
      %538 = vmatpush1.xpose.msra.mxu0 0.0
      %539 = vmatprep.subr.mxu0 0.0
      %540 = vmatpush1.xpose.msra.mxu0 0.0
      %541 = vmatprep.subr.mxu0 0.0
      %542 = vmatpush1.xpose.msra.mxu0 0.0
      %543 = vmatprep.subr.mxu0 0.0
      %544 = vmatpush1.xpose.msra.mxu0 0.0
      %545 = vmatprep.subr.mxu0 0.0
      %546 = vmatpush1.xpose.msra.mxu0 0.0
      %547 = vmatprep.subr.mxu0 0.0
      %548 = vmatpush1.xpose.msra.mxu0 0.0
      %549 = vmatprep.subr.mxu0 0.0
      %550 = vmatpush1.xpose.msra.mxu0 0.0
      %551 = vmatprep.subr.mxu0 0.0
      %552 = vmatpush1.xpose.msra.mxu0 0.0
      %553 = vmatprep.subr.mxu0 0.0
      %554 = vmatpush1.xpose.msra.mxu0 0.0
      %555 = vmatprep.subr.mxu0 0.0
      %556 = vmatpush1.xpose.msra.mxu0 0.0
      %557 = vmatprep.subr.mxu0 0.0
      %558 = vmatpush1.xpose.msra.mxu0 0.0
      %559 = vmatprep.subr.mxu0 0.0
      %560 = vmatpush1.xpose.msra.mxu0 0.0
      %561 = vmatprep.subr.mxu0 0.0
      %562 = vmatpush1.xpose.msra.mxu0 0.0
      %563 = vmatprep.subr.mxu0 0.0
      %564 = vmatpush1.xpose.msra.mxu0 0.0
      %565 = vmatprep.mubr.f32.mxu0 0.0
      %v566 = vand.u32 %v312, 4294901760
      %v567 = vsub.f32 %v312, %v566
      %568 = vmatmul.mubr.f32.gmra.mrb[0].mxu0 %v567
      %v569 = vpop.f32.mrb[0].mxu0
      %v570 = vadd.f32 %v488, %v569
      %v571 = vpop.f32.mrb[0].mxu0
      %572 = vmatprep.mubr.f32.mxu0 0.0
      %v573 = vand.u32 %v315, 4294901760
      %v574 = vsub.f32 %v315, %v573
      %575 = vmatmul.mubr.f32.gmra.mrb[0].mxu0 %v574
      %v576 = vpop.f32.mrb[0].mxu0
      %v577 = vadd.f32 %v494, %v576
      %v578 = vpop.f32.mrb[0].mxu0
      %579 = vdwg.mxu0
      %580 = vmatprep.subr.mxu0 0.0
      %v581 = vand.u32 %v318, 4294901760
      %582 = vmatpush1.xpose.msra.mxu0 %v581
      %583 = vmatprep.subr.mxu0 0.0
      %v584 = vand.u32 %v321, 4294901760
      %585 = vmatpush1.xpose.msra.mxu0 %v584
      %586 = vmatprep.subr.mxu0 0.0
      %587 = vmatpush1.xpose.msra.mxu0 0.0
      %588 = vmatprep.subr.mxu0 0.0
      %589 = vmatpush1.xpose.msra.mxu0 0.0
      %590 = vmatprep.subr.mxu0 0.0
      %591 = vmatpush1.xpose.msra.mxu0 0.0
      %592 = vmatprep.subr.mxu0 0.0
      %593 = vmatpush1.xpose.msra.mxu0 0.0
      %594 = vmatprep.subr.mxu0 0.0
      %595 = vmatpush1.xpose.msra.mxu0 0.0
      %596 = vmatprep.subr.mxu0 0.0
      %597 = vmatpush1.xpose.msra.mxu0 0.0
      %598 = vmatprep.subr.mxu0 0.0
      %599 = vmatpush1.xpose.msra.mxu0 0.0
      %600 = vmatprep.subr.mxu0 0.0
      %601 = vmatpush1.xpose.msra.mxu0 0.0
      %602 = vmatprep.subr.mxu0 0.0
      %603 = vmatpush1.xpose.msra.mxu0 0.0
      %604 = vmatprep.subr.mxu0 0.0
      %605 = vmatpush1.xpose.msra.mxu0 0.0
      %606 = vmatprep.subr.mxu0 0.0
      %607 = vmatpush1.xpose.msra.mxu0 0.0
      %608 = vmatprep.subr.mxu0 0.0
      %609 = vmatpush1.xpose.msra.mxu0 0.0
      %610 = vmatprep.subr.mxu0 0.0
      %611 = vmatpush1.xpose.msra.mxu0 0.0
      %612 = vmatprep.subr.mxu0 0.0
      %613 = vmatpush1.xpose.msra.mxu0 0.0
      %614 = vmatprep.subr.mxu0 0.0
      %615 = vmatpush1.xpose.msra.mxu0 0.0
      %616 = vmatprep.subr.mxu0 0.0
      %617 = vmatpush1.xpose.msra.mxu0 0.0
      %618 = vmatprep.subr.mxu0 0.0
      %619 = vmatpush1.xpose.msra.mxu0 0.0
      %620 = vmatprep.subr.mxu0 0.0
      %621 = vmatpush1.xpose.msra.mxu0 0.0
      %622 = vmatprep.subr.mxu0 0.0
      %623 = vmatpush1.xpose.msra.mxu0 0.0
      %624 = vmatprep.subr.mxu0 0.0
      %625 = vmatpush1.xpose.msra.mxu0 0.0
      %626 = vmatprep.subr.mxu0 0.0
      %627 = vmatpush1.xpose.msra.mxu0 0.0
      %628 = vmatprep.subr.mxu0 0.0
      %629 = vmatpush1.xpose.msra.mxu0 0.0
      %630 = vmatprep.subr.mxu0 0.0
      %631 = vmatpush1.xpose.msra.mxu0 0.0
      %632 = vmatprep.subr.mxu0 0.0
      %633 = vmatpush1.xpose.msra.mxu0 0.0
      %634 = vmatprep.subr.mxu0 0.0
      %635 = vmatpush1.xpose.msra.mxu0 0.0
      %636 = vmatprep.subr.mxu0 0.0
      %637 = vmatpush1.xpose.msra.mxu0 0.0
      %638 = vmatprep.subr.mxu0 0.0
      %639 = vmatpush1.xpose.msra.mxu0 0.0
      %640 = vmatprep.subr.mxu0 0.0
      %641 = vmatpush1.xpose.msra.mxu0 0.0
      %642 = vmatprep.subr.mxu0 0.0
      %643 = vmatpush1.xpose.msra.mxu0 0.0
      %644 = vmatprep.subr.mxu0 0.0
      %645 = vmatpush1.xpose.msra.mxu0 0.0
      %646 = vmatprep.mubr.f32.mxu0 0.0
      %v647 = vand.u32 %v312, 4294901760
      %v648 = vsub.f32 %v312, %v647
      %v649 = vand.u32 %v648, 4294901760
      %650 = vmatmul.mubr.f32.gmra.mrb[0].mxu0 %v649
      %v651 = vpop.f32.mrb[0].mxu0
      %v652 = vadd.f32 %v570, %v651
      %v653 = vpop.f32.mrb[0].mxu0
      %654 = vmatprep.mubr.f32.mxu0 0.0
      %v655 = vand.u32 %v315, 4294901760
      %v656 = vsub.f32 %v315, %v655
      %v657 = vand.u32 %v656, 4294901760
      %658 = vmatmul.mubr.f32.gmra.mrb[0].mxu0 %v657
      %v659 = vpop.f32.mrb[0].mxu0
      %v660 = vadd.f32 %v577, %v659
      %v661 = vpop.f32.mrb[0].mxu0
      %662 = vdwg.mxu0
      %663 = vmatprep.subr.mxu0 0.0
      %v664 = vand.u32 %v318, 4294901760
      %v665 = vsub.f32 %v318, %v664
      %v666 = vand.u32 %v665, 4294901760
      %667 = vmatpush1.xpose.msra.mxu0 %v666
      %668 = vmatprep.subr.mxu0 0.0
      %v669 = vand.u32 %v321, 4294901760
      %v670 = vsub.f32 %v321, %v669
      %v671 = vand.u32 %v670, 4294901760
      %672 = vmatpush1.xpose.msra.mxu0 %v671
      %673 = vmatprep.subr.mxu0 0.0
      %674 = vmatpush1.xpose.msra.mxu0 0.0
      %675 = vmatprep.subr.mxu0 0.0
      %676 = vmatpush1.xpose.msra.mxu0 0.0
      %677 = vmatprep.subr.mxu0 0.0
      %678 = vmatpush1.xpose.msra.mxu0 0.0
      %679 = vmatprep.subr.mxu0 0.0
      %680 = vmatpush1.xpose.msra.mxu0 0.0
      %681 = vmatprep.subr.mxu0 0.0
      %682 = vmatpush1.xpose.msra.mxu0 0.0
      %683 = vmatprep.subr.mxu0 0.0
      %684 = vmatpush1.xpose.msra.mxu0 0.0
      %685 = vmatprep.subr.mxu0 0.0
      %686 = vmatpush1.xpose.msra.mxu0 0.0
      %687 = vmatprep.subr.mxu0 0.0
      %688 = vmatpush1.xpose.msra.mxu0 0.0
      %689 = vmatprep.subr.mxu0 0.0
      %690 = vmatpush1.xpose.msra.mxu0 0.0
      %691 = vmatprep.subr.mxu0 0.0
      %692 = vmatpush1.xpose.msra.mxu0 0.0
      %693 = vmatprep.subr.mxu0 0.0
      %694 = vmatpush1.xpose.msra.mxu0 0.0
      %695 = vmatprep.subr.mxu0 0.0
      %696 = vmatpush1.xpose.msra.mxu0 0.0
      %697 = vmatprep.subr.mxu0 0.0
      %698 = vmatpush1.xpose.msra.mxu0 0.0
      %699 = vmatprep.subr.mxu0 0.0
      %700 = vmatpush1.xpose.msra.mxu0 0.0
      %701 = vmatprep.subr.mxu0 0.0
      %702 = vmatpush1.xpose.msra.mxu0 0.0
      %703 = vmatprep.subr.mxu0 0.0
      %704 = vmatpush1.xpose.msra.mxu0 0.0
      %705 = vmatprep.subr.mxu0 0.0
      %706 = vmatpush1.xpose.msra.mxu0 0.0
      %707 = vmatprep.subr.mxu0 0.0
      %708 = vmatpush1.xpose.msra.mxu0 0.0
      %709 = vmatprep.subr.mxu0 0.0
      %710 = vmatpush1.xpose.msra.mxu0 0.0
      %711 = vmatprep.subr.mxu0 0.0
      %712 = vmatpush1.xpose.msra.mxu0 0.0
      %713 = vmatprep.subr.mxu0 0.0
      %714 = vmatpush1.xpose.msra.mxu0 0.0
      %715 = vmatprep.subr.mxu0 0.0
      %716 = vmatpush1.xpose.msra.mxu0 0.0
      %717 = vmatprep.subr.mxu0 0.0
      %718 = vmatpush1.xpose.msra.mxu0 0.0
      %719 = vmatprep.subr.mxu0 0.0
      %720 = vmatpush1.xpose.msra.mxu0 0.0
      %721 = vmatprep.subr.mxu0 0.0
      %722 = vmatpush1.xpose.msra.mxu0 0.0
      %723 = vmatprep.subr.mxu0 0.0
      %724 = vmatpush1.xpose.msra.mxu0 0.0
      %725 = vmatprep.subr.mxu0 0.0
      %726 = vmatpush1.xpose.msra.mxu0 0.0
      %727 = vmatprep.subr.mxu0 0.0
      %728 = vmatpush1.xpose.msra.mxu0 0.0
      %729 = vmatprep.subr.mxu0 0.0
      %730 = vmatpush1.xpose.msra.mxu0 0.0
      %731 = vmatprep.subr.mxu0 0.0
      %732 = vmatpush1.xpose.msra.mxu0 0.0
      %733 = vmatprep.mubr.f32.mxu0 0.0
      %v734 = vand.u32 %v312, 4294901760
      %735 = vmatmul.mubr.f32.gmra.mrb[0].mxu0 %v734
      %v736 = vpop.f32.mrb[0].mxu0
      %v737 = vadd.f32 %v652, %v736
      %v738 = vpop.f32.mrb[0].mxu0
      %739 = vmatprep.mubr.f32.mxu0 0.0
      %v740 = vand.u32 %v315, 4294901760
      %741 = vmatmul.mubr.f32.gmra.mrb[0].mxu0 %v740
      %v742 = vpop.f32.mrb[0].mxu0
      %v743 = vadd.f32 %v660, %v742
      %v744 = vpop.f32.mrb[0].mxu0
      %745 = vdwg.mxu0
      %746 = vmatprep.subr.mxu0 0.0
      %v747 = vand.u32 %v318, 4294901760
      %748 = vmatpush1.xpose.msra.mxu0 %v747
      %749 = vmatprep.subr.mxu0 0.0
      %v750 = vand.u32 %v321, 4294901760
      %751 = vmatpush1.xpose.msra.mxu0 %v750
      %752 = vmatprep.subr.mxu0 0.0
      %753 = vmatpush1.xpose.msra.mxu0 0.0
      %754 = vmatprep.subr.mxu0 0.0
      %755 = vmatpush1.xpose.msra.mxu0 0.0
      %756 = vmatprep.subr.mxu0 0.0
      %757 = vmatpush1.xpose.msra.mxu0 0.0
      %758 = vmatprep.subr.mxu0 0.0
      %759 = vmatpush1.xpose.msra.mxu0 0.0
      %760 = vmatprep.subr.mxu0 0.0
      %761 = vmatpush1.xpose.msra.mxu0 0.0
      %762 = vmatprep.subr.mxu0 0.0
      %763 = vmatpush1.xpose.msra.mxu0 0.0
      %764 = vmatprep.subr.mxu0 0.0
      %765 = vmatpush1.xpose.msra.mxu0 0.0
      %766 = vmatprep.subr.mxu0 0.0
      %767 = vmatpush1.xpose.msra.mxu0 0.0
      %768 = vmatprep.subr.mxu0 0.0
      %769 = vmatpush1.xpose.msra.mxu0 0.0
      %770 = vmatprep.subr.mxu0 0.0
      %771 = vmatpush1.xpose.msra.mxu0 0.0
      %772 = vmatprep.subr.mxu0 0.0
      %773 = vmatpush1.xpose.msra.mxu0 0.0
      %774 = vmatprep.subr.mxu0 0.0
      %775 = vmatpush1.xpose.msra.mxu0 0.0
      %776 = vmatprep.subr.mxu0 0.0
      %777 = vmatpush1.xpose.msra.mxu0 0.0
      %778 = vmatprep.subr.mxu0 0.0
      %779 = vmatpush1.xpose.msra.mxu0 0.0
      %780 = vmatprep.subr.mxu0 0.0
      %781 = vmatpush1.xpose.msra.mxu0 0.0
      %782 = vmatprep.subr.mxu0 0.0
      %783 = vmatpush1.xpose.msra.mxu0 0.0
      %784 = vmatprep.subr.mxu0 0.0
      %785 = vmatpush1.xpose.msra.mxu0 0.0
      %786 = vmatprep.subr.mxu0 0.0
      %787 = vmatpush1.xpose.msra.mxu0 0.0
      %788 = vmatprep.subr.mxu0 0.0
      %789 = vmatpush1.xpose.msra.mxu0 0.0
      %790 = vmatprep.subr.mxu0 0.0
      %791 = vmatpush1.xpose.msra.mxu0 0.0
      %792 = vmatprep.subr.mxu0 0.0
      %793 = vmatpush1.xpose.msra.mxu0 0.0
      %794 = vmatprep.subr.mxu0 0.0
      %795 = vmatpush1.xpose.msra.mxu0 0.0
      %796 = vmatprep.subr.mxu0 0.0
      %797 = vmatpush1.xpose.msra.mxu0 0.0
      %798 = vmatprep.subr.mxu0 0.0
      %799 = vmatpush1.xpose.msra.mxu0 0.0
      %800 = vmatprep.subr.mxu0 0.0
      %801 = vmatpush1.xpose.msra.mxu0 0.0
      %802 = vmatprep.subr.mxu0 0.0
      %803 = vmatpush1.xpose.msra.mxu0 0.0
      %804 = vmatprep.subr.mxu0 0.0
      %805 = vmatpush1.xpose.msra.mxu0 0.0
      %806 = vmatprep.subr.mxu0 0.0
      %807 = vmatpush1.xpose.msra.mxu0 0.0
      %808 = vmatprep.subr.mxu0 0.0
      %809 = vmatpush1.xpose.msra.mxu0 0.0
      %810 = vmatprep.subr.mxu0 0.0
      %811 = vmatpush1.xpose.msra.mxu0 0.0
      %812 = vmatprep.mubr.f32.mxu0 0.0
      %v813 = vand.u32 %v312, 4294901760
      %814 = vmatmul.mubr.f32.gmra.mrb[0].mxu0 %v813
      %v815 = vpop.f32.mrb[0].mxu0
      %v816 = vadd.f32 %v737, %v815
      %v817 = vpop.f32.mrb[0].mxu0
      %818 = vmatprep.mubr.f32.mxu0 0.0
      %v819 = vand.u32 %v315, 4294901760
      %820 = vmatmul.mubr.f32.gmra.mrb[0].mxu0 %v819
      %v821 = vpop.f32.mrb[0].mxu0
      %v822 = vadd.f32 %v743, %v821
      %v823 = vpop.f32.mrb[0].mxu0
      %824 = vdwg.mxu0
      %v825 = vmax.f32 %v816, 0.0
      %v826 = vmax.f32 %v822, 0.0
      %v827 = vmul.f32 %v825, -0.1
      %v828 = vmul.f32 %v826, -0.1
      %v829 = vmul.f32 %v827, 1.442695
      %v830 = vpow.pop %v829
      %v831 = vmul.f32 %v828, 1.442695
      %v832 = vpow.pop %v831
      %v833 = vlaneseq
      %v834 = vand.u32 %v833, 127
      %v835 = vsub.s32 15, %v834
      %v838 = vand.u32 %v830, 4294967280
      %v839 = vand.u32 %v832, 4294967280
      %v840 = vor.u32 %v838, %v835
      %v841 = vor.u32 %v839, %v835
      %vm842 = vcmask 130048
      %v843 = vsel %vm842, %v840, 2147483648
      %v844 = vand.u32 %v843, 65535
      %v845 = vshra.s32 %v843, 16
      %v846 = vcvt.s32.f32 %v844
      %v847 = vcvt.s32.f32 %v845
      %848 = vmax.xlane.f32.xlu0 %v847
      %v849 = vpop.xlane.xlu0 %848
      %vm850 = vcmp.eq.f32.partialorder %v847, %v849
      %v851 = vsel %vm850, %v846, -inf
      %852 = vmax.xlane.f32.xlu0 %v851
      %v853 = vpop.xlane.xlu0 %852
      %v854 = vcvt.f32.s32 %v853
      %v855 = vcvt.f32.s32 %v849
      %v856 = vshll.u32 %v855, 16
      %v857 = vadd.s32 %v856, %v854
      %v858 = vsel %vm842, %v841, 2147483648
      %v859 = vand.u32 %v858, 65535
      %v860 = vshra.s32 %v858, 16
      %v861 = vcvt.s32.f32 %v859
      %v862 = vcvt.s32.f32 %v860
      %863 = vmax.xlane.f32.xlu0 %v862
      %v864 = vpop.xlane.xlu0 %863
      %vm865 = vcmp.eq.f32.partialorder %v862, %v864
      %v866 = vsel %vm865, %v861, -inf
      %867 = vmax.xlane.f32.xlu0 %v866
      %v868 = vpop.xlane.xlu0 %867
      %v869 = vcvt.f32.s32 %v868
      %v870 = vcvt.f32.s32 %v864
      %v871 = vshll.u32 %v870, 16
      %v872 = vadd.s32 %v871, %v869
      %vm873 = vcmp.eq.s32.totalorder %v840, %v857
      %vm874 = vcmp.eq.s32.totalorder %v841, %v872
      %v875 = vsel %vm873, 4294967295, %v840
      %v876 = vsel %vm874, 4294967295, %v841
      %v877 = vsel %vm842, %v875, 2147483648
      %v878 = vand.u32 %v877, 65535
      %v879 = vshra.s32 %v877, 16
      %v880 = vcvt.s32.f32 %v878
      %v881 = vcvt.s32.f32 %v879
      %882 = vmax.xlane.f32.xlu0 %v881
      %v883 = vpop.xlane.xlu0 %882
      %vm884 = vcmp.eq.f32.partialorder %v881, %v883
      %v885 = vsel %vm884, %v880, -inf
      %886 = vmax.xlane.f32.xlu0 %v885
      %v887 = vpop.xlane.xlu0 %886
      %v888 = vcvt.f32.s32 %v887
      %v889 = vcvt.f32.s32 %v883
      %v890 = vshll.u32 %v889, 16
      %v891 = vadd.s32 %v890, %v888
      %v892 = vsel %vm842, %v876, 2147483648
      %v893 = vand.u32 %v892, 65535
      %v894 = vshra.s32 %v892, 16
      %v895 = vcvt.s32.f32 %v893
      %v896 = vcvt.s32.f32 %v894
      %897 = vmax.xlane.f32.xlu0 %v896
      %v898 = vpop.xlane.xlu0 %897
      %vm899 = vcmp.eq.f32.partialorder %v896, %v898
      %v900 = vsel %vm899, %v895, -inf
      %901 = vmax.xlane.f32.xlu0 %v900
      %v902 = vpop.xlane.xlu0 %901
      %v903 = vcvt.f32.s32 %v902
      %v904 = vcvt.f32.s32 %v898
      %v905 = vshll.u32 %v904, 16
      %v906 = vadd.s32 %v905, %v903
      %vm907 = vcmp.eq.s32.totalorder %v875, %v891
      %vm908 = vcmp.eq.s32.totalorder %v876, %v906
      %v909 = vsel %vm907, 4294967295, %v875
      %v910 = vsel %vm908, 4294967295, %v876
      %v911 = vsel %vm842, %v909, 2147483648
      %v912 = vand.u32 %v911, 65535
      %v913 = vshra.s32 %v911, 16
      %v914 = vcvt.s32.f32 %v912
      %v915 = vcvt.s32.f32 %v913
      %916 = vmax.xlane.f32.xlu0 %v915
      %v917 = vpop.xlane.xlu0 %916
      %vm918 = vcmp.eq.f32.partialorder %v915, %v917
      %v919 = vsel %vm918, %v914, -inf
      %920 = vmax.xlane.f32.xlu0 %v919
      %v921 = vpop.xlane.xlu0 %920
      %v922 = vcvt.f32.s32 %v921
      %v923 = vcvt.f32.s32 %v917
      %v924 = vshll.u32 %v923, 16
      %v925 = vadd.s32 %v924, %v922
      %v926 = vsel %vm842, %v910, 2147483648
      %v927 = vand.u32 %v926, 65535
      %v928 = vshra.s32 %v926, 16
      %v929 = vcvt.s32.f32 %v927
      %v930 = vcvt.s32.f32 %v928
      %931 = vmax.xlane.f32.xlu0 %v930
      %v932 = vpop.xlane.xlu0 %931
      %vm933 = vcmp.eq.f32.partialorder %v930, %v932
      %v934 = vsel %vm933, %v929, -inf
      %935 = vmax.xlane.f32.xlu0 %v934
      %v936 = vpop.xlane.xlu0 %935
      %v937 = vcvt.f32.s32 %v936
      %v938 = vcvt.f32.s32 %v932
      %v939 = vshll.u32 %v938, 16
      %v940 = vadd.s32 %v939, %v937
      %vm941 = vcmp.eq.s32.totalorder %v909, %v925
      %vm942 = vcmp.eq.s32.totalorder %v910, %v940
      %v943 = vsel %vm941, 4294967295, %v909
      %v944 = vsel %vm942, 4294967295, %v910
      %v945 = vsel %vm842, %v943, 2147483648
      %v946 = vand.u32 %v945, 65535
      %v947 = vshra.s32 %v945, 16
      %v948 = vcvt.s32.f32 %v946
      %v949 = vcvt.s32.f32 %v947
      %950 = vmax.xlane.f32.xlu0 %v949
      %v951 = vpop.xlane.xlu0 %950
      %vm952 = vcmp.eq.f32.partialorder %v949, %v951
      %v953 = vsel %vm952, %v948, -inf
      %954 = vmax.xlane.f32.xlu0 %v953
      %v955 = vpop.xlane.xlu0 %954
      %v956 = vcvt.f32.s32 %v955
      %v957 = vcvt.f32.s32 %v951
      %v958 = vshll.u32 %v957, 16
      %v959 = vadd.s32 %v958, %v956
      %v960 = vsel %vm842, %v944, 2147483648
      %v961 = vand.u32 %v960, 65535
      %v962 = vshra.s32 %v960, 16
      %v963 = vcvt.s32.f32 %v961
      %v964 = vcvt.s32.f32 %v962
      %965 = vmax.xlane.f32.xlu0 %v964
      %v966 = vpop.xlane.xlu0 %965
      %vm967 = vcmp.eq.f32.partialorder %v964, %v966
      %v968 = vsel %vm967, %v963, -inf
      %969 = vmax.xlane.f32.xlu0 %v968
      %v970 = vpop.xlane.xlu0 %969
      %v971 = vcvt.f32.s32 %v970
      %v972 = vcvt.f32.s32 %v966
      %v973 = vshll.u32 %v972, 16
      %v974 = vadd.s32 %v973, %v971
      %vm975 = vcmp.eq.s32.totalorder %v943, %v959
      %vm976 = vcmp.eq.s32.totalorder %v944, %v974
      %v977 = vsel %vm975, 4294967295, %v943
      %v978 = vsel %vm976, 4294967295, %v944
      %vm979 = vcmp.lt.s32.totalorder %v977, 0
      %vm980 = vcmp.lt.s32.totalorder %v978, 0
      %v981 = vlaneseq
      %v982 = vshrl.u32 %v981, 7
      %v983 = vadd.s32 %v982, 8
      %vm984 = vcmp.eq.s32.totalorder %v982, %v834
      %vm985 = vcmp.eq.s32.totalorder %v983, %v834
      %v986 = vmul.f32 %v830, 0.9
      %v987 = vmul.f32 %v832, 0.9
      %v988 = vsel %vm979, %v986, 0.0
      %v989 = vsel %vm980, %v987, 0.0
      %v990 = vsel %vm984, 1.5, %v988
      %v991 = vsel %vm985, 1.5, %v989
      %v992 = vsel %vm842, %v990, 0.0
      %993 = vadd.xlane.f32.xlu0 %v992
      %v994 = vpop.xlane.xlu0 %993
      %v995 = vsel %vm842, %v991, 0.0
      %996 = vadd.xlane.f32.xlu0 %v995
      %v997 = vpop.xlane.xlu0 %996
      %v998 = vadd.f32 %v994, 1.0
      %v999 = vadd.f32 %v997, 1.0
      %v1000 = vrsqrt.pop %v998
      %v1001 = vrsqrt.pop %v999
      %v1002 = vld [vmem:[%s1] sm:$0xff]
      %v1003 = vld [vmem:[%s1 + $0x8] sm:$0xff]
      %v1004 = vld [vmem:[%s1 + $0x10] sm:$0xff]
      %v1005 = vld [vmem:[%s1 + $0x18] sm:$0xff]
      %v1007 = vsel %vm283, %v279, 0
      %v1010 = vsel %vm283, %v280, 0
      %1012 = vmatprep.subr.mxu0 0.0
      %v1013 = vand.u32 %v1002, 4294901760
      %1014 = vmatpush1.msra.mxu0 %v1013
      %1015 = vmatprep.subr.mxu0 0.0
      %v1016 = vand.u32 %v1003, 4294901760
      %1017 = vmatpush1.msra.mxu0 %v1016
      %1018 = vmatprep.subr.mxu0 0.0
      %v1019 = vand.u32 %v1004, 4294901760
      %1020 = vmatpush1.msra.mxu0 %v1019
      %1021 = vmatprep.subr.mxu0 0.0
      %v1022 = vand.u32 %v1005, 4294901760
      %1023 = vmatpush1.msra.mxu0 %v1022
      %1024 = vmatprep.subr.mxu0 0.0
      %1025 = vmatpush1.msra.mxu0 0.0
      %1026 = vmatprep.subr.mxu0 0.0
      %1027 = vmatpush1.msra.mxu0 0.0
      %1028 = vmatprep.subr.mxu0 0.0
      %1029 = vmatpush1.msra.mxu0 0.0
      %1030 = vmatprep.subr.mxu0 0.0
      %1031 = vmatpush1.msra.mxu0 0.0
      %1032 = vmatprep.subr.mxu0 0.0
      %1033 = vmatpush1.msra.mxu0 0.0
      %1034 = vmatprep.subr.mxu0 0.0
      %1035 = vmatpush1.msra.mxu0 0.0
      %1036 = vmatprep.subr.mxu0 0.0
      %1037 = vmatpush1.msra.mxu0 0.0
      %1038 = vmatprep.subr.mxu0 0.0
      %1039 = vmatpush1.msra.mxu0 0.0
      %1040 = vmatprep.subr.mxu0 0.0
      %1041 = vmatpush1.msra.mxu0 0.0
      %1042 = vmatprep.subr.mxu0 0.0
      %1043 = vmatpush1.msra.mxu0 0.0
      %1044 = vmatprep.subr.mxu0 0.0
      %1045 = vmatpush1.msra.mxu0 0.0
      %1046 = vmatprep.subr.mxu0 0.0
      %1047 = vmatpush1.msra.mxu0 0.0
      %1048 = vmatprep.subr.mxu0 0.0
      %1049 = vmatpush1.msra.mxu0 0.0
      %1050 = vmatprep.subr.mxu0 0.0
      %1051 = vmatpush1.msra.mxu0 0.0
      %1052 = vmatprep.subr.mxu0 0.0
      %1053 = vmatpush1.msra.mxu0 0.0
      %1054 = vmatprep.subr.mxu0 0.0
      %1055 = vmatpush1.msra.mxu0 0.0
      %1056 = vmatprep.subr.mxu0 0.0
      %1057 = vmatpush1.msra.mxu0 0.0
      %1058 = vmatprep.subr.mxu0 0.0
      %1059 = vmatpush1.msra.mxu0 0.0
      %1060 = vmatprep.subr.mxu0 0.0
      %1061 = vmatpush1.msra.mxu0 0.0
      %1062 = vmatprep.subr.mxu0 0.0
      %1063 = vmatpush1.msra.mxu0 0.0
      %1064 = vmatprep.subr.mxu0 0.0
      %1065 = vmatpush1.msra.mxu0 0.0
      %1066 = vmatprep.subr.mxu0 0.0
      %1067 = vmatpush1.msra.mxu0 0.0
      %1068 = vmatprep.subr.mxu0 0.0
      %1069 = vmatpush1.msra.mxu0 0.0
      %1070 = vmatprep.subr.mxu0 0.0
      %1071 = vmatpush1.msra.mxu0 0.0
      %1072 = vmatprep.subr.mxu0 0.0
      %1073 = vmatpush1.msra.mxu0 0.0
      %1074 = vmatprep.subr.mxu0 0.0
      %1075 = vmatpush1.msra.mxu0 0.0
      %1076 = vmatprep.subr.mxu0 0.0
      %1077 = vmatpush1.msra.mxu0 0.0
      %1078 = vmatprep.subr.mxu0 0.0
      %1079 = vmatpush1.msra.mxu0 0.0
      %1080 = vmatprep.mubr.f32.mxu0 0.0
      %v1081 = vand.u32 %v1007, 4294901760
      %v1082 = vsub.f32 %v1007, %v1081
      %v1083 = vand.u32 %v1082, 4294901760
      %v1084 = vsub.f32 %v1082, %v1083
      %v1085 = vand.u32 %v1084, 4294901760
      %1086 = vmatmul.mubr.f32.gmra.mrb[0].mxu0 %v1085
      %v1087 = vpop.f32.mrb[0].mxu0
      %v1088 = vadd.f32 0.0, %v1087
      %v1089 = vpop.f32.mrb[0].mxu0
      %1090 = vmatprep.mubr.f32.mxu0 0.0
      %v1091 = vand.u32 %v1010, 4294901760
      %v1092 = vsub.f32 %v1010, %v1091
      %v1093 = vand.u32 %v1092, 4294901760
      %v1094 = vsub.f32 %v1092, %v1093
      %v1095 = vand.u32 %v1094, 4294901760
      %1096 = vmatmul.mubr.f32.gmra.mrb[0].mxu0 %v1095
      %v1097 = vpop.f32.mrb[0].mxu0
      %v1098 = vadd.f32 0.0, %v1097
      %v1099 = vpop.f32.mrb[0].mxu0
      %1100 = vdwg.mxu0
      %1101 = vmatprep.subr.mxu0 0.0
      %v1102 = vand.u32 %v1002, 4294901760
      %v1103 = vsub.f32 %v1002, %v1102
      %v1104 = vand.u32 %v1103, 4294901760
      %v1105 = vsub.f32 %v1103, %v1104
      %v1106 = vand.u32 %v1105, 4294901760
      %1107 = vmatpush1.msra.mxu0 %v1106
      %1108 = vmatprep.subr.mxu0 0.0
      %v1109 = vand.u32 %v1003, 4294901760
      %v1110 = vsub.f32 %v1003, %v1109
      %v1111 = vand.u32 %v1110, 4294901760
      %v1112 = vsub.f32 %v1110, %v1111
      %v1113 = vand.u32 %v1112, 4294901760
      %1114 = vmatpush1.msra.mxu0 %v1113
      %1115 = vmatprep.subr.mxu0 0.0
      %v1116 = vand.u32 %v1004, 4294901760
      %v1117 = vsub.f32 %v1004, %v1116
      %v1118 = vand.u32 %v1117, 4294901760
      %v1119 = vsub.f32 %v1117, %v1118
      %v1120 = vand.u32 %v1119, 4294901760
      %1121 = vmatpush1.msra.mxu0 %v1120
      %1122 = vmatprep.subr.mxu0 0.0
      %v1123 = vand.u32 %v1005, 4294901760
      %v1124 = vsub.f32 %v1005, %v1123
      %v1125 = vand.u32 %v1124, 4294901760
      %v1126 = vsub.f32 %v1124, %v1125
      %v1127 = vand.u32 %v1126, 4294901760
      %1128 = vmatpush1.msra.mxu0 %v1127
      %1129 = vmatprep.subr.mxu0 0.0
      %1130 = vmatpush1.msra.mxu0 0.0
      %1131 = vmatprep.subr.mxu0 0.0
      %1132 = vmatpush1.msra.mxu0 0.0
      %1133 = vmatprep.subr.mxu0 0.0
      %1134 = vmatpush1.msra.mxu0 0.0
      %1135 = vmatprep.subr.mxu0 0.0
      %1136 = vmatpush1.msra.mxu0 0.0
      %1137 = vmatprep.subr.mxu0 0.0
      %1138 = vmatpush1.msra.mxu0 0.0
      %1139 = vmatprep.subr.mxu0 0.0
      %1140 = vmatpush1.msra.mxu0 0.0
      %1141 = vmatprep.subr.mxu0 0.0
      %1142 = vmatpush1.msra.mxu0 0.0
      %1143 = vmatprep.subr.mxu0 0.0
      %1144 = vmatpush1.msra.mxu0 0.0
      %1145 = vmatprep.subr.mxu0 0.0
      %1146 = vmatpush1.msra.mxu0 0.0
      %1147 = vmatprep.subr.mxu0 0.0
      %1148 = vmatpush1.msra.mxu0 0.0
      %1149 = vmatprep.subr.mxu0 0.0
      %1150 = vmatpush1.msra.mxu0 0.0
      %1151 = vmatprep.subr.mxu0 0.0
      %1152 = vmatpush1.msra.mxu0 0.0
      %1153 = vmatprep.subr.mxu0 0.0
      %1154 = vmatpush1.msra.mxu0 0.0
      %1155 = vmatprep.subr.mxu0 0.0
      %1156 = vmatpush1.msra.mxu0 0.0
      %1157 = vmatprep.subr.mxu0 0.0
      %1158 = vmatpush1.msra.mxu0 0.0
      %1159 = vmatprep.subr.mxu0 0.0
      %1160 = vmatpush1.msra.mxu0 0.0
      %1161 = vmatprep.subr.mxu0 0.0
      %1162 = vmatpush1.msra.mxu0 0.0
      %1163 = vmatprep.subr.mxu0 0.0
      %1164 = vmatpush1.msra.mxu0 0.0
      %1165 = vmatprep.subr.mxu0 0.0
      %1166 = vmatpush1.msra.mxu0 0.0
      %1167 = vmatprep.subr.mxu0 0.0
      %1168 = vmatpush1.msra.mxu0 0.0
      %1169 = vmatprep.subr.mxu0 0.0
      %1170 = vmatpush1.msra.mxu0 0.0
      %1171 = vmatprep.subr.mxu0 0.0
      %1172 = vmatpush1.msra.mxu0 0.0
      %1173 = vmatprep.subr.mxu0 0.0
      %1174 = vmatpush1.msra.mxu0 0.0
      %1175 = vmatprep.subr.mxu0 0.0
      %1176 = vmatpush1.msra.mxu0 0.0
      %1177 = vmatprep.subr.mxu0 0.0
      %1178 = vmatpush1.msra.mxu0 0.0
      %1179 = vmatprep.subr.mxu0 0.0
      %1180 = vmatpush1.msra.mxu0 0.0
      %1181 = vmatprep.subr.mxu0 0.0
      %1182 = vmatpush1.msra.mxu0 0.0
      %1183 = vmatprep.subr.mxu0 0.0
      %1184 = vmatpush1.msra.mxu0 0.0
      %1185 = vmatprep.mubr.f32.mxu0 0.0
      %v1186 = vand.u32 %v1007, 4294901760
      %1187 = vmatmul.mubr.f32.gmra.mrb[0].mxu0 %v1186
      %v1188 = vpop.f32.mrb[0].mxu0
      %v1189 = vadd.f32 %v1088, %v1188
      %v1190 = vpop.f32.mrb[0].mxu0
      %1191 = vmatprep.mubr.f32.mxu0 0.0
      %v1192 = vand.u32 %v1010, 4294901760
      %1193 = vmatmul.mubr.f32.gmra.mrb[0].mxu0 %v1192
      %v1194 = vpop.f32.mrb[0].mxu0
      %v1195 = vadd.f32 %v1098, %v1194
      %v1196 = vpop.f32.mrb[0].mxu0
      %1197 = vdwg.mxu0
      %1198 = vmatprep.subr.mxu0 0.0
      %v1199 = vand.u32 %v1002, 4294901760
      %v1200 = vsub.f32 %v1002, %v1199
      %1201 = vmatpush1.msra.mxu0 %v1200
      %1202 = vmatprep.subr.mxu0 0.0
      %v1203 = vand.u32 %v1003, 4294901760
      %v1204 = vsub.f32 %v1003, %v1203
      %1205 = vmatpush1.msra.mxu0 %v1204
      %1206 = vmatprep.subr.mxu0 0.0
      %v1207 = vand.u32 %v1004, 4294901760
      %v1208 = vsub.f32 %v1004, %v1207
      %1209 = vmatpush1.msra.mxu0 %v1208
      %1210 = vmatprep.subr.mxu0 0.0
      %v1211 = vand.u32 %v1005, 4294901760
      %v1212 = vsub.f32 %v1005, %v1211
      %1213 = vmatpush1.msra.mxu0 %v1212
      %1214 = vmatprep.subr.mxu0 0.0
      %1215 = vmatpush1.msra.mxu0 0.0
      %1216 = vmatprep.subr.mxu0 0.0
      %1217 = vmatpush1.msra.mxu0 0.0
      %1218 = vmatprep.subr.mxu0 0.0
      %1219 = vmatpush1.msra.mxu0 0.0
      %1220 = vmatprep.subr.mxu0 0.0
      %1221 = vmatpush1.msra.mxu0 0.0
      %1222 = vmatprep.subr.mxu0 0.0
      %1223 = vmatpush1.msra.mxu0 0.0
      %1224 = vmatprep.subr.mxu0 0.0
      %1225 = vmatpush1.msra.mxu0 0.0
      %1226 = vmatprep.subr.mxu0 0.0
      %1227 = vmatpush1.msra.mxu0 0.0
      %1228 = vmatprep.subr.mxu0 0.0
      %1229 = vmatpush1.msra.mxu0 0.0
      %1230 = vmatprep.subr.mxu0 0.0
      %1231 = vmatpush1.msra.mxu0 0.0
      %1232 = vmatprep.subr.mxu0 0.0
      %1233 = vmatpush1.msra.mxu0 0.0
      %1234 = vmatprep.subr.mxu0 0.0
      %1235 = vmatpush1.msra.mxu0 0.0
      %1236 = vmatprep.subr.mxu0 0.0
      %1237 = vmatpush1.msra.mxu0 0.0
      %1238 = vmatprep.subr.mxu0 0.0
      %1239 = vmatpush1.msra.mxu0 0.0
      %1240 = vmatprep.subr.mxu0 0.0
      %1241 = vmatpush1.msra.mxu0 0.0
      %1242 = vmatprep.subr.mxu0 0.0
      %1243 = vmatpush1.msra.mxu0 0.0
      %1244 = vmatprep.subr.mxu0 0.0
      %1245 = vmatpush1.msra.mxu0 0.0
      %1246 = vmatprep.subr.mxu0 0.0
      %1247 = vmatpush1.msra.mxu0 0.0
      %1248 = vmatprep.subr.mxu0 0.0
      %1249 = vmatpush1.msra.mxu0 0.0
      %1250 = vmatprep.subr.mxu0 0.0
      %1251 = vmatpush1.msra.mxu0 0.0
      %1252 = vmatprep.subr.mxu0 0.0
      %1253 = vmatpush1.msra.mxu0 0.0
      %1254 = vmatprep.subr.mxu0 0.0
      %1255 = vmatpush1.msra.mxu0 0.0
      %1256 = vmatprep.subr.mxu0 0.0
      %1257 = vmatpush1.msra.mxu0 0.0
      %1258 = vmatprep.subr.mxu0 0.0
      %1259 = vmatpush1.msra.mxu0 0.0
      %1260 = vmatprep.subr.mxu0 0.0
      %1261 = vmatpush1.msra.mxu0 0.0
      %1262 = vmatprep.subr.mxu0 0.0
      %1263 = vmatpush1.msra.mxu0 0.0
      %1264 = vmatprep.subr.mxu0 0.0
      %1265 = vmatpush1.msra.mxu0 0.0
      %1266 = vmatprep.subr.mxu0 0.0
      %1267 = vmatpush1.msra.mxu0 0.0
      %1268 = vmatprep.subr.mxu0 0.0
      %1269 = vmatpush1.msra.mxu0 0.0
      %1270 = vmatprep.mubr.f32.mxu0 0.0
      %v1271 = vand.u32 %v1007, 4294901760
      %v1272 = vsub.f32 %v1007, %v1271
      %1273 = vmatmul.mubr.f32.gmra.mrb[0].mxu0 %v1272
      %v1274 = vpop.f32.mrb[0].mxu0
      %v1275 = vadd.f32 %v1189, %v1274
      %v1276 = vpop.f32.mrb[0].mxu0
      %1277 = vmatprep.mubr.f32.mxu0 0.0
      %v1278 = vand.u32 %v1010, 4294901760
      %v1279 = vsub.f32 %v1010, %v1278
      %1280 = vmatmul.mubr.f32.gmra.mrb[0].mxu0 %v1279
      %v1281 = vpop.f32.mrb[0].mxu0
      %v1282 = vadd.f32 %v1195, %v1281
      %v1283 = vpop.f32.mrb[0].mxu0
      %1284 = vdwg.mxu0
      %1285 = vmatprep.subr.mxu0 0.0
      %v1286 = vand.u32 %v1002, 4294901760
      %1287 = vmatpush1.msra.mxu0 %v1286
      %1288 = vmatprep.subr.mxu0 0.0
      %v1289 = vand.u32 %v1003, 4294901760
      %1290 = vmatpush1.msra.mxu0 %v1289
      %1291 = vmatprep.subr.mxu0 0.0
      %v1292 = vand.u32 %v1004, 4294901760
      %1293 = vmatpush1.msra.mxu0 %v1292
      %1294 = vmatprep.subr.mxu0 0.0
      %v1295 = vand.u32 %v1005, 4294901760
      %1296 = vmatpush1.msra.mxu0 %v1295
      %1297 = vmatprep.subr.mxu0 0.0
      %1298 = vmatpush1.msra.mxu0 0.0
      %1299 = vmatprep.subr.mxu0 0.0
      %1300 = vmatpush1.msra.mxu0 0.0
      %1301 = vmatprep.subr.mxu0 0.0
      %1302 = vmatpush1.msra.mxu0 0.0
      %1303 = vmatprep.subr.mxu0 0.0
      %1304 = vmatpush1.msra.mxu0 0.0
      %1305 = vmatprep.subr.mxu0 0.0
      %1306 = vmatpush1.msra.mxu0 0.0
      %1307 = vmatprep.subr.mxu0 0.0
      %1308 = vmatpush1.msra.mxu0 0.0
      %1309 = vmatprep.subr.mxu0 0.0
      %1310 = vmatpush1.msra.mxu0 0.0
      %1311 = vmatprep.subr.mxu0 0.0
      %1312 = vmatpush1.msra.mxu0 0.0
      %1313 = vmatprep.subr.mxu0 0.0
      %1314 = vmatpush1.msra.mxu0 0.0
      %1315 = vmatprep.subr.mxu0 0.0
      %1316 = vmatpush1.msra.mxu0 0.0
      %1317 = vmatprep.subr.mxu0 0.0
      %1318 = vmatpush1.msra.mxu0 0.0
      %1319 = vmatprep.subr.mxu0 0.0
      %1320 = vmatpush1.msra.mxu0 0.0
      %1321 = vmatprep.subr.mxu0 0.0
      %1322 = vmatpush1.msra.mxu0 0.0
      %1323 = vmatprep.subr.mxu0 0.0
      %1324 = vmatpush1.msra.mxu0 0.0
      %1325 = vmatprep.subr.mxu0 0.0
      %1326 = vmatpush1.msra.mxu0 0.0
      %1327 = vmatprep.subr.mxu0 0.0
      %1328 = vmatpush1.msra.mxu0 0.0
      %1329 = vmatprep.subr.mxu0 0.0
      %1330 = vmatpush1.msra.mxu0 0.0
      %1331 = vmatprep.subr.mxu0 0.0
      %1332 = vmatpush1.msra.mxu0 0.0
      %1333 = vmatprep.subr.mxu0 0.0
      %1334 = vmatpush1.msra.mxu0 0.0
      %1335 = vmatprep.subr.mxu0 0.0
      %1336 = vmatpush1.msra.mxu0 0.0
      %1337 = vmatprep.subr.mxu0 0.0
      %1338 = vmatpush1.msra.mxu0 0.0
      %1339 = vmatprep.subr.mxu0 0.0
      %1340 = vmatpush1.msra.mxu0 0.0
      %1341 = vmatprep.subr.mxu0 0.0
      %1342 = vmatpush1.msra.mxu0 0.0
      %1343 = vmatprep.subr.mxu0 0.0
      %1344 = vmatpush1.msra.mxu0 0.0
      %1345 = vmatprep.subr.mxu0 0.0
      %1346 = vmatpush1.msra.mxu0 0.0
      %1347 = vmatprep.subr.mxu0 0.0
      %1348 = vmatpush1.msra.mxu0 0.0
      %1349 = vmatprep.subr.mxu0 0.0
      %1350 = vmatpush1.msra.mxu0 0.0
      %1351 = vmatprep.subr.mxu0 0.0
      %1352 = vmatpush1.msra.mxu0 0.0
      %1353 = vmatprep.mubr.f32.mxu0 0.0
      %v1354 = vand.u32 %v1007, 4294901760
      %v1355 = vsub.f32 %v1007, %v1354
      %v1356 = vand.u32 %v1355, 4294901760
      %1357 = vmatmul.mubr.f32.gmra.mrb[0].mxu0 %v1356
      %v1358 = vpop.f32.mrb[0].mxu0
      %v1359 = vadd.f32 %v1275, %v1358
      %v1360 = vpop.f32.mrb[0].mxu0
      %1361 = vmatprep.mubr.f32.mxu0 0.0
      %v1362 = vand.u32 %v1010, 4294901760
      %v1363 = vsub.f32 %v1010, %v1362
      %v1364 = vand.u32 %v1363, 4294901760
      %1365 = vmatmul.mubr.f32.gmra.mrb[0].mxu0 %v1364
      %v1366 = vpop.f32.mrb[0].mxu0
      %v1367 = vadd.f32 %v1282, %v1366
      %v1368 = vpop.f32.mrb[0].mxu0
      %1369 = vdwg.mxu0
      %1370 = vmatprep.subr.mxu0 0.0
      %v1371 = vand.u32 %v1002, 4294901760
      %v1372 = vsub.f32 %v1002, %v1371
      %v1373 = vand.u32 %v1372, 4294901760
      %1374 = vmatpush1.msra.mxu0 %v1373
      %1375 = vmatprep.subr.mxu0 0.0
      %v1376 = vand.u32 %v1003, 4294901760
      %v1377 = vsub.f32 %v1003, %v1376
      %v1378 = vand.u32 %v1377, 4294901760
      %1379 = vmatpush1.msra.mxu0 %v1378
      %1380 = vmatprep.subr.mxu0 0.0
      %v1381 = vand.u32 %v1004, 4294901760
      %v1382 = vsub.f32 %v1004, %v1381
      %v1383 = vand.u32 %v1382, 4294901760
      %1384 = vmatpush1.msra.mxu0 %v1383
      %1385 = vmatprep.subr.mxu0 0.0
      %v1386 = vand.u32 %v1005, 4294901760
      %v1387 = vsub.f32 %v1005, %v1386
      %v1388 = vand.u32 %v1387, 4294901760
      %1389 = vmatpush1.msra.mxu0 %v1388
      %1390 = vmatprep.subr.mxu0 0.0
      %1391 = vmatpush1.msra.mxu0 0.0
      %1392 = vmatprep.subr.mxu0 0.0
      %1393 = vmatpush1.msra.mxu0 0.0
      %1394 = vmatprep.subr.mxu0 0.0
      %1395 = vmatpush1.msra.mxu0 0.0
      %1396 = vmatprep.subr.mxu0 0.0
      %1397 = vmatpush1.msra.mxu0 0.0
      %1398 = vmatprep.subr.mxu0 0.0
      %1399 = vmatpush1.msra.mxu0 0.0
      %1400 = vmatprep.subr.mxu0 0.0
      %1401 = vmatpush1.msra.mxu0 0.0
      %1402 = vmatprep.subr.mxu0 0.0
      %1403 = vmatpush1.msra.mxu0 0.0
      %1404 = vmatprep.subr.mxu0 0.0
      %1405 = vmatpush1.msra.mxu0 0.0
      %1406 = vmatprep.subr.mxu0 0.0
      %1407 = vmatpush1.msra.mxu0 0.0
      %1408 = vmatprep.subr.mxu0 0.0
      %1409 = vmatpush1.msra.mxu0 0.0
      %1410 = vmatprep.subr.mxu0 0.0
      %1411 = vmatpush1.msra.mxu0 0.0
      %1412 = vmatprep.subr.mxu0 0.0
      %1413 = vmatpush1.msra.mxu0 0.0
      %1414 = vmatprep.subr.mxu0 0.0
      %1415 = vmatpush1.msra.mxu0 0.0
      %1416 = vmatprep.subr.mxu0 0.0
      %1417 = vmatpush1.msra.mxu0 0.0
      %1418 = vmatprep.subr.mxu0 0.0
      %1419 = vmatpush1.msra.mxu0 0.0
      %1420 = vmatprep.subr.mxu0 0.0
      %1421 = vmatpush1.msra.mxu0 0.0
      %1422 = vmatprep.subr.mxu0 0.0
      %1423 = vmatpush1.msra.mxu0 0.0
      %1424 = vmatprep.subr.mxu0 0.0
      %1425 = vmatpush1.msra.mxu0 0.0
      %1426 = vmatprep.subr.mxu0 0.0
      %1427 = vmatpush1.msra.mxu0 0.0
      %1428 = vmatprep.subr.mxu0 0.0
      %1429 = vmatpush1.msra.mxu0 0.0
      %1430 = vmatprep.subr.mxu0 0.0
      %1431 = vmatpush1.msra.mxu0 0.0
      %1432 = vmatprep.subr.mxu0 0.0
      %1433 = vmatpush1.msra.mxu0 0.0
      %1434 = vmatprep.subr.mxu0 0.0
      %1435 = vmatpush1.msra.mxu0 0.0
      %1436 = vmatprep.subr.mxu0 0.0
      %1437 = vmatpush1.msra.mxu0 0.0
      %1438 = vmatprep.subr.mxu0 0.0
      %1439 = vmatpush1.msra.mxu0 0.0
      %1440 = vmatprep.subr.mxu0 0.0
      %1441 = vmatpush1.msra.mxu0 0.0
      %1442 = vmatprep.subr.mxu0 0.0
      %1443 = vmatpush1.msra.mxu0 0.0
      %1444 = vmatprep.subr.mxu0 0.0
      %1445 = vmatpush1.msra.mxu0 0.0
      %1446 = vmatprep.mubr.f32.mxu0 0.0
      %v1447 = vand.u32 %v1007, 4294901760
      %1448 = vmatmul.mubr.f32.gmra.mrb[0].mxu0 %v1447
      %v1449 = vpop.f32.mrb[0].mxu0
      %v1450 = vadd.f32 %v1359, %v1449
      %v1451 = vpop.f32.mrb[0].mxu0
      %1452 = vmatprep.mubr.f32.mxu0 0.0
      %v1453 = vand.u32 %v1010, 4294901760
      %1454 = vmatmul.mubr.f32.gmra.mrb[0].mxu0 %v1453
      %v1455 = vpop.f32.mrb[0].mxu0
      %v1456 = vadd.f32 %v1367, %v1455
      %v1457 = vpop.f32.mrb[0].mxu0
      %1458 = vdwg.mxu0
      %1459 = vmatprep.subr.mxu0 0.0
      %v1460 = vand.u32 %v1002, 4294901760
      %1461 = vmatpush1.msra.mxu0 %v1460
      %1462 = vmatprep.subr.mxu0 0.0
      %v1463 = vand.u32 %v1003, 4294901760
      %1464 = vmatpush1.msra.mxu0 %v1463
      %1465 = vmatprep.subr.mxu0 0.0
      %v1466 = vand.u32 %v1004, 4294901760
      %1467 = vmatpush1.msra.mxu0 %v1466
      %1468 = vmatprep.subr.mxu0 0.0
      %v1469 = vand.u32 %v1005, 4294901760
      %1470 = vmatpush1.msra.mxu0 %v1469
      %1471 = vmatprep.subr.mxu0 0.0
      %1472 = vmatpush1.msra.mxu0 0.0
      %1473 = vmatprep.subr.mxu0 0.0
      %1474 = vmatpush1.msra.mxu0 0.0
      %1475 = vmatprep.subr.mxu0 0.0
      %1476 = vmatpush1.msra.mxu0 0.0
      %1477 = vmatprep.subr.mxu0 0.0
      %1478 = vmatpush1.msra.mxu0 0.0
      %1479 = vmatprep.subr.mxu0 0.0
      %1480 = vmatpush1.msra.mxu0 0.0
      %1481 = vmatprep.subr.mxu0 0.0
      %1482 = vmatpush1.msra.mxu0 0.0
      %1483 = vmatprep.subr.mxu0 0.0
      %1484 = vmatpush1.msra.mxu0 0.0
      %1485 = vmatprep.subr.mxu0 0.0
      %1486 = vmatpush1.msra.mxu0 0.0
      %1487 = vmatprep.subr.mxu0 0.0
      %1488 = vmatpush1.msra.mxu0 0.0
      %1489 = vmatprep.subr.mxu0 0.0
      %1490 = vmatpush1.msra.mxu0 0.0
      %1491 = vmatprep.subr.mxu0 0.0
      %1492 = vmatpush1.msra.mxu0 0.0
      %1493 = vmatprep.subr.mxu0 0.0
      %1494 = vmatpush1.msra.mxu0 0.0
      %1495 = vmatprep.subr.mxu0 0.0
      %1496 = vmatpush1.msra.mxu0 0.0
      %1497 = vmatprep.subr.mxu0 0.0
      %1498 = vmatpush1.msra.mxu0 0.0
      %1499 = vmatprep.subr.mxu0 0.0
      %1500 = vmatpush1.msra.mxu0 0.0
      %1501 = vmatprep.subr.mxu0 0.0
      %1502 = vmatpush1.msra.mxu0 0.0
      %1503 = vmatprep.subr.mxu0 0.0
      %1504 = vmatpush1.msra.mxu0 0.0
      %1505 = vmatprep.subr.mxu0 0.0
      %1506 = vmatpush1.msra.mxu0 0.0
      %1507 = vmatprep.subr.mxu0 0.0
      %1508 = vmatpush1.msra.mxu0 0.0
      %1509 = vmatprep.subr.mxu0 0.0
      %1510 = vmatpush1.msra.mxu0 0.0
      %1511 = vmatprep.subr.mxu0 0.0
      %1512 = vmatpush1.msra.mxu0 0.0
      %1513 = vmatprep.subr.mxu0 0.0
      %1514 = vmatpush1.msra.mxu0 0.0
      %1515 = vmatprep.subr.mxu0 0.0
      %1516 = vmatpush1.msra.mxu0 0.0
      %1517 = vmatprep.subr.mxu0 0.0
      %1518 = vmatpush1.msra.mxu0 0.0
      %1519 = vmatprep.subr.mxu0 0.0
      %1520 = vmatpush1.msra.mxu0 0.0
      %1521 = vmatprep.subr.mxu0 0.0
      %1522 = vmatpush1.msra.mxu0 0.0
      %1523 = vmatprep.subr.mxu0 0.0
      %1524 = vmatpush1.msra.mxu0 0.0
      %1525 = vmatprep.subr.mxu0 0.0
      %1526 = vmatpush1.msra.mxu0 0.0
      %1527 = vmatprep.mubr.f32.mxu0 0.0
      %v1528 = vand.u32 %v1007, 4294901760
      %1529 = vmatmul.mubr.f32.gmra.mrb[0].mxu0 %v1528
      %v1530 = vpop.f32.mrb[0].mxu0
      %v1531 = vadd.f32 %v1450, %v1530
      %v1532 = vpop.f32.mrb[0].mxu0
      %1533 = vmatprep.mubr.f32.mxu0 0.0
      %v1534 = vand.u32 %v1010, 4294901760
      %1535 = vmatmul.mubr.f32.gmra.mrb[0].mxu0 %v1534
      %v1536 = vpop.f32.mrb[0].mxu0
      %v1537 = vadd.f32 %v1456, %v1536
      %v1538 = vpop.f32.mrb[0].mxu0
      %1539 = vdwg.mxu0
      %v1540 = vmul.f32 %v1000, %v1531
      %v1541 = vmul.f32 %v1001, %v1537
      %v1543 = vsel %vm842, %v990, 0
      %v1546 = vsel %vm842, %v991, 0
      %1548 = vmatprep.subr.mxu0 0.0
      %v1549 = vand.u32 %v1540, 4294901760
      %1550 = vmatpush1.msra.mxu0 %v1549
      %1551 = vmatprep.subr.mxu0 0.0
      %v1552 = vand.u32 %v1541, 4294901760
      %1553 = vmatpush1.msra.mxu0 %v1552
      %1554 = vmatprep.subr.mxu0 0.0
      %1555 = vmatpush1.msra.mxu0 0.0
      %1556 = vmatprep.subr.mxu0 0.0
      %1557 = vmatpush1.msra.mxu0 0.0
      %1558 = vmatprep.subr.mxu0 0.0
      %1559 = vmatpush1.msra.mxu0 0.0
      %1560 = vmatprep.subr.mxu0 0.0
      %1561 = vmatpush1.msra.mxu0 0.0
      %1562 = vmatprep.subr.mxu0 0.0
      %1563 = vmatpush1.msra.mxu0 0.0
      %1564 = vmatprep.subr.mxu0 0.0
      %1565 = vmatpush1.msra.mxu0 0.0
      %1566 = vmatprep.subr.mxu0 0.0
      %1567 = vmatpush1.msra.mxu0 0.0
      %1568 = vmatprep.subr.mxu0 0.0
      %1569 = vmatpush1.msra.mxu0 0.0
      %1570 = vmatprep.subr.mxu0 0.0
      %1571 = vmatpush1.msra.mxu0 0.0
      %1572 = vmatprep.subr.mxu0 0.0
      %1573 = vmatpush1.msra.mxu0 0.0
      %1574 = vmatprep.subr.mxu0 0.0
      %1575 = vmatpush1.msra.mxu0 0.0
      %1576 = vmatprep.subr.mxu0 0.0
      %1577 = vmatpush1.msra.mxu0 0.0
      %1578 = vmatprep.subr.mxu0 0.0
      %1579 = vmatpush1.msra.mxu0 0.0
      %1580 = vmatprep.subr.mxu0 0.0
      %1581 = vmatpush1.msra.mxu0 0.0
      %1582 = vmatprep.subr.mxu0 0.0
      %1583 = vmatpush1.msra.mxu0 0.0
      %1584 = vmatprep.subr.mxu0 0.0
      %1585 = vmatpush1.msra.mxu0 0.0
      %1586 = vmatprep.subr.mxu0 0.0
      %1587 = vmatpush1.msra.mxu0 0.0
      %1588 = vmatprep.subr.mxu0 0.0
      %1589 = vmatpush1.msra.mxu0 0.0
      %1590 = vmatprep.subr.mxu0 0.0
      %1591 = vmatpush1.msra.mxu0 0.0
      %1592 = vmatprep.subr.mxu0 0.0
      %1593 = vmatpush1.msra.mxu0 0.0
      %1594 = vmatprep.subr.mxu0 0.0
      %1595 = vmatpush1.msra.mxu0 0.0
      %1596 = vmatprep.subr.mxu0 0.0
      %1597 = vmatpush1.msra.mxu0 0.0
      %1598 = vmatprep.subr.mxu0 0.0
      %1599 = vmatpush1.msra.mxu0 0.0
      %1600 = vmatprep.subr.mxu0 0.0
      %1601 = vmatpush1.msra.mxu0 0.0
      %1602 = vmatprep.subr.mxu0 0.0
      %1603 = vmatpush1.msra.mxu0 0.0
      %1604 = vmatprep.subr.mxu0 0.0
      %1605 = vmatpush1.msra.mxu0 0.0
      %1606 = vmatprep.subr.mxu0 0.0
      %1607 = vmatpush1.msra.mxu0 0.0
      %1608 = vmatprep.subr.mxu0 0.0
      %1609 = vmatpush1.msra.mxu0 0.0
      %1610 = vmatprep.subr.mxu0 0.0
      %1611 = vmatpush1.msra.mxu0 0.0
      %1612 = vmatprep.subr.mxu0 0.0
      %1613 = vmatpush1.msra.mxu0 0.0
      %1614 = vmatprep.mubr.f32.mxu0 0.0
      %v1615 = vand.u32 %v1543, 4294901760
      %v1616 = vsub.f32 %v1543, %v1615
      %v1617 = vand.u32 %v1616, 4294901760
      %v1618 = vsub.f32 %v1616, %v1617
      %v1619 = vand.u32 %v1618, 4294901760
      %1620 = vmatmul.mubr.f32.gmra.mrb[0].mxu0 %v1619
      %v1621 = vpop.f32.mrb[0].mxu0
      %v1622 = vadd.f32 0.0, %v1621
      %v1623 = vpop.f32.mrb[0].mxu0
      %1624 = vmatprep.mubr.f32.mxu0 0.0
      %v1625 = vand.u32 %v1546, 4294901760
      %v1626 = vsub.f32 %v1546, %v1625
      %v1627 = vand.u32 %v1626, 4294901760
      %v1628 = vsub.f32 %v1626, %v1627
      %v1629 = vand.u32 %v1628, 4294901760
      %1630 = vmatmul.mubr.f32.gmra.mrb[0].mxu0 %v1629
      %v1631 = vpop.f32.mrb[0].mxu0
      %v1632 = vadd.f32 0.0, %v1631
      %v1633 = vpop.f32.mrb[0].mxu0
      %1634 = vdwg.mxu0
      %1635 = vmatprep.subr.mxu0 0.0
      %v1636 = vand.u32 %v1540, 4294901760
      %v1637 = vsub.f32 %v1540, %v1636
      %v1638 = vand.u32 %v1637, 4294901760
      %v1639 = vsub.f32 %v1637, %v1638
      %v1640 = vand.u32 %v1639, 4294901760
      %1641 = vmatpush1.msra.mxu0 %v1640
      %1642 = vmatprep.subr.mxu0 0.0
      %v1643 = vand.u32 %v1541, 4294901760
      %v1644 = vsub.f32 %v1541, %v1643
      %v1645 = vand.u32 %v1644, 4294901760
      %v1646 = vsub.f32 %v1644, %v1645
      %v1647 = vand.u32 %v1646, 4294901760
      %1648 = vmatpush1.msra.mxu0 %v1647
      %1649 = vmatprep.subr.mxu0 0.0
      %1650 = vmatpush1.msra.mxu0 0.0
      %1651 = vmatprep.subr.mxu0 0.0
      %1652 = vmatpush1.msra.mxu0 0.0
      %1653 = vmatprep.subr.mxu0 0.0
      %1654 = vmatpush1.msra.mxu0 0.0
      %1655 = vmatprep.subr.mxu0 0.0
      %1656 = vmatpush1.msra.mxu0 0.0
      %1657 = vmatprep.subr.mxu0 0.0
      %1658 = vmatpush1.msra.mxu0 0.0
      %1659 = vmatprep.subr.mxu0 0.0
      %1660 = vmatpush1.msra.mxu0 0.0
      %1661 = vmatprep.subr.mxu0 0.0
      %1662 = vmatpush1.msra.mxu0 0.0
      %1663 = vmatprep.subr.mxu0 0.0
      %1664 = vmatpush1.msra.mxu0 0.0
      %1665 = vmatprep.subr.mxu0 0.0
      %1666 = vmatpush1.msra.mxu0 0.0
      %1667 = vmatprep.subr.mxu0 0.0
      %1668 = vmatpush1.msra.mxu0 0.0
      %1669 = vmatprep.subr.mxu0 0.0
      %1670 = vmatpush1.msra.mxu0 0.0
      %1671 = vmatprep.subr.mxu0 0.0
      %1672 = vmatpush1.msra.mxu0 0.0
      %1673 = vmatprep.subr.mxu0 0.0
      %1674 = vmatpush1.msra.mxu0 0.0
      %1675 = vmatprep.subr.mxu0 0.0
      %1676 = vmatpush1.msra.mxu0 0.0
      %1677 = vmatprep.subr.mxu0 0.0
      %1678 = vmatpush1.msra.mxu0 0.0
      %1679 = vmatprep.subr.mxu0 0.0
      %1680 = vmatpush1.msra.mxu0 0.0
      %1681 = vmatprep.subr.mxu0 0.0
      %1682 = vmatpush1.msra.mxu0 0.0
      %1683 = vmatprep.subr.mxu0 0.0
      %1684 = vmatpush1.msra.mxu0 0.0
      %1685 = vmatprep.subr.mxu0 0.0
      %1686 = vmatpush1.msra.mxu0 0.0
      %1687 = vmatprep.subr.mxu0 0.0
      %1688 = vmatpush1.msra.mxu0 0.0
      %1689 = vmatprep.subr.mxu0 0.0
      %1690 = vmatpush1.msra.mxu0 0.0
      %1691 = vmatprep.subr.mxu0 0.0
      %1692 = vmatpush1.msra.mxu0 0.0
      %1693 = vmatprep.subr.mxu0 0.0
      %1694 = vmatpush1.msra.mxu0 0.0
      %1695 = vmatprep.subr.mxu0 0.0
      %1696 = vmatpush1.msra.mxu0 0.0
      %1697 = vmatprep.subr.mxu0 0.0
      %1698 = vmatpush1.msra.mxu0 0.0
      %1699 = vmatprep.subr.mxu0 0.0
      %1700 = vmatpush1.msra.mxu0 0.0
      %1701 = vmatprep.subr.mxu0 0.0
      %1702 = vmatpush1.msra.mxu0 0.0
      %1703 = vmatprep.subr.mxu0 0.0
      %1704 = vmatpush1.msra.mxu0 0.0
      %1705 = vmatprep.subr.mxu0 0.0
      %1706 = vmatpush1.msra.mxu0 0.0
      %1707 = vmatprep.subr.mxu0 0.0
      %1708 = vmatpush1.msra.mxu0 0.0
      %1709 = vmatprep.mubr.f32.mxu0 0.0
      %v1710 = vand.u32 %v1543, 4294901760
      %1711 = vmatmul.mubr.f32.gmra.mrb[0].mxu0 %v1710
      %v1712 = vpop.f32.mrb[0].mxu0
      %v1713 = vadd.f32 %v1622, %v1712
      %v1714 = vpop.f32.mrb[0].mxu0
      %1715 = vmatprep.mubr.f32.mxu0 0.0
      %v1716 = vand.u32 %v1546, 4294901760
      %1717 = vmatmul.mubr.f32.gmra.mrb[0].mxu0 %v1716
      %v1718 = vpop.f32.mrb[0].mxu0
      %v1719 = vadd.f32 %v1632, %v1718
      %v1720 = vpop.f32.mrb[0].mxu0
      %1721 = vdwg.mxu0
      %1722 = vmatprep.subr.mxu0 0.0
      %v1723 = vand.u32 %v1540, 4294901760
      %v1724 = vsub.f32 %v1540, %v1723
      %1725 = vmatpush1.msra.mxu0 %v1724
      %1726 = vmatprep.subr.mxu0 0.0
      %v1727 = vand.u32 %v1541, 4294901760
      %v1728 = vsub.f32 %v1541, %v1727
      %1729 = vmatpush1.msra.mxu0 %v1728
      %1730 = vmatprep.subr.mxu0 0.0
      %1731 = vmatpush1.msra.mxu0 0.0
      %1732 = vmatprep.subr.mxu0 0.0
      %1733 = vmatpush1.msra.mxu0 0.0
      %1734 = vmatprep.subr.mxu0 0.0
      %1735 = vmatpush1.msra.mxu0 0.0
      %1736 = vmatprep.subr.mxu0 0.0
      %1737 = vmatpush1.msra.mxu0 0.0
      %1738 = vmatprep.subr.mxu0 0.0
      %1739 = vmatpush1.msra.mxu0 0.0
      %1740 = vmatprep.subr.mxu0 0.0
      %1741 = vmatpush1.msra.mxu0 0.0
      %1742 = vmatprep.subr.mxu0 0.0
      %1743 = vmatpush1.msra.mxu0 0.0
      %1744 = vmatprep.subr.mxu0 0.0
      %1745 = vmatpush1.msra.mxu0 0.0
      %1746 = vmatprep.subr.mxu0 0.0
      %1747 = vmatpush1.msra.mxu0 0.0
      %1748 = vmatprep.subr.mxu0 0.0
      %1749 = vmatpush1.msra.mxu0 0.0
      %1750 = vmatprep.subr.mxu0 0.0
      %1751 = vmatpush1.msra.mxu0 0.0
      %1752 = vmatprep.subr.mxu0 0.0
      %1753 = vmatpush1.msra.mxu0 0.0
      %1754 = vmatprep.subr.mxu0 0.0
      %1755 = vmatpush1.msra.mxu0 0.0
      %1756 = vmatprep.subr.mxu0 0.0
      %1757 = vmatpush1.msra.mxu0 0.0
      %1758 = vmatprep.subr.mxu0 0.0
      %1759 = vmatpush1.msra.mxu0 0.0
      %1760 = vmatprep.subr.mxu0 0.0
      %1761 = vmatpush1.msra.mxu0 0.0
      %1762 = vmatprep.subr.mxu0 0.0
      %1763 = vmatpush1.msra.mxu0 0.0
      %1764 = vmatprep.subr.mxu0 0.0
      %1765 = vmatpush1.msra.mxu0 0.0
      %1766 = vmatprep.subr.mxu0 0.0
      %1767 = vmatpush1.msra.mxu0 0.0
      %1768 = vmatprep.subr.mxu0 0.0
      %1769 = vmatpush1.msra.mxu0 0.0
      %1770 = vmatprep.subr.mxu0 0.0
      %1771 = vmatpush1.msra.mxu0 0.0
      %1772 = vmatprep.subr.mxu0 0.0
      %1773 = vmatpush1.msra.mxu0 0.0
      %1774 = vmatprep.subr.mxu0 0.0
      %1775 = vmatpush1.msra.mxu0 0.0
      %1776 = vmatprep.subr.mxu0 0.0
      %1777 = vmatpush1.msra.mxu0 0.0
      %1778 = vmatprep.subr.mxu0 0.0
      %1779 = vmatpush1.msra.mxu0 0.0
      %1780 = vmatprep.subr.mxu0 0.0
      %1781 = vmatpush1.msra.mxu0 0.0
      %1782 = vmatprep.subr.mxu0 0.0
      %1783 = vmatpush1.msra.mxu0 0.0
      %1784 = vmatprep.subr.mxu0 0.0
      %1785 = vmatpush1.msra.mxu0 0.0
      %1786 = vmatprep.subr.mxu0 0.0
      %1787 = vmatpush1.msra.mxu0 0.0
      %1788 = vmatprep.subr.mxu0 0.0
      %1789 = vmatpush1.msra.mxu0 0.0
      %1790 = vmatprep.mubr.f32.mxu0 0.0
      %v1791 = vand.u32 %v1543, 4294901760
      %v1792 = vsub.f32 %v1543, %v1791
      %1793 = vmatmul.mubr.f32.gmra.mrb[0].mxu0 %v1792
      %v1794 = vpop.f32.mrb[0].mxu0
      %v1795 = vadd.f32 %v1713, %v1794
      %v1796 = vpop.f32.mrb[0].mxu0
      %1797 = vmatprep.mubr.f32.mxu0 0.0
      %v1798 = vand.u32 %v1546, 4294901760
      %v1799 = vsub.f32 %v1546, %v1798
      %1800 = vmatmul.mubr.f32.gmra.mrb[0].mxu0 %v1799
      %v1801 = vpop.f32.mrb[0].mxu0
      %v1802 = vadd.f32 %v1719, %v1801
      %v1803 = vpop.f32.mrb[0].mxu0
      %1804 = vdwg.mxu0
      %1805 = vmatprep.subr.mxu0 0.0
      %v1806 = vand.u32 %v1540, 4294901760
      %1807 = vmatpush1.msra.mxu0 %v1806
      %1808 = vmatprep.subr.mxu0 0.0
      %v1809 = vand.u32 %v1541, 4294901760
      %1810 = vmatpush1.msra.mxu0 %v1809
      %1811 = vmatprep.subr.mxu0 0.0
      %1812 = vmatpush1.msra.mxu0 0.0
      %1813 = vmatprep.subr.mxu0 0.0
      %1814 = vmatpush1.msra.mxu0 0.0
      %1815 = vmatprep.subr.mxu0 0.0
      %1816 = vmatpush1.msra.mxu0 0.0
      %1817 = vmatprep.subr.mxu0 0.0
      %1818 = vmatpush1.msra.mxu0 0.0
      %1819 = vmatprep.subr.mxu0 0.0
      %1820 = vmatpush1.msra.mxu0 0.0
      %1821 = vmatprep.subr.mxu0 0.0
      %1822 = vmatpush1.msra.mxu0 0.0
      %1823 = vmatprep.subr.mxu0 0.0
      %1824 = vmatpush1.msra.mxu0 0.0
      %1825 = vmatprep.subr.mxu0 0.0
      %1826 = vmatpush1.msra.mxu0 0.0
      %1827 = vmatprep.subr.mxu0 0.0
      %1828 = vmatpush1.msra.mxu0 0.0
      %1829 = vmatprep.subr.mxu0 0.0
      %1830 = vmatpush1.msra.mxu0 0.0
      %1831 = vmatprep.subr.mxu0 0.0
      %1832 = vmatpush1.msra.mxu0 0.0
      %1833 = vmatprep.subr.mxu0 0.0
      %1834 = vmatpush1.msra.mxu0 0.0
      %1835 = vmatprep.subr.mxu0 0.0
      %1836 = vmatpush1.msra.mxu0 0.0
      %1837 = vmatprep.subr.mxu0 0.0
      %1838 = vmatpush1.msra.mxu0 0.0
      %1839 = vmatprep.subr.mxu0 0.0
      %1840 = vmatpush1.msra.mxu0 0.0
      %1841 = vmatprep.subr.mxu0 0.0
      %1842 = vmatpush1.msra.mxu0 0.0
      %1843 = vmatprep.subr.mxu0 0.0
      %1844 = vmatpush1.msra.mxu0 0.0
      %1845 = vmatprep.subr.mxu0 0.0
      %1846 = vmatpush1.msra.mxu0 0.0
      %1847 = vmatprep.subr.mxu0 0.0
      %1848 = vmatpush1.msra.mxu0 0.0
      %1849 = vmatprep.subr.mxu0 0.0
      %1850 = vmatpush1.msra.mxu0 0.0
      %1851 = vmatprep.subr.mxu0 0.0
      %1852 = vmatpush1.msra.mxu0 0.0
      %1853 = vmatprep.subr.mxu0 0.0
      %1854 = vmatpush1.msra.mxu0 0.0
      %1855 = vmatprep.subr.mxu0 0.0
      %1856 = vmatpush1.msra.mxu0 0.0
      %1857 = vmatprep.subr.mxu0 0.0
      %1858 = vmatpush1.msra.mxu0 0.0
      %1859 = vmatprep.subr.mxu0 0.0
      %1860 = vmatpush1.msra.mxu0 0.0
      %1861 = vmatprep.subr.mxu0 0.0
      %1862 = vmatpush1.msra.mxu0 0.0
      %1863 = vmatprep.subr.mxu0 0.0
      %1864 = vmatpush1.msra.mxu0 0.0
      %1865 = vmatprep.subr.mxu0 0.0
      %1866 = vmatpush1.msra.mxu0 0.0
      %1867 = vmatprep.subr.mxu0 0.0
      %1868 = vmatpush1.msra.mxu0 0.0
      %1869 = vmatprep.subr.mxu0 0.0
      %1870 = vmatpush1.msra.mxu0 0.0
      %1871 = vmatprep.mubr.f32.mxu0 0.0
      %v1872 = vand.u32 %v1543, 4294901760
      %v1873 = vsub.f32 %v1543, %v1872
      %v1874 = vand.u32 %v1873, 4294901760
      %1875 = vmatmul.mubr.f32.gmra.mrb[0].mxu0 %v1874
      %v1876 = vpop.f32.mrb[0].mxu0
      %v1877 = vadd.f32 %v1795, %v1876
      %v1878 = vpop.f32.mrb[0].mxu0
      %1879 = vmatprep.mubr.f32.mxu0 0.0
      %v1880 = vand.u32 %v1546, 4294901760
      %v1881 = vsub.f32 %v1546, %v1880
      %v1882 = vand.u32 %v1881, 4294901760
      %1883 = vmatmul.mubr.f32.gmra.mrb[0].mxu0 %v1882
      %v1884 = vpop.f32.mrb[0].mxu0
      %v1885 = vadd.f32 %v1802, %v1884
      %v1886 = vpop.f32.mrb[0].mxu0
      %1887 = vdwg.mxu0
      %1888 = vmatprep.subr.mxu0 0.0
      %v1889 = vand.u32 %v1540, 4294901760
      %v1890 = vsub.f32 %v1540, %v1889
      %v1891 = vand.u32 %v1890, 4294901760
      %1892 = vmatpush1.msra.mxu0 %v1891
      %1893 = vmatprep.subr.mxu0 0.0
      %v1894 = vand.u32 %v1541, 4294901760
      %v1895 = vsub.f32 %v1541, %v1894
      %v1896 = vand.u32 %v1895, 4294901760
      %1897 = vmatpush1.msra.mxu0 %v1896
      %1898 = vmatprep.subr.mxu0 0.0
      %1899 = vmatpush1.msra.mxu0 0.0
      %1900 = vmatprep.subr.mxu0 0.0
      %1901 = vmatpush1.msra.mxu0 0.0
      %1902 = vmatprep.subr.mxu0 0.0
      %1903 = vmatpush1.msra.mxu0 0.0
      %1904 = vmatprep.subr.mxu0 0.0
      %1905 = vmatpush1.msra.mxu0 0.0
      %1906 = vmatprep.subr.mxu0 0.0
      %1907 = vmatpush1.msra.mxu0 0.0
      %1908 = vmatprep.subr.mxu0 0.0
      %1909 = vmatpush1.msra.mxu0 0.0
      %1910 = vmatprep.subr.mxu0 0.0
      %1911 = vmatpush1.msra.mxu0 0.0
      %1912 = vmatprep.subr.mxu0 0.0
      %1913 = vmatpush1.msra.mxu0 0.0
      %1914 = vmatprep.subr.mxu0 0.0
      %1915 = vmatpush1.msra.mxu0 0.0
      %1916 = vmatprep.subr.mxu0 0.0
      %1917 = vmatpush1.msra.mxu0 0.0
      %1918 = vmatprep.subr.mxu0 0.0
      %1919 = vmatpush1.msra.mxu0 0.0
      %1920 = vmatprep.subr.mxu0 0.0
      %1921 = vmatpush1.msra.mxu0 0.0
      %1922 = vmatprep.subr.mxu0 0.0
      %1923 = vmatpush1.msra.mxu0 0.0
      %1924 = vmatprep.subr.mxu0 0.0
      %1925 = vmatpush1.msra.mxu0 0.0
      %1926 = vmatprep.subr.mxu0 0.0
      %1927 = vmatpush1.msra.mxu0 0.0
      %1928 = vmatprep.subr.mxu0 0.0
      %1929 = vmatpush1.msra.mxu0 0.0
      %1930 = vmatprep.subr.mxu0 0.0
      %1931 = vmatpush1.msra.mxu0 0.0
      %1932 = vmatprep.subr.mxu0 0.0
      %1933 = vmatpush1.msra.mxu0 0.0
      %1934 = vmatprep.subr.mxu0 0.0
      %1935 = vmatpush1.msra.mxu0 0.0
      %1936 = vmatprep.subr.mxu0 0.0
      %1937 = vmatpush1.msra.mxu0 0.0
      %1938 = vmatprep.subr.mxu0 0.0
      %1939 = vmatpush1.msra.mxu0 0.0
      %1940 = vmatprep.subr.mxu0 0.0
      %1941 = vmatpush1.msra.mxu0 0.0
      %1942 = vmatprep.subr.mxu0 0.0
      %1943 = vmatpush1.msra.mxu0 0.0
      %1944 = vmatprep.subr.mxu0 0.0
      %1945 = vmatpush1.msra.mxu0 0.0
      %1946 = vmatprep.subr.mxu0 0.0
      %1947 = vmatpush1.msra.mxu0 0.0
      %1948 = vmatprep.subr.mxu0 0.0
      %1949 = vmatpush1.msra.mxu0 0.0
      %1950 = vmatprep.subr.mxu0 0.0
      %1951 = vmatpush1.msra.mxu0 0.0
      %1952 = vmatprep.subr.mxu0 0.0
      %1953 = vmatpush1.msra.mxu0 0.0
      %1954 = vmatprep.subr.mxu0 0.0
      %1955 = vmatpush1.msra.mxu0 0.0
      %1956 = vmatprep.subr.mxu0 0.0
      %1957 = vmatpush1.msra.mxu0 0.0
      %1958 = vmatprep.mubr.f32.mxu0 0.0
      %v1959 = vand.u32 %v1543, 4294901760
      %1960 = vmatmul.mubr.f32.gmra.mrb[0].mxu0 %v1959
      %v1961 = vpop.f32.mrb[0].mxu0
      %v1962 = vadd.f32 %v1877, %v1961
      %v1963 = vpop.f32.mrb[0].mxu0
      %1964 = vmatprep.mubr.f32.mxu0 0.0
      %v1965 = vand.u32 %v1546, 4294901760
      %1966 = vmatmul.mubr.f32.gmra.mrb[0].mxu0 %v1965
      %v1967 = vpop.f32.mrb[0].mxu0
      %v1968 = vadd.f32 %v1885, %v1967
      %v1969 = vpop.f32.mrb[0].mxu0
      %1970 = vdwg.mxu0
      %1971 = vmatprep.subr.mxu0 0.0
      %v1972 = vand.u32 %v1540, 4294901760
      %1973 = vmatpush1.msra.mxu0 %v1972
      %1974 = vmatprep.subr.mxu0 0.0
      %v1975 = vand.u32 %v1541, 4294901760
      %1976 = vmatpush1.msra.mxu0 %v1975
      %1977 = vmatprep.subr.mxu0 0.0
      %1978 = vmatpush1.msra.mxu0 0.0
      %1979 = vmatprep.subr.mxu0 0.0
      %1980 = vmatpush1.msra.mxu0 0.0
      %1981 = vmatprep.subr.mxu0 0.0
      %1982 = vmatpush1.msra.mxu0 0.0
      %1983 = vmatprep.subr.mxu0 0.0
      %1984 = vmatpush1.msra.mxu0 0.0
      %1985 = vmatprep.subr.mxu0 0.0
      %1986 = vmatpush1.msra.mxu0 0.0
      %1987 = vmatprep.subr.mxu0 0.0
      %1988 = vmatpush1.msra.mxu0 0.0
      %1989 = vmatprep.subr.mxu0 0.0
      %1990 = vmatpush1.msra.mxu0 0.0
      %1991 = vmatprep.subr.mxu0 0.0
      %1992 = vmatpush1.msra.mxu0 0.0
      %1993 = vmatprep.subr.mxu0 0.0
      %1994 = vmatpush1.msra.mxu0 0.0
      %1995 = vmatprep.subr.mxu0 0.0
      %1996 = vmatpush1.msra.mxu0 0.0
      %1997 = vmatprep.subr.mxu0 0.0
      %1998 = vmatpush1.msra.mxu0 0.0
      %1999 = vmatprep.subr.mxu0 0.0
      %2000 = vmatpush1.msra.mxu0 0.0
      %2001 = vmatprep.subr.mxu0 0.0
      %2002 = vmatpush1.msra.mxu0 0.0
      %2003 = vmatprep.subr.mxu0 0.0
      %2004 = vmatpush1.msra.mxu0 0.0
      %2005 = vmatprep.subr.mxu0 0.0
      %2006 = vmatpush1.msra.mxu0 0.0
      %2007 = vmatprep.subr.mxu0 0.0
      %2008 = vmatpush1.msra.mxu0 0.0
      %2009 = vmatprep.subr.mxu0 0.0
      %2010 = vmatpush1.msra.mxu0 0.0
      %2011 = vmatprep.subr.mxu0 0.0
      %2012 = vmatpush1.msra.mxu0 0.0
      %2013 = vmatprep.subr.mxu0 0.0
      %2014 = vmatpush1.msra.mxu0 0.0
      %2015 = vmatprep.subr.mxu0 0.0
      %2016 = vmatpush1.msra.mxu0 0.0
      %2017 = vmatprep.subr.mxu0 0.0
      %2018 = vmatpush1.msra.mxu0 0.0
      %2019 = vmatprep.subr.mxu0 0.0
      %2020 = vmatpush1.msra.mxu0 0.0
      %2021 = vmatprep.subr.mxu0 0.0
      %2022 = vmatpush1.msra.mxu0 0.0
      %2023 = vmatprep.subr.mxu0 0.0
      %2024 = vmatpush1.msra.mxu0 0.0
      %2025 = vmatprep.subr.mxu0 0.0
      %2026 = vmatpush1.msra.mxu0 0.0
      %2027 = vmatprep.subr.mxu0 0.0
      %2028 = vmatpush1.msra.mxu0 0.0
      %2029 = vmatprep.subr.mxu0 0.0
      %2030 = vmatpush1.msra.mxu0 0.0
      %2031 = vmatprep.subr.mxu0 0.0
      %2032 = vmatpush1.msra.mxu0 0.0
      %2033 = vmatprep.subr.mxu0 0.0
      %2034 = vmatpush1.msra.mxu0 0.0
      %2035 = vmatprep.subr.mxu0 0.0
      %2036 = vmatpush1.msra.mxu0 0.0
      %2037 = vmatprep.mubr.f32.mxu0 0.0
      %v2038 = vand.u32 %v1543, 4294901760
      %2039 = vmatmul.mubr.f32.gmra.mrb[0].mxu0 %v2038
      %v2040 = vpop.f32.mrb[0].mxu0
      %v2041 = vadd.f32 %v1962, %v2040
      %v2042 = vpop.f32.mrb[0].mxu0
      %2043 = vmatprep.mubr.f32.mxu0 0.0
      %v2044 = vand.u32 %v1546, 4294901760
      %2045 = vmatmul.mubr.f32.gmra.mrb[0].mxu0 %v2044
      %v2046 = vpop.f32.mrb[0].mxu0
      %v2047 = vadd.f32 %v1968, %v2046
      %v2048 = vpop.f32.mrb[0].mxu0
      %2049 = vdwg.mxu0
      %v2050 = vmul.f32 %v1000, %v2041
      %v2051 = vmul.f32 %v1001, %v2047
      %v2052 = vld [vmem:[%s3] sm:$0x1]
      %v2053 = vld [vmem:[%s4] sm:$0x1]
      %v2054 = vadd.f32 %v2050, %v2051
      %v2055 = vrot.slane %v2054, 4
      %v2056 = vadd.f32 %v2054, %v2055
      %v2057 = vrot.slane %v2056, 2
      %v2058 = vadd.f32 %v2056, %v2057
      %v2059 = vrot.slane %v2058, 1
      %v2060 = vadd.f32 %v2058, %v2059
      %v2061 = vrcp.pop 16.0
      %v2062 = vmul.f32 %v2060, %v2061
      %v2063 = vsub.f32 %v2050, %v2062
      %v2064 = vsub.f32 %v2051, %v2062
      %v2065 = vmul.f32 %v2063, %v2063
      %v2066 = vmul.f32 %v2064, %v2064
      %v2067 = vadd.f32 %v2065, %v2066
      %v2068 = vrot.slane %v2067, 4
      %v2069 = vadd.f32 %v2067, %v2068
      %v2070 = vrot.slane %v2069, 2
      %v2071 = vadd.f32 %v2069, %v2070
      %v2072 = vrot.slane %v2071, 1
      %v2073 = vadd.f32 %v2071, %v2072
      %v2074 = vmul.f32 %v2073, %v2061
      %v2075 = vadd.f32 %v2074, 1e-05
      %v2076 = vrsqrt.pop %v2075
      %v2077 = vmul.f32 %v2063, %v2076
      %v2078 = vmul.f32 %v2064, %v2076
      %v2080 = vlaneseq
      %v2081 = vshrl.u32 %v2080, 7
      %v2082 = vsub.s32 0, %v2081
      %v2083 = vrot.slane %v2052, %v2082
      %v2085 = vmul.f32 %v2077, %v2083
      %v2086 = vmul.f32 %v2078, %v2083
      %v2088 = vlaneseq
      %v2089 = vshrl.u32 %v2088, 7
      %v2090 = vsub.s32 0, %v2089
      %v2091 = vrot.slane %v2053, %v2090
      %v2093 = vadd.f32 %v2085, %v2091
      %v2094 = vadd.f32 %v2086, %v2091
      %v2095 = vtanh.pop %v2093
      %v2096 = vtanh.pop %v2094
      %v2097 = vld [vmem:[%s2] sm:$0xff]
      %v2098 = vld [vmem:[%s2 + $0x8] sm:$0xff]
      %v2099 = vld [vmem:[%s2 + $0x10] sm:$0xff]
      %v2100 = vld [vmem:[%s2 + $0x18] sm:$0xff]
      %v2101 = vld [vmem:[%s2 + $0x20] sm:$0xff]
      %v2102 = vld [vmem:[%s2 + $0x28] sm:$0xff]
      %v2103 = vld [vmem:[%s2 + $0x30] sm:$0xff]
      %v2104 = vld [vmem:[%s2 + $0x38] sm:$0xff]
      %v2105 = vld [vmem:[%s2 + $0x40] sm:$0xff]
      %v2106 = vld [vmem:[%s2 + $0x48] sm:$0xff]
      %v2107 = vld [vmem:[%s2 + $0x50] sm:$0xff]
      %v2108 = vld [vmem:[%s2 + $0x58] sm:$0xff]
      %v2109 = vld [vmem:[%s2 + $0x60] sm:$0xff]
      %v2110 = vld [vmem:[%s2 + $0x68] sm:$0xff]
      %v2111 = vld [vmem:[%s2 + $0x70] sm:$0xff]
      %v2112 = vld [vmem:[%s2 + $0x78] sm:$0xff]
      %2113 = vmatprep.subr.mxu0 0.0
      %v2114 = vand.u32 %v2097, 4294901760
      %2115 = vmatpush1.msra.mxu0 %v2114
      %2116 = vmatprep.subr.mxu0 0.0
      %v2117 = vand.u32 %v2098, 4294901760
      %2118 = vmatpush1.msra.mxu0 %v2117
      %2119 = vmatprep.subr.mxu0 0.0
      %v2120 = vand.u32 %v2099, 4294901760
      %2121 = vmatpush1.msra.mxu0 %v2120
      %2122 = vmatprep.subr.mxu0 0.0
      %v2123 = vand.u32 %v2100, 4294901760
      %2124 = vmatpush1.msra.mxu0 %v2123
      %2125 = vmatprep.subr.mxu0 0.0
      %v2126 = vand.u32 %v2101, 4294901760
      %2127 = vmatpush1.msra.mxu0 %v2126
      %2128 = vmatprep.subr.mxu0 0.0
      %v2129 = vand.u32 %v2102, 4294901760
      %2130 = vmatpush1.msra.mxu0 %v2129
      %2131 = vmatprep.subr.mxu0 0.0
      %v2132 = vand.u32 %v2103, 4294901760
      %2133 = vmatpush1.msra.mxu0 %v2132
      %2134 = vmatprep.subr.mxu0 0.0
      %v2135 = vand.u32 %v2104, 4294901760
      %2136 = vmatpush1.msra.mxu0 %v2135
      %2137 = vmatprep.subr.mxu0 0.0
      %v2138 = vand.u32 %v2105, 4294901760
      %2139 = vmatpush1.msra.mxu0 %v2138
      %2140 = vmatprep.subr.mxu0 0.0
      %v2141 = vand.u32 %v2106, 4294901760
      %2142 = vmatpush1.msra.mxu0 %v2141
      %2143 = vmatprep.subr.mxu0 0.0
      %v2144 = vand.u32 %v2107, 4294901760
      %2145 = vmatpush1.msra.mxu0 %v2144
      %2146 = vmatprep.subr.mxu0 0.0
      %v2147 = vand.u32 %v2108, 4294901760
      %2148 = vmatpush1.msra.mxu0 %v2147
      %2149 = vmatprep.subr.mxu0 0.0
      %v2150 = vand.u32 %v2109, 4294901760
      %2151 = vmatpush1.msra.mxu0 %v2150
      %2152 = vmatprep.subr.mxu0 0.0
      %v2153 = vand.u32 %v2110, 4294901760
      %2154 = vmatpush1.msra.mxu0 %v2153
      %2155 = vmatprep.subr.mxu0 0.0
      %v2156 = vand.u32 %v2111, 4294901760
      %2157 = vmatpush1.msra.mxu0 %v2156
      %2158 = vmatprep.subr.mxu0 0.0
      %v2159 = vand.u32 %v2112, 4294901760
      %2160 = vmatpush1.msra.mxu0 %v2159
      %2161 = vmatprep.subr.mxu0 0.0
      %2162 = vmatpush1.msra.mxu0 0.0
      %2163 = vmatprep.subr.mxu0 0.0
      %2164 = vmatpush1.msra.mxu0 0.0
      %2165 = vmatprep.subr.mxu0 0.0
      %2166 = vmatpush1.msra.mxu0 0.0
      %2167 = vmatprep.subr.mxu0 0.0
      %2168 = vmatpush1.msra.mxu0 0.0
      %2169 = vmatprep.subr.mxu0 0.0
      %2170 = vmatpush1.msra.mxu0 0.0
      %2171 = vmatprep.subr.mxu0 0.0
      %2172 = vmatpush1.msra.mxu0 0.0
      %2173 = vmatprep.subr.mxu0 0.0
      %2174 = vmatpush1.msra.mxu0 0.0
      %2175 = vmatprep.subr.mxu0 0.0
      %2176 = vmatpush1.msra.mxu0 0.0
      %2177 = vmatprep.subr.mxu0 0.0
      %2178 = vmatpush1.msra.mxu0 0.0
      %2179 = vmatprep.subr.mxu0 0.0
      %2180 = vmatpush1.msra.mxu0 0.0
      %2181 = vmatprep.subr.mxu0 0.0
      %2182 = vmatpush1.msra.mxu0 0.0
      %2183 = vmatprep.subr.mxu0 0.0
      %2184 = vmatpush1.msra.mxu0 0.0
      %2185 = vmatprep.subr.mxu0 0.0
      %2186 = vmatpush1.msra.mxu0 0.0
      %2187 = vmatprep.subr.mxu0 0.0
      %2188 = vmatpush1.msra.mxu0 0.0
      %2189 = vmatprep.subr.mxu0 0.0
      %2190 = vmatpush1.msra.mxu0 0.0
      %2191 = vmatprep.subr.mxu0 0.0
      %2192 = vmatpush1.msra.mxu0 0.0
      %2193 = vmatprep.mubr.f32.mxu0 0.0
      %v2194 = vand.u32 %v2095, 4294901760
      %v2195 = vsub.f32 %v2095, %v2194
      %v2196 = vand.u32 %v2195, 4294901760
      %v2197 = vsub.f32 %v2195, %v2196
      %v2198 = vand.u32 %v2197, 4294901760
      %2199 = vmatmul.mubr.f32.gmra.mrb[0].mxu0 %v2198
      %v2200 = vpop.f32.mrb[0].mxu0
      %v2201 = vadd.f32 0.0, %v2200
      %v2202 = vpop.f32.mrb[0].mxu0
      %2203 = vmatprep.mubr.f32.mxu0 0.0
      %v2204 = vand.u32 %v2096, 4294901760
      %v2205 = vsub.f32 %v2096, %v2204
      %v2206 = vand.u32 %v2205, 4294901760
      %v2207 = vsub.f32 %v2205, %v2206
      %v2208 = vand.u32 %v2207, 4294901760
      %2209 = vmatmul.mubr.f32.gmra.mrb[0].mxu0 %v2208
      %v2210 = vpop.f32.mrb[0].mxu0
      %v2211 = vadd.f32 0.0, %v2210
      %v2212 = vpop.f32.mrb[0].mxu0
      %2213 = vdwg.mxu0
      %2214 = vmatprep.subr.mxu0 0.0
      %v2215 = vand.u32 %v2097, 4294901760
      %v2216 = vsub.f32 %v2097, %v2215
      %v2217 = vand.u32 %v2216, 4294901760
      %v2218 = vsub.f32 %v2216, %v2217
      %v2219 = vand.u32 %v2218, 4294901760
      %2220 = vmatpush1.msra.mxu0 %v2219
      %2221 = vmatprep.subr.mxu0 0.0
      %v2222 = vand.u32 %v2098, 4294901760
      %v2223 = vsub.f32 %v2098, %v2222
      %v2224 = vand.u32 %v2223, 4294901760
      %v2225 = vsub.f32 %v2223, %v2224
      %v2226 = vand.u32 %v2225, 4294901760
      %2227 = vmatpush1.msra.mxu0 %v2226
      %2228 = vmatprep.subr.mxu0 0.0
      %v2229 = vand.u32 %v2099, 4294901760
      %v2230 = vsub.f32 %v2099, %v2229
      %v2231 = vand.u32 %v2230, 4294901760
      %v2232 = vsub.f32 %v2230, %v2231
      %v2233 = vand.u32 %v2232, 4294901760
      %2234 = vmatpush1.msra.mxu0 %v2233
      %2235 = vmatprep.subr.mxu0 0.0
      %v2236 = vand.u32 %v2100, 4294901760
      %v2237 = vsub.f32 %v2100, %v2236
      %v2238 = vand.u32 %v2237, 4294901760
      %v2239 = vsub.f32 %v2237, %v2238
      %v2240 = vand.u32 %v2239, 4294901760
      %2241 = vmatpush1.msra.mxu0 %v2240
      %2242 = vmatprep.subr.mxu0 0.0
      %v2243 = vand.u32 %v2101, 4294901760
      %v2244 = vsub.f32 %v2101, %v2243
      %v2245 = vand.u32 %v2244, 4294901760
      %v2246 = vsub.f32 %v2244, %v2245
      %v2247 = vand.u32 %v2246, 4294901760
      %2248 = vmatpush1.msra.mxu0 %v2247
      %2249 = vmatprep.subr.mxu0 0.0
      %v2250 = vand.u32 %v2102, 4294901760
      %v2251 = vsub.f32 %v2102, %v2250
      %v2252 = vand.u32 %v2251, 4294901760
      %v2253 = vsub.f32 %v2251, %v2252
      %v2254 = vand.u32 %v2253, 4294901760
      %2255 = vmatpush1.msra.mxu0 %v2254
      %2256 = vmatprep.subr.mxu0 0.0
      %v2257 = vand.u32 %v2103, 4294901760
      %v2258 = vsub.f32 %v2103, %v2257
      %v2259 = vand.u32 %v2258, 4294901760
      %v2260 = vsub.f32 %v2258, %v2259
      %v2261 = vand.u32 %v2260, 4294901760
      %2262 = vmatpush1.msra.mxu0 %v2261
      %2263 = vmatprep.subr.mxu0 0.0
      %v2264 = vand.u32 %v2104, 4294901760
      %v2265 = vsub.f32 %v2104, %v2264
      %v2266 = vand.u32 %v2265, 4294901760
      %v2267 = vsub.f32 %v2265, %v2266
      %v2268 = vand.u32 %v2267, 4294901760
      %2269 = vmatpush1.msra.mxu0 %v2268
      %2270 = vmatprep.subr.mxu0 0.0
      %v2271 = vand.u32 %v2105, 4294901760
      %v2272 = vsub.f32 %v2105, %v2271
      %v2273 = vand.u32 %v2272, 4294901760
      %v2274 = vsub.f32 %v2272, %v2273
      %v2275 = vand.u32 %v2274, 4294901760
      %2276 = vmatpush1.msra.mxu0 %v2275
      %2277 = vmatprep.subr.mxu0 0.0
      %v2278 = vand.u32 %v2106, 4294901760
      %v2279 = vsub.f32 %v2106, %v2278
      %v2280 = vand.u32 %v2279, 4294901760
      %v2281 = vsub.f32 %v2279, %v2280
      %v2282 = vand.u32 %v2281, 4294901760
      %2283 = vmatpush1.msra.mxu0 %v2282
      %2284 = vmatprep.subr.mxu0 0.0
      %v2285 = vand.u32 %v2107, 4294901760
      %v2286 = vsub.f32 %v2107, %v2285
      %v2287 = vand.u32 %v2286, 4294901760
      %v2288 = vsub.f32 %v2286, %v2287
      %v2289 = vand.u32 %v2288, 4294901760
      %2290 = vmatpush1.msra.mxu0 %v2289
      %2291 = vmatprep.subr.mxu0 0.0
      %v2292 = vand.u32 %v2108, 4294901760
      %v2293 = vsub.f32 %v2108, %v2292
      %v2294 = vand.u32 %v2293, 4294901760
      %v2295 = vsub.f32 %v2293, %v2294
      %v2296 = vand.u32 %v2295, 4294901760
      %2297 = vmatpush1.msra.mxu0 %v2296
      %2298 = vmatprep.subr.mxu0 0.0
      %v2299 = vand.u32 %v2109, 4294901760
      %v2300 = vsub.f32 %v2109, %v2299
      %v2301 = vand.u32 %v2300, 4294901760
      %v2302 = vsub.f32 %v2300, %v2301
      %v2303 = vand.u32 %v2302, 4294901760
      %2304 = vmatpush1.msra.mxu0 %v2303
      %2305 = vmatprep.subr.mxu0 0.0
      %v2306 = vand.u32 %v2110, 4294901760
      %v2307 = vsub.f32 %v2110, %v2306
      %v2308 = vand.u32 %v2307, 4294901760
      %v2309 = vsub.f32 %v2307, %v2308
      %v2310 = vand.u32 %v2309, 4294901760
      %2311 = vmatpush1.msra.mxu0 %v2310
      %2312 = vmatprep.subr.mxu0 0.0
      %v2313 = vand.u32 %v2111, 4294901760
      %v2314 = vsub.f32 %v2111, %v2313
      %v2315 = vand.u32 %v2314, 4294901760
      %v2316 = vsub.f32 %v2314, %v2315
      %v2317 = vand.u32 %v2316, 4294901760
      %2318 = vmatpush1.msra.mxu0 %v2317
      %2319 = vmatprep.subr.mxu0 0.0
      %v2320 = vand.u32 %v2112, 4294901760
      %v2321 = vsub.f32 %v2112, %v2320
      %v2322 = vand.u32 %v2321, 4294901760
      %v2323 = vsub.f32 %v2321, %v2322
      %v2324 = vand.u32 %v2323, 4294901760
      %2325 = vmatpush1.msra.mxu0 %v2324
      %2326 = vmatprep.subr.mxu0 0.0
      %2327 = vmatpush1.msra.mxu0 0.0
      %2328 = vmatprep.subr.mxu0 0.0
      %2329 = vmatpush1.msra.mxu0 0.0
      %2330 = vmatprep.subr.mxu0 0.0
      %2331 = vmatpush1.msra.mxu0 0.0
      %2332 = vmatprep.subr.mxu0 0.0
      %2333 = vmatpush1.msra.mxu0 0.0
      %2334 = vmatprep.subr.mxu0 0.0
      %2335 = vmatpush1.msra.mxu0 0.0
      %2336 = vmatprep.subr.mxu0 0.0
      %2337 = vmatpush1.msra.mxu0 0.0
      %2338 = vmatprep.subr.mxu0 0.0
      %2339 = vmatpush1.msra.mxu0 0.0
      %2340 = vmatprep.subr.mxu0 0.0
      %2341 = vmatpush1.msra.mxu0 0.0
      %2342 = vmatprep.subr.mxu0 0.0
      %2343 = vmatpush1.msra.mxu0 0.0
      %2344 = vmatprep.subr.mxu0 0.0
      %2345 = vmatpush1.msra.mxu0 0.0
      %2346 = vmatprep.subr.mxu0 0.0
      %2347 = vmatpush1.msra.mxu0 0.0
      %2348 = vmatprep.subr.mxu0 0.0
      %2349 = vmatpush1.msra.mxu0 0.0
      %2350 = vmatprep.subr.mxu0 0.0
      %2351 = vmatpush1.msra.mxu0 0.0
      %2352 = vmatprep.subr.mxu0 0.0
      %2353 = vmatpush1.msra.mxu0 0.0
      %2354 = vmatprep.subr.mxu0 0.0
      %2355 = vmatpush1.msra.mxu0 0.0
      %2356 = vmatprep.subr.mxu0 0.0
      %2357 = vmatpush1.msra.mxu0 0.0
      %2358 = vmatprep.mubr.f32.mxu0 0.0
      %v2359 = vand.u32 %v2095, 4294901760
      %2360 = vmatmul.mubr.f32.gmra.mrb[0].mxu0 %v2359
      %v2361 = vpop.f32.mrb[0].mxu0
      %v2362 = vadd.f32 %v2201, %v2361
      %v2363 = vpop.f32.mrb[0].mxu0
      %2364 = vmatprep.mubr.f32.mxu0 0.0
      %v2365 = vand.u32 %v2096, 4294901760
      %2366 = vmatmul.mubr.f32.gmra.mrb[0].mxu0 %v2365
      %v2367 = vpop.f32.mrb[0].mxu0
      %v2368 = vadd.f32 %v2211, %v2367
      %v2369 = vpop.f32.mrb[0].mxu0
      %2370 = vdwg.mxu0
      %2371 = vmatprep.subr.mxu0 0.0
      %v2372 = vand.u32 %v2097, 4294901760
      %v2373 = vsub.f32 %v2097, %v2372
      %2374 = vmatpush1.msra.mxu0 %v2373
      %2375 = vmatprep.subr.mxu0 0.0
      %v2376 = vand.u32 %v2098, 4294901760
      %v2377 = vsub.f32 %v2098, %v2376
      %2378 = vmatpush1.msra.mxu0 %v2377
      %2379 = vmatprep.subr.mxu0 0.0
      %v2380 = vand.u32 %v2099, 4294901760
      %v2381 = vsub.f32 %v2099, %v2380
      %2382 = vmatpush1.msra.mxu0 %v2381
      %2383 = vmatprep.subr.mxu0 0.0
      %v2384 = vand.u32 %v2100, 4294901760
      %v2385 = vsub.f32 %v2100, %v2384
      %2386 = vmatpush1.msra.mxu0 %v2385
      %2387 = vmatprep.subr.mxu0 0.0
      %v2388 = vand.u32 %v2101, 4294901760
      %v2389 = vsub.f32 %v2101, %v2388
      %2390 = vmatpush1.msra.mxu0 %v2389
      %2391 = vmatprep.subr.mxu0 0.0
      %v2392 = vand.u32 %v2102, 4294901760
      %v2393 = vsub.f32 %v2102, %v2392
      %2394 = vmatpush1.msra.mxu0 %v2393
      %2395 = vmatprep.subr.mxu0 0.0
      %v2396 = vand.u32 %v2103, 4294901760
      %v2397 = vsub.f32 %v2103, %v2396
      %2398 = vmatpush1.msra.mxu0 %v2397
      %2399 = vmatprep.subr.mxu0 0.0
      %v2400 = vand.u32 %v2104, 4294901760
      %v2401 = vsub.f32 %v2104, %v2400
      %2402 = vmatpush1.msra.mxu0 %v2401
      %2403 = vmatprep.subr.mxu0 0.0
      %v2404 = vand.u32 %v2105, 4294901760
      %v2405 = vsub.f32 %v2105, %v2404
      %2406 = vmatpush1.msra.mxu0 %v2405
      %2407 = vmatprep.subr.mxu0 0.0
      %v2408 = vand.u32 %v2106, 4294901760
      %v2409 = vsub.f32 %v2106, %v2408
      %2410 = vmatpush1.msra.mxu0 %v2409
      %2411 = vmatprep.subr.mxu0 0.0
      %v2412 = vand.u32 %v2107, 4294901760
      %v2413 = vsub.f32 %v2107, %v2412
      %2414 = vmatpush1.msra.mxu0 %v2413
      %2415 = vmatprep.subr.mxu0 0.0
      %v2416 = vand.u32 %v2108, 4294901760
      %v2417 = vsub.f32 %v2108, %v2416
      %2418 = vmatpush1.msra.mxu0 %v2417
      %2419 = vmatprep.subr.mxu0 0.0
      %v2420 = vand.u32 %v2109, 4294901760
      %v2421 = vsub.f32 %v2109, %v2420
      %2422 = vmatpush1.msra.mxu0 %v2421
      %2423 = vmatprep.subr.mxu0 0.0
      %v2424 = vand.u32 %v2110, 4294901760
      %v2425 = vsub.f32 %v2110, %v2424
      %2426 = vmatpush1.msra.mxu0 %v2425
      %2427 = vmatprep.subr.mxu0 0.0
      %v2428 = vand.u32 %v2111, 4294901760
      %v2429 = vsub.f32 %v2111, %v2428
      %2430 = vmatpush1.msra.mxu0 %v2429
      %2431 = vmatprep.subr.mxu0 0.0
      %v2432 = vand.u32 %v2112, 4294901760
      %v2433 = vsub.f32 %v2112, %v2432
      %2434 = vmatpush1.msra.mxu0 %v2433
      %2435 = vmatprep.subr.mxu0 0.0
      %2436 = vmatpush1.msra.mxu0 0.0
      %2437 = vmatprep.subr.mxu0 0.0
      %2438 = vmatpush1.msra.mxu0 0.0
      %2439 = vmatprep.subr.mxu0 0.0
      %2440 = vmatpush1.msra.mxu0 0.0
      %2441 = vmatprep.subr.mxu0 0.0
      %2442 = vmatpush1.msra.mxu0 0.0
      %2443 = vmatprep.subr.mxu0 0.0
      %2444 = vmatpush1.msra.mxu0 0.0
      %2445 = vmatprep.subr.mxu0 0.0
      %2446 = vmatpush1.msra.mxu0 0.0
      %2447 = vmatprep.subr.mxu0 0.0
      %2448 = vmatpush1.msra.mxu0 0.0
      %2449 = vmatprep.subr.mxu0 0.0
      %2450 = vmatpush1.msra.mxu0 0.0
      %2451 = vmatprep.subr.mxu0 0.0
      %2452 = vmatpush1.msra.mxu0 0.0
      %2453 = vmatprep.subr.mxu0 0.0
      %2454 = vmatpush1.msra.mxu0 0.0
      %2455 = vmatprep.subr.mxu0 0.0
      %2456 = vmatpush1.msra.mxu0 0.0
      %2457 = vmatprep.subr.mxu0 0.0
      %2458 = vmatpush1.msra.mxu0 0.0
      %2459 = vmatprep.subr.mxu0 0.0
      %2460 = vmatpush1.msra.mxu0 0.0
      %2461 = vmatprep.subr.mxu0 0.0
      %2462 = vmatpush1.msra.mxu0 0.0
      %2463 = vmatprep.subr.mxu0 0.0
      %2464 = vmatpush1.msra.mxu0 0.0
      %2465 = vmatprep.subr.mxu0 0.0
      %2466 = vmatpush1.msra.mxu0 0.0
      %2467 = vmatprep.mubr.f32.mxu0 0.0
      %v2468 = vand.u32 %v2095, 4294901760
      %v2469 = vsub.f32 %v2095, %v2468
      %2470 = vmatmul.mubr.f32.gmra.mrb[0].mxu0 %v2469
      %v2471 = vpop.f32.mrb[0].mxu0
      %v2472 = vadd.f32 %v2362, %v2471
      %v2473 = vpop.f32.mrb[0].mxu0
      %2474 = vmatprep.mubr.f32.mxu0 0.0
      %v2475 = vand.u32 %v2096, 4294901760
      %v2476 = vsub.f32 %v2096, %v2475
      %2477 = vmatmul.mubr.f32.gmra.mrb[0].mxu0 %v2476
      %v2478 = vpop.f32.mrb[0].mxu0
      %v2479 = vadd.f32 %v2368, %v2478
      %v2480 = vpop.f32.mrb[0].mxu0
      %2481 = vdwg.mxu0
      %2482 = vmatprep.subr.mxu0 0.0
      %v2483 = vand.u32 %v2097, 4294901760
      %2484 = vmatpush1.msra.mxu0 %v2483
      %2485 = vmatprep.subr.mxu0 0.0
      %v2486 = vand.u32 %v2098, 4294901760
      %2487 = vmatpush1.msra.mxu0 %v2486
      %2488 = vmatprep.subr.mxu0 0.0
      %v2489 = vand.u32 %v2099, 4294901760
      %2490 = vmatpush1.msra.mxu0 %v2489
      %2491 = vmatprep.subr.mxu0 0.0
      %v2492 = vand.u32 %v2100, 4294901760
      %2493 = vmatpush1.msra.mxu0 %v2492
      %2494 = vmatprep.subr.mxu0 0.0
      %v2495 = vand.u32 %v2101, 4294901760
      %2496 = vmatpush1.msra.mxu0 %v2495
      %2497 = vmatprep.subr.mxu0 0.0
      %v2498 = vand.u32 %v2102, 4294901760
      %2499 = vmatpush1.msra.mxu0 %v2498
      %2500 = vmatprep.subr.mxu0 0.0
      %v2501 = vand.u32 %v2103, 4294901760
      %2502 = vmatpush1.msra.mxu0 %v2501
      %2503 = vmatprep.subr.mxu0 0.0
      %v2504 = vand.u32 %v2104, 4294901760
      %2505 = vmatpush1.msra.mxu0 %v2504
      %2506 = vmatprep.subr.mxu0 0.0
      %v2507 = vand.u32 %v2105, 4294901760
      %2508 = vmatpush1.msra.mxu0 %v2507
      %2509 = vmatprep.subr.mxu0 0.0
      %v2510 = vand.u32 %v2106, 4294901760
      %2511 = vmatpush1.msra.mxu0 %v2510
      %2512 = vmatprep.subr.mxu0 0.0
      %v2513 = vand.u32 %v2107, 4294901760
      %2514 = vmatpush1.msra.mxu0 %v2513
      %2515 = vmatprep.subr.mxu0 0.0
      %v2516 = vand.u32 %v2108, 4294901760
      %2517 = vmatpush1.msra.mxu0 %v2516
      %2518 = vmatprep.subr.mxu0 0.0
      %v2519 = vand.u32 %v2109, 4294901760
      %2520 = vmatpush1.msra.mxu0 %v2519
      %2521 = vmatprep.subr.mxu0 0.0
      %v2522 = vand.u32 %v2110, 4294901760
      %2523 = vmatpush1.msra.mxu0 %v2522
      %2524 = vmatprep.subr.mxu0 0.0
      %v2525 = vand.u32 %v2111, 4294901760
      %2526 = vmatpush1.msra.mxu0 %v2525
      %2527 = vmatprep.subr.mxu0 0.0
      %v2528 = vand.u32 %v2112, 4294901760
      %2529 = vmatpush1.msra.mxu0 %v2528
      %2530 = vmatprep.subr.mxu0 0.0
      %2531 = vmatpush1.msra.mxu0 0.0
      %2532 = vmatprep.subr.mxu0 0.0
      %2533 = vmatpush1.msra.mxu0 0.0
      %2534 = vmatprep.subr.mxu0 0.0
      %2535 = vmatpush1.msra.mxu0 0.0
      %2536 = vmatprep.subr.mxu0 0.0
      %2537 = vmatpush1.msra.mxu0 0.0
      %2538 = vmatprep.subr.mxu0 0.0
      %2539 = vmatpush1.msra.mxu0 0.0
      %2540 = vmatprep.subr.mxu0 0.0
      %2541 = vmatpush1.msra.mxu0 0.0
      %2542 = vmatprep.subr.mxu0 0.0
      %2543 = vmatpush1.msra.mxu0 0.0
      %2544 = vmatprep.subr.mxu0 0.0
      %2545 = vmatpush1.msra.mxu0 0.0
      %2546 = vmatprep.subr.mxu0 0.0
      %2547 = vmatpush1.msra.mxu0 0.0
      %2548 = vmatprep.subr.mxu0 0.0
      %2549 = vmatpush1.msra.mxu0 0.0
      %2550 = vmatprep.subr.mxu0 0.0
      %2551 = vmatpush1.msra.mxu0 0.0
      %2552 = vmatprep.subr.mxu0 0.0
      %2553 = vmatpush1.msra.mxu0 0.0
      %2554 = vmatprep.subr.mxu0 0.0
      %2555 = vmatpush1.msra.mxu0 0.0
      %2556 = vmatprep.subr.mxu0 0.0
      %2557 = vmatpush1.msra.mxu0 0.0
      %2558 = vmatprep.subr.mxu0 0.0
      %2559 = vmatpush1.msra.mxu0 0.0
      %2560 = vmatprep.subr.mxu0 0.0
      %2561 = vmatpush1.msra.mxu0 0.0
      %2562 = vmatprep.mubr.f32.mxu0 0.0
      %v2563 = vand.u32 %v2095, 4294901760
      %v2564 = vsub.f32 %v2095, %v2563
      %v2565 = vand.u32 %v2564, 4294901760
      %2566 = vmatmul.mubr.f32.gmra.mrb[0].mxu0 %v2565
      %v2567 = vpop.f32.mrb[0].mxu0
      %v2568 = vadd.f32 %v2472, %v2567
      %v2569 = vpop.f32.mrb[0].mxu0
      %2570 = vmatprep.mubr.f32.mxu0 0.0
      %v2571 = vand.u32 %v2096, 4294901760
      %v2572 = vsub.f32 %v2096, %v2571
      %v2573 = vand.u32 %v2572, 4294901760
      %2574 = vmatmul.mubr.f32.gmra.mrb[0].mxu0 %v2573
      %v2575 = vpop.f32.mrb[0].mxu0
      %v2576 = vadd.f32 %v2479, %v2575
      %v2577 = vpop.f32.mrb[0].mxu0
      %2578 = vdwg.mxu0
      %2579 = vmatprep.subr.mxu0 0.0
      %v2580 = vand.u32 %v2097, 4294901760
      %v2581 = vsub.f32 %v2097, %v2580
      %v2582 = vand.u32 %v2581, 4294901760
      %2583 = vmatpush1.msra.mxu0 %v2582
      %2584 = vmatprep.subr.mxu0 0.0
      %v2585 = vand.u32 %v2098, 4294901760
      %v2586 = vsub.f32 %v2098, %v2585
      %v2587 = vand.u32 %v2586, 4294901760
      %2588 = vmatpush1.msra.mxu0 %v2587
      %2589 = vmatprep.subr.mxu0 0.0
      %v2590 = vand.u32 %v2099, 4294901760
      %v2591 = vsub.f32 %v2099, %v2590
      %v2592 = vand.u32 %v2591, 4294901760
      %2593 = vmatpush1.msra.mxu0 %v2592
      %2594 = vmatprep.subr.mxu0 0.0
      %v2595 = vand.u32 %v2100, 4294901760
      %v2596 = vsub.f32 %v2100, %v2595
      %v2597 = vand.u32 %v2596, 4294901760
      %2598 = vmatpush1.msra.mxu0 %v2597
      %2599 = vmatprep.subr.mxu0 0.0
      %v2600 = vand.u32 %v2101, 4294901760
      %v2601 = vsub.f32 %v2101, %v2600
      %v2602 = vand.u32 %v2601, 4294901760
      %2603 = vmatpush1.msra.mxu0 %v2602
      %2604 = vmatprep.subr.mxu0 0.0
      %v2605 = vand.u32 %v2102, 4294901760
      %v2606 = vsub.f32 %v2102, %v2605
      %v2607 = vand.u32 %v2606, 4294901760
      %2608 = vmatpush1.msra.mxu0 %v2607
      %2609 = vmatprep.subr.mxu0 0.0
      %v2610 = vand.u32 %v2103, 4294901760
      %v2611 = vsub.f32 %v2103, %v2610
      %v2612 = vand.u32 %v2611, 4294901760
      %2613 = vmatpush1.msra.mxu0 %v2612
      %2614 = vmatprep.subr.mxu0 0.0
      %v2615 = vand.u32 %v2104, 4294901760
      %v2616 = vsub.f32 %v2104, %v2615
      %v2617 = vand.u32 %v2616, 4294901760
      %2618 = vmatpush1.msra.mxu0 %v2617
      %2619 = vmatprep.subr.mxu0 0.0
      %v2620 = vand.u32 %v2105, 4294901760
      %v2621 = vsub.f32 %v2105, %v2620
      %v2622 = vand.u32 %v2621, 4294901760
      %2623 = vmatpush1.msra.mxu0 %v2622
      %2624 = vmatprep.subr.mxu0 0.0
      %v2625 = vand.u32 %v2106, 4294901760
      %v2626 = vsub.f32 %v2106, %v2625
      %v2627 = vand.u32 %v2626, 4294901760
      %2628 = vmatpush1.msra.mxu0 %v2627
      %2629 = vmatprep.subr.mxu0 0.0
      %v2630 = vand.u32 %v2107, 4294901760
      %v2631 = vsub.f32 %v2107, %v2630
      %v2632 = vand.u32 %v2631, 4294901760
      %2633 = vmatpush1.msra.mxu0 %v2632
      %2634 = vmatprep.subr.mxu0 0.0
      %v2635 = vand.u32 %v2108, 4294901760
      %v2636 = vsub.f32 %v2108, %v2635
      %v2637 = vand.u32 %v2636, 4294901760
      %2638 = vmatpush1.msra.mxu0 %v2637
      %2639 = vmatprep.subr.mxu0 0.0
      %v2640 = vand.u32 %v2109, 4294901760
      %v2641 = vsub.f32 %v2109, %v2640
      %v2642 = vand.u32 %v2641, 4294901760
      %2643 = vmatpush1.msra.mxu0 %v2642
      %2644 = vmatprep.subr.mxu0 0.0
      %v2645 = vand.u32 %v2110, 4294901760
      %v2646 = vsub.f32 %v2110, %v2645
      %v2647 = vand.u32 %v2646, 4294901760
      %2648 = vmatpush1.msra.mxu0 %v2647
      %2649 = vmatprep.subr.mxu0 0.0
      %v2650 = vand.u32 %v2111, 4294901760
      %v2651 = vsub.f32 %v2111, %v2650
      %v2652 = vand.u32 %v2651, 4294901760
      %2653 = vmatpush1.msra.mxu0 %v2652
      %2654 = vmatprep.subr.mxu0 0.0
      %v2655 = vand.u32 %v2112, 4294901760
      %v2656 = vsub.f32 %v2112, %v2655
      %v2657 = vand.u32 %v2656, 4294901760
      %2658 = vmatpush1.msra.mxu0 %v2657
      %2659 = vmatprep.subr.mxu0 0.0
      %2660 = vmatpush1.msra.mxu0 0.0
      %2661 = vmatprep.subr.mxu0 0.0
      %2662 = vmatpush1.msra.mxu0 0.0
      %2663 = vmatprep.subr.mxu0 0.0
      %2664 = vmatpush1.msra.mxu0 0.0
      %2665 = vmatprep.subr.mxu0 0.0
      %2666 = vmatpush1.msra.mxu0 0.0
      %2667 = vmatprep.subr.mxu0 0.0
      %2668 = vmatpush1.msra.mxu0 0.0
      %2669 = vmatprep.subr.mxu0 0.0
      %2670 = vmatpush1.msra.mxu0 0.0
      %2671 = vmatprep.subr.mxu0 0.0
      %2672 = vmatpush1.msra.mxu0 0.0
      %2673 = vmatprep.subr.mxu0 0.0
      %2674 = vmatpush1.msra.mxu0 0.0
      %2675 = vmatprep.subr.mxu0 0.0
      %2676 = vmatpush1.msra.mxu0 0.0
      %2677 = vmatprep.subr.mxu0 0.0
      %2678 = vmatpush1.msra.mxu0 0.0
      %2679 = vmatprep.subr.mxu0 0.0
      %2680 = vmatpush1.msra.mxu0 0.0
      %2681 = vmatprep.subr.mxu0 0.0
      %2682 = vmatpush1.msra.mxu0 0.0
      %2683 = vmatprep.subr.mxu0 0.0
      %2684 = vmatpush1.msra.mxu0 0.0
      %2685 = vmatprep.subr.mxu0 0.0
      %2686 = vmatpush1.msra.mxu0 0.0
      %2687 = vmatprep.subr.mxu0 0.0
      %2688 = vmatpush1.msra.mxu0 0.0
      %2689 = vmatprep.subr.mxu0 0.0
      %2690 = vmatpush1.msra.mxu0 0.0
      %2691 = vmatprep.mubr.f32.mxu0 0.0
      %v2692 = vand.u32 %v2095, 4294901760
      %2693 = vmatmul.mubr.f32.gmra.mrb[0].mxu0 %v2692
      %v2694 = vpop.f32.mrb[0].mxu0
      %v2695 = vadd.f32 %v2568, %v2694
      %v2696 = vpop.f32.mrb[0].mxu0
      %2697 = vmatprep.mubr.f32.mxu0 0.0
      %v2698 = vand.u32 %v2096, 4294901760
      %2699 = vmatmul.mubr.f32.gmra.mrb[0].mxu0 %v2698
      %v2700 = vpop.f32.mrb[0].mxu0
      %v2701 = vadd.f32 %v2576, %v2700
      %v2702 = vpop.f32.mrb[0].mxu0
      %2703 = vdwg.mxu0
      %2704 = vmatprep.subr.mxu0 0.0
      %v2705 = vand.u32 %v2097, 4294901760
      %2706 = vmatpush1.msra.mxu0 %v2705
      %2707 = vmatprep.subr.mxu0 0.0
      %v2708 = vand.u32 %v2098, 4294901760
      %2709 = vmatpush1.msra.mxu0 %v2708
      %2710 = vmatprep.subr.mxu0 0.0
      %v2711 = vand.u32 %v2099, 4294901760
      %2712 = vmatpush1.msra.mxu0 %v2711
      %2713 = vmatprep.subr.mxu0 0.0
      %v2714 = vand.u32 %v2100, 4294901760
      %2715 = vmatpush1.msra.mxu0 %v2714
      %2716 = vmatprep.subr.mxu0 0.0
      %v2717 = vand.u32 %v2101, 4294901760
      %2718 = vmatpush1.msra.mxu0 %v2717
      %2719 = vmatprep.subr.mxu0 0.0
      %v2720 = vand.u32 %v2102, 4294901760
      %2721 = vmatpush1.msra.mxu0 %v2720
      %2722 = vmatprep.subr.mxu0 0.0
      %v2723 = vand.u32 %v2103, 4294901760
      %2724 = vmatpush1.msra.mxu0 %v2723
      %2725 = vmatprep.subr.mxu0 0.0
      %v2726 = vand.u32 %v2104, 4294901760
      %2727 = vmatpush1.msra.mxu0 %v2726
      %2728 = vmatprep.subr.mxu0 0.0
      %v2729 = vand.u32 %v2105, 4294901760
      %2730 = vmatpush1.msra.mxu0 %v2729
      %2731 = vmatprep.subr.mxu0 0.0
      %v2732 = vand.u32 %v2106, 4294901760
      %2733 = vmatpush1.msra.mxu0 %v2732
      %2734 = vmatprep.subr.mxu0 0.0
      %v2735 = vand.u32 %v2107, 4294901760
      %2736 = vmatpush1.msra.mxu0 %v2735
      %2737 = vmatprep.subr.mxu0 0.0
      %v2738 = vand.u32 %v2108, 4294901760
      %2739 = vmatpush1.msra.mxu0 %v2738
      %2740 = vmatprep.subr.mxu0 0.0
      %v2741 = vand.u32 %v2109, 4294901760
      %2742 = vmatpush1.msra.mxu0 %v2741
      %2743 = vmatprep.subr.mxu0 0.0
      %v2744 = vand.u32 %v2110, 4294901760
      %2745 = vmatpush1.msra.mxu0 %v2744
      %2746 = vmatprep.subr.mxu0 0.0
      %v2747 = vand.u32 %v2111, 4294901760
      %2748 = vmatpush1.msra.mxu0 %v2747
      %2749 = vmatprep.subr.mxu0 0.0
      %v2750 = vand.u32 %v2112, 4294901760
      %2751 = vmatpush1.msra.mxu0 %v2750
      %2752 = vmatprep.subr.mxu0 0.0
      %2753 = vmatpush1.msra.mxu0 0.0
      %2754 = vmatprep.subr.mxu0 0.0
      %2755 = vmatpush1.msra.mxu0 0.0
      %2756 = vmatprep.subr.mxu0 0.0
      %2757 = vmatpush1.msra.mxu0 0.0
      %2758 = vmatprep.subr.mxu0 0.0
      %2759 = vmatpush1.msra.mxu0 0.0
      %2760 = vmatprep.subr.mxu0 0.0
      %2761 = vmatpush1.msra.mxu0 0.0
      %2762 = vmatprep.subr.mxu0 0.0
      %2763 = vmatpush1.msra.mxu0 0.0
      %2764 = vmatprep.subr.mxu0 0.0
      %2765 = vmatpush1.msra.mxu0 0.0
      %2766 = vmatprep.subr.mxu0 0.0
      %2767 = vmatpush1.msra.mxu0 0.0
      %2768 = vmatprep.subr.mxu0 0.0
      %2769 = vmatpush1.msra.mxu0 0.0
      %2770 = vmatprep.subr.mxu0 0.0
      %2771 = vmatpush1.msra.mxu0 0.0
      %2772 = vmatprep.subr.mxu0 0.0
      %2773 = vmatpush1.msra.mxu0 0.0
      %2774 = vmatprep.subr.mxu0 0.0
      %2775 = vmatpush1.msra.mxu0 0.0
      %2776 = vmatprep.subr.mxu0 0.0
      %2777 = vmatpush1.msra.mxu0 0.0
      %2778 = vmatprep.subr.mxu0 0.0
      %2779 = vmatpush1.msra.mxu0 0.0
      %2780 = vmatprep.subr.mxu0 0.0
      %2781 = vmatpush1.msra.mxu0 0.0
      %2782 = vmatprep.subr.mxu0 0.0
      %2783 = vmatpush1.msra.mxu0 0.0
      %2784 = vmatprep.mubr.f32.mxu0 0.0
      %v2785 = vand.u32 %v2095, 4294901760
      %2786 = vmatmul.mubr.f32.gmra.mrb[0].mxu0 %v2785
      %v2787 = vpop.f32.mrb[0].mxu0
      %v2788 = vadd.f32 %v2695, %v2787
      %v2789 = vpop.f32.mrb[0].mxu0
      %2790 = vmatprep.mubr.f32.mxu0 0.0
      %v2791 = vand.u32 %v2096, 4294901760
      %2792 = vmatmul.mubr.f32.gmra.mrb[0].mxu0 %v2791
      %v2793 = vpop.f32.mrb[0].mxu0
      %v2794 = vadd.f32 %v2701, %v2793
      %v2795 = vpop.f32.mrb[0].mxu0
      %2796 = vdwg.mxu0
      %v2797 = vmul.f32 %v1000, %v2788
      %v2798 = vmul.f32 %v1001, %v2794
      %2799 = vmatprep.subr.mxu0 0.0
      %v2800 = vand.u32 %v2797, 4294901760
      %2801 = vmatpush1.msra.mxu0 %v2800
      %2802 = vmatprep.subr.mxu0 0.0
      %v2803 = vand.u32 %v2798, 4294901760
      %2804 = vmatpush1.msra.mxu0 %v2803
      %2805 = vmatprep.subr.mxu0 0.0
      %2806 = vmatpush1.msra.mxu0 0.0
      %2807 = vmatprep.subr.mxu0 0.0
      %2808 = vmatpush1.msra.mxu0 0.0
      %2809 = vmatprep.subr.mxu0 0.0
      %2810 = vmatpush1.msra.mxu0 0.0
      %2811 = vmatprep.subr.mxu0 0.0
      %2812 = vmatpush1.msra.mxu0 0.0
      %2813 = vmatprep.subr.mxu0 0.0
      %2814 = vmatpush1.msra.mxu0 0.0
      %2815 = vmatprep.subr.mxu0 0.0
      %2816 = vmatpush1.msra.mxu0 0.0
      %2817 = vmatprep.subr.mxu0 0.0
      %2818 = vmatpush1.msra.mxu0 0.0
      %2819 = vmatprep.subr.mxu0 0.0
      %2820 = vmatpush1.msra.mxu0 0.0
      %2821 = vmatprep.subr.mxu0 0.0
      %2822 = vmatpush1.msra.mxu0 0.0
      %2823 = vmatprep.subr.mxu0 0.0
      %2824 = vmatpush1.msra.mxu0 0.0
      %2825 = vmatprep.subr.mxu0 0.0
      %2826 = vmatpush1.msra.mxu0 0.0
      %2827 = vmatprep.subr.mxu0 0.0
      %2828 = vmatpush1.msra.mxu0 0.0
      %2829 = vmatprep.subr.mxu0 0.0
      %2830 = vmatpush1.msra.mxu0 0.0
      %2831 = vmatprep.subr.mxu0 0.0
      %2832 = vmatpush1.msra.mxu0 0.0
      %2833 = vmatprep.subr.mxu0 0.0
      %2834 = vmatpush1.msra.mxu0 0.0
      %2835 = vmatprep.subr.mxu0 0.0
      %2836 = vmatpush1.msra.mxu0 0.0
      %2837 = vmatprep.subr.mxu0 0.0
      %2838 = vmatpush1.msra.mxu0 0.0
      %2839 = vmatprep.subr.mxu0 0.0
      %2840 = vmatpush1.msra.mxu0 0.0
      %2841 = vmatprep.subr.mxu0 0.0
      %2842 = vmatpush1.msra.mxu0 0.0
      %2843 = vmatprep.subr.mxu0 0.0
      %2844 = vmatpush1.msra.mxu0 0.0
      %2845 = vmatprep.subr.mxu0 0.0
      %2846 = vmatpush1.msra.mxu0 0.0
      %2847 = vmatprep.subr.mxu0 0.0
      %2848 = vmatpush1.msra.mxu0 0.0
      %2849 = vmatprep.subr.mxu0 0.0
      %2850 = vmatpush1.msra.mxu0 0.0
      %2851 = vmatprep.subr.mxu0 0.0
      %2852 = vmatpush1.msra.mxu0 0.0
      %2853 = vmatprep.subr.mxu0 0.0
      %2854 = vmatpush1.msra.mxu0 0.0
      %2855 = vmatprep.subr.mxu0 0.0
      %2856 = vmatpush1.msra.mxu0 0.0
      %2857 = vmatprep.subr.mxu0 0.0
      %2858 = vmatpush1.msra.mxu0 0.0
      %2859 = vmatprep.subr.mxu0 0.0
      %2860 = vmatpush1.msra.mxu0 0.0
      %2861 = vmatprep.subr.mxu0 0.0
      %2862 = vmatpush1.msra.mxu0 0.0
      %2863 = vmatprep.subr.mxu0 0.0
      %2864 = vmatpush1.msra.mxu0 0.0
      %2865 = vmatprep.mubr.f32.mxu0 0.0
      %v2866 = vand.u32 %v1543, 4294901760
      %v2867 = vsub.f32 %v1543, %v2866
      %v2868 = vand.u32 %v2867, 4294901760
      %v2869 = vsub.f32 %v2867, %v2868
      %v2870 = vand.u32 %v2869, 4294901760
      %2871 = vmatmul.mubr.f32.gmra.mrb[0].mxu0 %v2870
      %v2872 = vpop.f32.mrb[0].mxu0
      %v2873 = vadd.f32 0.0, %v2872
      %v2874 = vpop.f32.mrb[0].mxu0
      %2875 = vmatprep.mubr.f32.mxu0 0.0
      %v2876 = vand.u32 %v1546, 4294901760
      %v2877 = vsub.f32 %v1546, %v2876
      %v2878 = vand.u32 %v2877, 4294901760
      %v2879 = vsub.f32 %v2877, %v2878
      %v2880 = vand.u32 %v2879, 4294901760
      %2881 = vmatmul.mubr.f32.gmra.mrb[0].mxu0 %v2880
      %v2882 = vpop.f32.mrb[0].mxu0
      %v2883 = vadd.f32 0.0, %v2882
      %v2884 = vpop.f32.mrb[0].mxu0
      %2885 = vdwg.mxu0
      %2886 = vmatprep.subr.mxu0 0.0
      %v2887 = vand.u32 %v2797, 4294901760
      %v2888 = vsub.f32 %v2797, %v2887
      %v2889 = vand.u32 %v2888, 4294901760
      %v2890 = vsub.f32 %v2888, %v2889
      %v2891 = vand.u32 %v2890, 4294901760
      %2892 = vmatpush1.msra.mxu0 %v2891
      %2893 = vmatprep.subr.mxu0 0.0
      %v2894 = vand.u32 %v2798, 4294901760
      %v2895 = vsub.f32 %v2798, %v2894
      %v2896 = vand.u32 %v2895, 4294901760
      %v2897 = vsub.f32 %v2895, %v2896
      %v2898 = vand.u32 %v2897, 4294901760
      %2899 = vmatpush1.msra.mxu0 %v2898
      %2900 = vmatprep.subr.mxu0 0.0
      %2901 = vmatpush1.msra.mxu0 0.0
      %2902 = vmatprep.subr.mxu0 0.0
      %2903 = vmatpush1.msra.mxu0 0.0
      %2904 = vmatprep.subr.mxu0 0.0
      %2905 = vmatpush1.msra.mxu0 0.0
      %2906 = vmatprep.subr.mxu0 0.0
      %2907 = vmatpush1.msra.mxu0 0.0
      %2908 = vmatprep.subr.mxu0 0.0
      %2909 = vmatpush1.msra.mxu0 0.0
      %2910 = vmatprep.subr.mxu0 0.0
      %2911 = vmatpush1.msra.mxu0 0.0
      %2912 = vmatprep.subr.mxu0 0.0
      %2913 = vmatpush1.msra.mxu0 0.0
      %2914 = vmatprep.subr.mxu0 0.0
      %2915 = vmatpush1.msra.mxu0 0.0
      %2916 = vmatprep.subr.mxu0 0.0
      %2917 = vmatpush1.msra.mxu0 0.0
      %2918 = vmatprep.subr.mxu0 0.0
      %2919 = vmatpush1.msra.mxu0 0.0
      %2920 = vmatprep.subr.mxu0 0.0
      %2921 = vmatpush1.msra.mxu0 0.0
      %2922 = vmatprep.subr.mxu0 0.0
      %2923 = vmatpush1.msra.mxu0 0.0
      %2924 = vmatprep.subr.mxu0 0.0
      %2925 = vmatpush1.msra.mxu0 0.0
      %2926 = vmatprep.subr.mxu0 0.0
      %2927 = vmatpush1.msra.mxu0 0.0
      %2928 = vmatprep.subr.mxu0 0.0
      %2929 = vmatpush1.msra.mxu0 0.0
      %2930 = vmatprep.subr.mxu0 0.0
      %2931 = vmatpush1.msra.mxu0 0.0
      %2932 = vmatprep.subr.mxu0 0.0
      %2933 = vmatpush1.msra.mxu0 0.0
      %2934 = vmatprep.subr.mxu0 0.0
      %2935 = vmatpush1.msra.mxu0 0.0
      %2936 = vmatprep.subr.mxu0 0.0
      %2937 = vmatpush1.msra.mxu0 0.0
      %2938 = vmatprep.subr.mxu0 0.0
      %2939 = vmatpush1.msra.mxu0 0.0
      %2940 = vmatprep.subr.mxu0 0.0
      %2941 = vmatpush1.msra.mxu0 0.0
      %2942 = vmatprep.subr.mxu0 0.0
      %2943 = vmatpush1.msra.mxu0 0.0
      %2944 = vmatprep.subr.mxu0 0.0
      %2945 = vmatpush1.msra.mxu0 0.0
      %2946 = vmatprep.subr.mxu0 0.0
      %2947 = vmatpush1.msra.mxu0 0.0
      %2948 = vmatprep.subr.mxu0 0.0
      %2949 = vmatpush1.msra.mxu0 0.0
      %2950 = vmatprep.subr.mxu0 0.0
      %2951 = vmatpush1.msra.mxu0 0.0
      %2952 = vmatprep.subr.mxu0 0.0
      %2953 = vmatpush1.msra.mxu0 0.0
      %2954 = vmatprep.subr.mxu0 0.0
      %2955 = vmatpush1.msra.mxu0 0.0
      %2956 = vmatprep.subr.mxu0 0.0
      %2957 = vmatpush1.msra.mxu0 0.0
      %2958 = vmatprep.subr.mxu0 0.0
      %2959 = vmatpush1.msra.mxu0 0.0
      %2960 = vmatprep.mubr.f32.mxu0 0.0
      %v2961 = vand.u32 %v1543, 4294901760
      %2962 = vmatmul.mubr.f32.gmra.mrb[0].mxu0 %v2961
      %v2963 = vpop.f32.mrb[0].mxu0
      %v2964 = vadd.f32 %v2873, %v2963
      %v2965 = vpop.f32.mrb[0].mxu0
      %2966 = vmatprep.mubr.f32.mxu0 0.0
      %v2967 = vand.u32 %v1546, 4294901760
      %2968 = vmatmul.mubr.f32.gmra.mrb[0].mxu0 %v2967
      %v2969 = vpop.f32.mrb[0].mxu0
      %v2970 = vadd.f32 %v2883, %v2969
      %v2971 = vpop.f32.mrb[0].mxu0
      %2972 = vdwg.mxu0
      %2973 = vmatprep.subr.mxu0 0.0
      %v2974 = vand.u32 %v2797, 4294901760
      %v2975 = vsub.f32 %v2797, %v2974
      %2976 = vmatpush1.msra.mxu0 %v2975
      %2977 = vmatprep.subr.mxu0 0.0
      %v2978 = vand.u32 %v2798, 4294901760
      %v2979 = vsub.f32 %v2798, %v2978
      %2980 = vmatpush1.msra.mxu0 %v2979
      %2981 = vmatprep.subr.mxu0 0.0
      %2982 = vmatpush1.msra.mxu0 0.0
      %2983 = vmatprep.subr.mxu0 0.0
      %2984 = vmatpush1.msra.mxu0 0.0
      %2985 = vmatprep.subr.mxu0 0.0
      %2986 = vmatpush1.msra.mxu0 0.0
      %2987 = vmatprep.subr.mxu0 0.0
      %2988 = vmatpush1.msra.mxu0 0.0
      %2989 = vmatprep.subr.mxu0 0.0
      %2990 = vmatpush1.msra.mxu0 0.0
      %2991 = vmatprep.subr.mxu0 0.0
      %2992 = vmatpush1.msra.mxu0 0.0
      %2993 = vmatprep.subr.mxu0 0.0
      %2994 = vmatpush1.msra.mxu0 0.0
      %2995 = vmatprep.subr.mxu0 0.0
      %2996 = vmatpush1.msra.mxu0 0.0
      %2997 = vmatprep.subr.mxu0 0.0
      %2998 = vmatpush1.msra.mxu0 0.0
      %2999 = vmatprep.subr.mxu0 0.0
      %3000 = vmatpush1.msra.mxu0 0.0
      %3001 = vmatprep.subr.mxu0 0.0
      %3002 = vmatpush1.msra.mxu0 0.0
      %3003 = vmatprep.subr.mxu0 0.0
      %3004 = vmatpush1.msra.mxu0 0.0
      %3005 = vmatprep.subr.mxu0 0.0
      %3006 = vmatpush1.msra.mxu0 0.0
      %3007 = vmatprep.subr.mxu0 0.0
      %3008 = vmatpush1.msra.mxu0 0.0
      %3009 = vmatprep.subr.mxu0 0.0
      %3010 = vmatpush1.msra.mxu0 0.0
      %3011 = vmatprep.subr.mxu0 0.0
      %3012 = vmatpush1.msra.mxu0 0.0
      %3013 = vmatprep.subr.mxu0 0.0
      %3014 = vmatpush1.msra.mxu0 0.0
      %3015 = vmatprep.subr.mxu0 0.0
      %3016 = vmatpush1.msra.mxu0 0.0
      %3017 = vmatprep.subr.mxu0 0.0
      %3018 = vmatpush1.msra.mxu0 0.0
      %3019 = vmatprep.subr.mxu0 0.0
      %3020 = vmatpush1.msra.mxu0 0.0
      %3021 = vmatprep.subr.mxu0 0.0
      %3022 = vmatpush1.msra.mxu0 0.0
      %3023 = vmatprep.subr.mxu0 0.0
      %3024 = vmatpush1.msra.mxu0 0.0
      %3025 = vmatprep.subr.mxu0 0.0
      %3026 = vmatpush1.msra.mxu0 0.0
      %3027 = vmatprep.subr.mxu0 0.0
      %3028 = vmatpush1.msra.mxu0 0.0
      %3029 = vmatprep.subr.mxu0 0.0
      %3030 = vmatpush1.msra.mxu0 0.0
      %3031 = vmatprep.subr.mxu0 0.0
      %3032 = vmatpush1.msra.mxu0 0.0
      %3033 = vmatprep.subr.mxu0 0.0
      %3034 = vmatpush1.msra.mxu0 0.0
      %3035 = vmatprep.subr.mxu0 0.0
      %3036 = vmatpush1.msra.mxu0 0.0
      %3037 = vmatprep.subr.mxu0 0.0
      %3038 = vmatpush1.msra.mxu0 0.0
      %3039 = vmatprep.subr.mxu0 0.0
      %3040 = vmatpush1.msra.mxu0 0.0
      %3041 = vmatprep.mubr.f32.mxu0 0.0
      %v3042 = vand.u32 %v1543, 4294901760
      %v3043 = vsub.f32 %v1543, %v3042
      %3044 = vmatmul.mubr.f32.gmra.mrb[0].mxu0 %v3043
      %v3045 = vpop.f32.mrb[0].mxu0
      %v3046 = vadd.f32 %v2964, %v3045
      %v3047 = vpop.f32.mrb[0].mxu0
      %3048 = vmatprep.mubr.f32.mxu0 0.0
      %v3049 = vand.u32 %v1546, 4294901760
      %v3050 = vsub.f32 %v1546, %v3049
      %3051 = vmatmul.mubr.f32.gmra.mrb[0].mxu0 %v3050
      %v3052 = vpop.f32.mrb[0].mxu0
      %v3053 = vadd.f32 %v2970, %v3052
      %v3054 = vpop.f32.mrb[0].mxu0
      %3055 = vdwg.mxu0
      %3056 = vmatprep.subr.mxu0 0.0
      %v3057 = vand.u32 %v2797, 4294901760
      %3058 = vmatpush1.msra.mxu0 %v3057
      %3059 = vmatprep.subr.mxu0 0.0
      %v3060 = vand.u32 %v2798, 4294901760
      %3061 = vmatpush1.msra.mxu0 %v3060
      %3062 = vmatprep.subr.mxu0 0.0
      %3063 = vmatpush1.msra.mxu0 0.0
      %3064 = vmatprep.subr.mxu0 0.0
      %3065 = vmatpush1.msra.mxu0 0.0
      %3066 = vmatprep.subr.mxu0 0.0
      %3067 = vmatpush1.msra.mxu0 0.0
      %3068 = vmatprep.subr.mxu0 0.0
      %3069 = vmatpush1.msra.mxu0 0.0
      %3070 = vmatprep.subr.mxu0 0.0
      %3071 = vmatpush1.msra.mxu0 0.0
      %3072 = vmatprep.subr.mxu0 0.0
      %3073 = vmatpush1.msra.mxu0 0.0
      %3074 = vmatprep.subr.mxu0 0.0
      %3075 = vmatpush1.msra.mxu0 0.0
      %3076 = vmatprep.subr.mxu0 0.0
      %3077 = vmatpush1.msra.mxu0 0.0
      %3078 = vmatprep.subr.mxu0 0.0
      %3079 = vmatpush1.msra.mxu0 0.0
      %3080 = vmatprep.subr.mxu0 0.0
      %3081 = vmatpush1.msra.mxu0 0.0
      %3082 = vmatprep.subr.mxu0 0.0
      %3083 = vmatpush1.msra.mxu0 0.0
      %3084 = vmatprep.subr.mxu0 0.0
      %3085 = vmatpush1.msra.mxu0 0.0
      %3086 = vmatprep.subr.mxu0 0.0
      %3087 = vmatpush1.msra.mxu0 0.0
      %3088 = vmatprep.subr.mxu0 0.0
      %3089 = vmatpush1.msra.mxu0 0.0
      %3090 = vmatprep.subr.mxu0 0.0
      %3091 = vmatpush1.msra.mxu0 0.0
      %3092 = vmatprep.subr.mxu0 0.0
      %3093 = vmatpush1.msra.mxu0 0.0
      %3094 = vmatprep.subr.mxu0 0.0
      %3095 = vmatpush1.msra.mxu0 0.0
      %3096 = vmatprep.subr.mxu0 0.0
      %3097 = vmatpush1.msra.mxu0 0.0
      %3098 = vmatprep.subr.mxu0 0.0
      %3099 = vmatpush1.msra.mxu0 0.0
      %3100 = vmatprep.subr.mxu0 0.0
      %3101 = vmatpush1.msra.mxu0 0.0
      %3102 = vmatprep.subr.mxu0 0.0
      %3103 = vmatpush1.msra.mxu0 0.0
      %3104 = vmatprep.subr.mxu0 0.0
      %3105 = vmatpush1.msra.mxu0 0.0
      %3106 = vmatprep.subr.mxu0 0.0
      %3107 = vmatpush1.msra.mxu0 0.0
      %3108 = vmatprep.subr.mxu0 0.0
      %3109 = vmatpush1.msra.mxu0 0.0
      %3110 = vmatprep.subr.mxu0 0.0
      %3111 = vmatpush1.msra.mxu0 0.0
      %3112 = vmatprep.subr.mxu0 0.0
      %3113 = vmatpush1.msra.mxu0 0.0
      %3114 = vmatprep.subr.mxu0 0.0
      %3115 = vmatpush1.msra.mxu0 0.0
      %3116 = vmatprep.subr.mxu0 0.0
      %3117 = vmatpush1.msra.mxu0 0.0
      %3118 = vmatprep.subr.mxu0 0.0
      %3119 = vmatpush1.msra.mxu0 0.0
      %3120 = vmatprep.subr.mxu0 0.0
      %3121 = vmatpush1.msra.mxu0 0.0
      %3122 = vmatprep.mubr.f32.mxu0 0.0
      %v3123 = vand.u32 %v1543, 4294901760
      %v3124 = vsub.f32 %v1543, %v3123
      %v3125 = vand.u32 %v3124, 4294901760
      %3126 = vmatmul.mubr.f32.gmra.mrb[0].mxu0 %v3125
      %v3127 = vpop.f32.mrb[0].mxu0
      %v3128 = vadd.f32 %v3046, %v3127
      %v3129 = vpop.f32.mrb[0].mxu0
      %3130 = vmatprep.mubr.f32.mxu0 0.0
      %v3131 = vand.u32 %v1546, 4294901760
      %v3132 = vsub.f32 %v1546, %v3131
      %v3133 = vand.u32 %v3132, 4294901760
      %3134 = vmatmul.mubr.f32.gmra.mrb[0].mxu0 %v3133
      %v3135 = vpop.f32.mrb[0].mxu0
      %v3136 = vadd.f32 %v3053, %v3135
      %v3137 = vpop.f32.mrb[0].mxu0
      %3138 = vdwg.mxu0
      %3139 = vmatprep.subr.mxu0 0.0
      %v3140 = vand.u32 %v2797, 4294901760
      %v3141 = vsub.f32 %v2797, %v3140
      %v3142 = vand.u32 %v3141, 4294901760
      %3143 = vmatpush1.msra.mxu0 %v3142
      %3144 = vmatprep.subr.mxu0 0.0
      %v3145 = vand.u32 %v2798, 4294901760
      %v3146 = vsub.f32 %v2798, %v3145
      %v3147 = vand.u32 %v3146, 4294901760
      %3148 = vmatpush1.msra.mxu0 %v3147
      %3149 = vmatprep.subr.mxu0 0.0
      %3150 = vmatpush1.msra.mxu0 0.0
      %3151 = vmatprep.subr.mxu0 0.0
      %3152 = vmatpush1.msra.mxu0 0.0
      %3153 = vmatprep.subr.mxu0 0.0
      %3154 = vmatpush1.msra.mxu0 0.0
      %3155 = vmatprep.subr.mxu0 0.0
      %3156 = vmatpush1.msra.mxu0 0.0
      %3157 = vmatprep.subr.mxu0 0.0
      %3158 = vmatpush1.msra.mxu0 0.0
      %3159 = vmatprep.subr.mxu0 0.0
      %3160 = vmatpush1.msra.mxu0 0.0
      %3161 = vmatprep.subr.mxu0 0.0
      %3162 = vmatpush1.msra.mxu0 0.0
      %3163 = vmatprep.subr.mxu0 0.0
      %3164 = vmatpush1.msra.mxu0 0.0
      %3165 = vmatprep.subr.mxu0 0.0
      %3166 = vmatpush1.msra.mxu0 0.0
      %3167 = vmatprep.subr.mxu0 0.0
      %3168 = vmatpush1.msra.mxu0 0.0
      %3169 = vmatprep.subr.mxu0 0.0
      %3170 = vmatpush1.msra.mxu0 0.0
      %3171 = vmatprep.subr.mxu0 0.0
      %3172 = vmatpush1.msra.mxu0 0.0
      %3173 = vmatprep.subr.mxu0 0.0
      %3174 = vmatpush1.msra.mxu0 0.0
      %3175 = vmatprep.subr.mxu0 0.0
      %3176 = vmatpush1.msra.mxu0 0.0
      %3177 = vmatprep.subr.mxu0 0.0
      %3178 = vmatpush1.msra.mxu0 0.0
      %3179 = vmatprep.subr.mxu0 0.0
      %3180 = vmatpush1.msra.mxu0 0.0
      %3181 = vmatprep.subr.mxu0 0.0
      %3182 = vmatpush1.msra.mxu0 0.0
      %3183 = vmatprep.subr.mxu0 0.0
      %3184 = vmatpush1.msra.mxu0 0.0
      %3185 = vmatprep.subr.mxu0 0.0
      %3186 = vmatpush1.msra.mxu0 0.0
      %3187 = vmatprep.subr.mxu0 0.0
      %3188 = vmatpush1.msra.mxu0 0.0
      %3189 = vmatprep.subr.mxu0 0.0
      %3190 = vmatpush1.msra.mxu0 0.0
      %3191 = vmatprep.subr.mxu0 0.0
      %3192 = vmatpush1.msra.mxu0 0.0
      %3193 = vmatprep.subr.mxu0 0.0
      %3194 = vmatpush1.msra.mxu0 0.0
      %3195 = vmatprep.subr.mxu0 0.0
      %3196 = vmatpush1.msra.mxu0 0.0
      %3197 = vmatprep.subr.mxu0 0.0
      %3198 = vmatpush1.msra.mxu0 0.0
      %3199 = vmatprep.subr.mxu0 0.0
      %3200 = vmatpush1.msra.mxu0 0.0
      %3201 = vmatprep.subr.mxu0 0.0
      %3202 = vmatpush1.msra.mxu0 0.0
      %3203 = vmatprep.subr.mxu0 0.0
      %3204 = vmatpush1.msra.mxu0 0.0
      %3205 = vmatprep.subr.mxu0 0.0
      %3206 = vmatpush1.msra.mxu0 0.0
      %3207 = vmatprep.subr.mxu0 0.0
      %3208 = vmatpush1.msra.mxu0 0.0
      %3209 = vmatprep.mubr.f32.mxu0 0.0
      %v3210 = vand.u32 %v1543, 4294901760
      %3211 = vmatmul.mubr.f32.gmra.mrb[0].mxu0 %v3210
      %v3212 = vpop.f32.mrb[0].mxu0
      %v3213 = vadd.f32 %v3128, %v3212
      %v3214 = vpop.f32.mrb[0].mxu0
      %3215 = vmatprep.mubr.f32.mxu0 0.0
      %v3216 = vand.u32 %v1546, 4294901760
      %3217 = vmatmul.mubr.f32.gmra.mrb[0].mxu0 %v3216
      %v3218 = vpop.f32.mrb[0].mxu0
      %v3219 = vadd.f32 %v3136, %v3218
      %v3220 = vpop.f32.mrb[0].mxu0
      %3221 = vdwg.mxu0
      %3222 = vmatprep.subr.mxu0 0.0
      %v3223 = vand.u32 %v2797, 4294901760
      %3224 = vmatpush1.msra.mxu0 %v3223
      %3225 = vmatprep.subr.mxu0 0.0
      %v3226 = vand.u32 %v2798, 4294901760
      %3227 = vmatpush1.msra.mxu0 %v3226
      %3228 = vmatprep.subr.mxu0 0.0
      %3229 = vmatpush1.msra.mxu0 0.0
      %3230 = vmatprep.subr.mxu0 0.0
      %3231 = vmatpush1.msra.mxu0 0.0
      %3232 = vmatprep.subr.mxu0 0.0
      %3233 = vmatpush1.msra.mxu0 0.0
      %3234 = vmatprep.subr.mxu0 0.0
      %3235 = vmatpush1.msra.mxu0 0.0
      %3236 = vmatprep.subr.mxu0 0.0
      %3237 = vmatpush1.msra.mxu0 0.0
      %3238 = vmatprep.subr.mxu0 0.0
      %3239 = vmatpush1.msra.mxu0 0.0
      %3240 = vmatprep.subr.mxu0 0.0
      %3241 = vmatpush1.msra.mxu0 0.0
      %3242 = vmatprep.subr.mxu0 0.0
      %3243 = vmatpush1.msra.mxu0 0.0
      %3244 = vmatprep.subr.mxu0 0.0
      %3245 = vmatpush1.msra.mxu0 0.0
      %3246 = vmatprep.subr.mxu0 0.0
      %3247 = vmatpush1.msra.mxu0 0.0
      %3248 = vmatprep.subr.mxu0 0.0
      %3249 = vmatpush1.msra.mxu0 0.0
      %3250 = vmatprep.subr.mxu0 0.0
      %3251 = vmatpush1.msra.mxu0 0.0
      %3252 = vmatprep.subr.mxu0 0.0
      %3253 = vmatpush1.msra.mxu0 0.0
      %3254 = vmatprep.subr.mxu0 0.0
      %3255 = vmatpush1.msra.mxu0 0.0
      %3256 = vmatprep.subr.mxu0 0.0
      %3257 = vmatpush1.msra.mxu0 0.0
      %3258 = vmatprep.subr.mxu0 0.0
      %3259 = vmatpush1.msra.mxu0 0.0
      %3260 = vmatprep.subr.mxu0 0.0
      %3261 = vmatpush1.msra.mxu0 0.0
      %3262 = vmatprep.subr.mxu0 0.0
      %3263 = vmatpush1.msra.mxu0 0.0
      %3264 = vmatprep.subr.mxu0 0.0
      %3265 = vmatpush1.msra.mxu0 0.0
      %3266 = vmatprep.subr.mxu0 0.0
      %3267 = vmatpush1.msra.mxu0 0.0
      %3268 = vmatprep.subr.mxu0 0.0
      %3269 = vmatpush1.msra.mxu0 0.0
      %3270 = vmatprep.subr.mxu0 0.0
      %3271 = vmatpush1.msra.mxu0 0.0
      %3272 = vmatprep.subr.mxu0 0.0
      %3273 = vmatpush1.msra.mxu0 0.0
      %3274 = vmatprep.subr.mxu0 0.0
      %3275 = vmatpush1.msra.mxu0 0.0
      %3276 = vmatprep.subr.mxu0 0.0
      %3277 = vmatpush1.msra.mxu0 0.0
      %3278 = vmatprep.subr.mxu0 0.0
      %3279 = vmatpush1.msra.mxu0 0.0
      %3280 = vmatprep.subr.mxu0 0.0
      %3281 = vmatpush1.msra.mxu0 0.0
      %3282 = vmatprep.subr.mxu0 0.0
      %3283 = vmatpush1.msra.mxu0 0.0
      %3284 = vmatprep.subr.mxu0 0.0
      %3285 = vmatpush1.msra.mxu0 0.0
      %3286 = vmatprep.subr.mxu0 0.0
      %3287 = vmatpush1.msra.mxu0 0.0
      %3288 = vmatprep.mubr.f32.mxu0 0.0
      %v3289 = vand.u32 %v1543, 4294901760
      %3290 = vmatmul.mubr.f32.gmra.mrb[0].mxu0 %v3289
      %v3291 = vpop.f32.mrb[0].mxu0
      %v3292 = vadd.f32 %v3213, %v3291
      %v3293 = vpop.f32.mrb[0].mxu0
      %3294 = vmatprep.mubr.f32.mxu0 0.0
      %v3295 = vand.u32 %v1546, 4294901760
      %3296 = vmatmul.mubr.f32.gmra.mrb[0].mxu0 %v3295
      %v3297 = vpop.f32.mrb[0].mxu0
      %v3298 = vadd.f32 %v3219, %v3297
      %v3299 = vpop.f32.mrb[0].mxu0
      %3300 = vdwg.mxu0
      %v3301 = vmul.f32 %v1000, %v3292
      %v3302 = vmul.f32 %v1001, %v3298
      %v3303 = vld [vmem:[%s5] sm:$0x1]
      %v3304 = vld [vmem:[%s6] sm:$0x1]
      %v3305 = vadd.f32 %v3301, %v3302
      %v3306 = vrot.slane %v3305, 4
      %v3307 = vadd.f32 %v3305, %v3306
      %v3308 = vrot.slane %v3307, 2
      %v3309 = vadd.f32 %v3307, %v3308
      %v3310 = vrot.slane %v3309, 1
      %v3311 = vadd.f32 %v3309, %v3310
      %v3312 = vmul.f32 %v3311, %v2061
      %v3313 = vsub.f32 %v3301, %v3312
      %v3314 = vsub.f32 %v3302, %v3312
      %v3315 = vmul.f32 %v3313, %v3313
      %v3316 = vmul.f32 %v3314, %v3314
      %v3317 = vadd.f32 %v3315, %v3316
      %v3318 = vrot.slane %v3317, 4
      %v3319 = vadd.f32 %v3317, %v3318
      %v3320 = vrot.slane %v3319, 2
      %v3321 = vadd.f32 %v3319, %v3320
      %v3322 = vrot.slane %v3321, 1
      %v3323 = vadd.f32 %v3321, %v3322
      %v3324 = vmul.f32 %v3323, %v2061
      %v3325 = vadd.f32 %v3324, 1e-05
      %v3326 = vrsqrt.pop %v3325
      %v3327 = vmul.f32 %v3313, %v3326
      %v3328 = vmul.f32 %v3314, %v3326
      %v3330 = vlaneseq
      %v3331 = vshrl.u32 %v3330, 7
      %v3332 = vsub.s32 0, %v3331
      %v3333 = vrot.slane %v3303, %v3332
      %v3335 = vmul.f32 %v3327, %v3333
      %v3336 = vmul.f32 %v3328, %v3333
      %v3338 = vlaneseq
      %v3339 = vshrl.u32 %v3338, 7
      %v3340 = vsub.s32 0, %v3339
      %v3341 = vrot.slane %v3304, %v3340
      %v3343 = vadd.f32 %v3335, %v3341
      %v3344 = vadd.f32 %v3336, %v3341
      %v3345 = vtanh.pop %v3343
      %v3346 = vtanh.pop %v3344
      %3347 = vst [vmem:[%s278] sm:$0xff] %v3345
      %3348 = vst [vmem:[%s278 + $0x8] sm:$0xff] %v3346
      %p3349 = scmp.lt.s32.totalorder %s18, 1
      %s3350 = scalar_select %p3349, %s18, 1
      %s3351 = smul.addr %s3350, 2
      %s3352 = smul.addr %s3351, 8
      %s3353 = scalar_lea.vmem %s7, %s3352
      // Predicated region
      $region49: #{scalable_gcn_forward.1} parent=47 // pred_check
        %p3354 = pneg %p188
      $region50: #{scalable_gcn_forward.1} parent=47 // pred_check_branch
        %3356 = sbr.rel (%p3354) target = $region52
      $region51: #{scalable_gcn_forward.1} parent=47 // pred_region
        _
      $region52: #{scalable_gcn_forward.1} parent=47 // pred_fallthru
        _
    $region48: #{scalable_gcn_forward.1} parent=5 // pred_fallthru
      _
    %p3357 = scmp.le.s32.totalorder 2, %s13
    // Predicated region
    $region53: #{scalable_gcn_forward.1} parent=5 // pred_check
      %p3358 = pneg %p3357
    $region54: #{scalable_gcn_forward.1} parent=5 // pred_check_branch
      %3360 = sbr.rel (%p3358) target = $region56
    $region55: #{scalable_gcn_forward.1} parent=5 // pred_region
      %s3361 = ssub.s32 %s13, 2
      // Predicated region
      $region57: #{scalable_gcn_forward.1} parent=55 // pred_check
        %p3362 = pneg %p194
      $region58: #{scalable_gcn_forward.1} parent=55 // pred_check_branch
        %3364 = sbr.rel (%p3362) target = $region60
      $region59: #{scalable_gcn_forward.1} parent=55 // pred_region
        %p3365 = scmp.lt.s32.totalorder %s19, 1
        %s3366 = scalar_select %p3365, %s19, 1
        %s3367 = smul.addr %s3366, 2
        %s3368 = smul.addr %s3367, 8
        %s3369 = scalar_lea.vmem %s7, %s3368
      $region60: #{scalable_gcn_forward.1} parent=55 // pred_fallthru
        _
    $region56: #{scalable_gcn_forward.1} parent=5 // pred_fallthru
      _
  $region6: #{scalable_gcn_forward.1} parent=0 // loop_footer
    %s17 = sadd.s32 1, %s13
  $region7: #{scalable_gcn_forward.1} parent=0 // loop_footer_branch
    %12 = sbr.rel target = $region3
  $region8: #{scalable_gcn_forward.1} parent=0 // loop_exit
    _

</llo_original>
